<compile_context>
chip_gen: v7x
topology: tpu7x:2x2x1
jax: 0.10.0
libtpu: 0.0.40
codegen_flags: <defaults>
</compile_context>

<pallas_src>
import jax
import jax.numpy as jnp
from jax.experimental import pallas as pl
from jax.experimental.pallas import tpu as pltpu

SLATM_DIM = 11960
IN_DIM = 12006                    # 11960 slatm + 46 elec features
ELEC_DIM = IN_DIM - SLATM_DIM     # 46  (lin2 input = 16 + 46 = 62)
HID1 = 16
HID2 = 2
NW = HID1 + HID2                  # 18 columns in the fused weight
NEG_SLOPE = 0.01                  # torch leaky_relu default


def _leaky_relu(x):
    return jnp.where(x > 0, x, NEG_SLOPE * x)


def _mlp_kernel(x_ref, wbig_ref, b1_ref, w2a_ref, b2_ref, w4_ref, b4_ref, out_ref):
    # One MXU matmul: [TB, 12006] @ [12006, 18] -> [TB, 18]
    #   h[:, :16]  == slatm @ W1.T      h[:, 16:18] == elec @ w2b
    h = jnp.dot(x_ref[...], wbig_ref[...], preferred_element_type=jnp.float32)

    layer1 = _leaky_relu(h[:, :HID1] + b1_ref[...])                 # [TB, 16]

    # lin2: layer1 @ w2a + elec @ w2b + b2, with elec @ w2b already in h.
    # Done on VPU/XLU (broadcast multiply + lane reduce) instead of a 2-wide MXU push.
    w2a = w2a_ref[...]                                              # [2, 16]
    z0 = jnp.sum(layer1 * w2a[0:1, :], axis=-1, keepdims=True)      # [TB, 1]
    z1 = jnp.sum(layer1 * w2a[1:2, :], axis=-1, keepdims=True)      # [TB, 1]
    l2_0 = _leaky_relu(z0 + h[:, HID1:HID1 + 1] + b2_ref[0])
    l2_1 = _leaky_relu(z1 + h[:, HID1 + 1:HID1 + 2] + b2_ref[1])

    # lin4: [TB, 2] @ [2, 1] as scalar FMAs on the VPU.
    out_ref[...] = l2_0 * w4_ref[0] + l2_1 * w4_ref[1] + b4_ref[0]


def _tile_config():
    """Pick the batch tile and scoped-VMEM limit per TPU generation."""
    try:
        vmem = getattr(pltpu.get_tpu_info(), "vmem_capacity_bytes", 64 << 20)
    except Exception:  # conservative fallback (works on every generation)
        vmem = 64 << 20
    if vmem >= (128 << 20):          # v5e / v6e: 128 MiB VMEM
        return 512, 96 << 20
    return 256, 40 << 20             # v7x: 64 MiB VMEM


def neural_network_forward(x, params, *, tb=None):
    """x: [B, 12006] f32. Returns [B, 1] f32."""
    B = x.shape[0]
    if tb is None:
        tb, vmem_limit = _tile_config()
    else:
        vmem_limit = 96 << 20

    # Small batches: single grid step, batch padded to the 8-sublane minimum.
    TB = max(8, ((B + 7) // 8) * 8) if B <= tb else tb
    Bp = ((B + TB - 1) // TB) * TB
    xp = x if Bp == B else jnp.pad(x, ((0, Bp - B), (0, 0)))
    n_b = Bp // TB

    out = pl.pallas_call(
        _mlp_kernel,
        out_shape=jax.ShapeDtypeStruct((Bp, 1), jnp.float32),
        grid_spec=pltpu.PrefetchScalarGridSpec(
            num_scalar_prefetch=0,
            grid=(n_b,),
            in_specs=[
                pl.BlockSpec((TB, IN_DIM), lambda b: (b, 0)),        # x tile (streamed)
                pl.BlockSpec((IN_DIM, NW), lambda b: (0, 0)),        # fused W1 | w2b (resident)
                pl.BlockSpec((1, HID1), lambda b: (0, 0)),           # b1
                pl.BlockSpec((HID2, HID1), lambda b: (0, 0)),        # w2a  ([2, 16])
                pl.BlockSpec(memory_space=pltpu.MemorySpace.SMEM),   # b2 [2]
                pl.BlockSpec(memory_space=pltpu.MemorySpace.SMEM),   # w4 [2]
                pl.BlockSpec(memory_space=pltpu.MemorySpace.SMEM),   # b4 [1]
            ],
            out_specs=pl.BlockSpec((TB, 1), lambda b: (b, 0)),
        ),
        compiler_params=pltpu.CompilerParams(
            dimension_semantics=("parallel",),
            vmem_limit_bytes=vmem_limit,
        ),
    )(xp, params["wbig"], params["b1"], params["w2a"],
      params["b2"], params["w4"], params["b4"])
    return out[:B]


def pack_params(W1, b1, W2, b2, W4, b4):
    """Fuse PyTorch-layout weights into the kernel layout (done once at init).

    W1: [16, 11960]  W2: [2, 62]  W4: [1, 2]   b1:[16] b2:[2] b4:[1]
    """
    wbig = jnp.zeros((IN_DIM, NW), jnp.float32)
    wbig = wbig.at[:SLATM_DIM, :HID1].set(W1.T)            # slatm @ W1.T  -> cols 0..15
    wbig = wbig.at[SLATM_DIM:, HID1:].set(W2[:, HID1:].T)  # elec  @ w2b   -> cols 16..17
    return {
        "wbig": wbig,                                      # [12006, 18]
        "b1": b1.reshape(1, HID1).astype(jnp.float32),     # [1, 16]
        "w2a": W2[:, :HID1].astype(jnp.float32),           # [2, 16]
        "b2": b2.astype(jnp.float32),                      # [2]   (SMEM scalars)
        "w4": W4.reshape(HID2).astype(jnp.float32),        # [2]   (SMEM scalars)
        "b4": b4.astype(jnp.float32),                      # [1]   (SMEM scalar)
    }


def _xavier_uniform(key, out_f, in_f):
    bound = (6.0 / (in_f + out_f)) ** 0.5
    return jax.random.uniform(key, (out_f, in_f), jnp.float32, -bound, bound)


def init_params(key):
    """Mirrors the PyTorch init (xavier_uniform weights, zero biases)."""
    k1, k2, k4 = jax.random.split(key, 3)
    W1 = _xavier_uniform(k1, HID1, SLATM_DIM)
    W2 = _xavier_uniform(k2, HID2, HID1 + ELEC_DIM)
    W4 = _xavier_uniform(k4, 1, HID2)
    return pack_params(W1, jnp.zeros((HID1,)), W2, jnp.zeros((HID2,)),
                       W4, jnp.zeros((1,)))


def _reference(x, W1, b1, W2, b2, W4, b4):
    slatm, elec = x[:, :SLATM_DIM], x[:, SLATM_DIM:]
    l1 = _leaky_relu(slatm @ W1.T + b1)
    l2 = _leaky_relu(jnp.concatenate([l1, elec], axis=1) @ W2.T + b2)
    return l2 @ W4.T + b4


if __name__ == "__main__":
    key = jax.random.PRNGKey(0)
    k1, k2, k4, kb1, kb2, kb4, kx = jax.random.split(key, 7)
    W1 = _xavier_uniform(k1, HID1, SLATM_DIM)
    W2 = _xavier_uniform(k2, HID2, HID1 + ELEC_DIM)
    W4 = _xavier_uniform(k4, 1, HID2)
    # PyTorch init zeroes the biases; use small nonzero ones here to exercise that path.
    b1 = 0.1 * jax.random.normal(kb1, (HID1,), jnp.float32)
    b2 = 0.1 * jax.random.normal(kb2, (HID2,), jnp.float32)
    b4 = 0.1 * jax.random.normal(kb4, (1,), jnp.float32)
    params = pack_params(W1, b1, W2, b2, W4, b4)

    B = 5  # exercises the batch-pad path (padded to 8 sublanes, single grid step)
    x = jax.random.normal(kx, (B, IN_DIM), jnp.float32)

    out = jax.block_until_ready(neural_network_forward(x, params))
    ref = _reference(x, W1, b1, W2, b2, W4, b4)
    assert out.shape == (B, 1)
    assert jnp.allclose(out, ref, atol=1e-4, rtol=1e-4), \
        float(jnp.max(jnp.abs(out - ref)))
    print("KERNEL_OK")
</pallas_src>

<mosaic_0001>
module attributes {stable_mosaic.version = 11 : i64} {
  func.func @_mlp_kernel(%arg0: i32, %arg1: memref<8x12006xf32, #tpu.memory_space<vmem>>, %arg2: memref<12006x18xf32, #tpu.memory_space<vmem>>, %arg3: memref<1x16xf32, #tpu.memory_space<vmem>>, %arg4: memref<2x16xf32, #tpu.memory_space<vmem>>, %arg5: memref<2xf32, #tpu.memory_space<smem>>, %arg6: memref<2xf32, #tpu.memory_space<smem>>, %arg7: memref<1xf32, #tpu.memory_space<smem>>, %arg8: memref<8x1xf32, #tpu.memory_space<vmem>>) attributes {dimension_semantics = [#tpu.dimension_semantics<parallel>], iteration_bounds = array<i64: 1>, scalar_prefetch = 0 : i64, scratch_operands = 0 : i64, tpu.core_type = #tpu.core_type<tc>, window_params = [{transform_indices = @transform_0, window_bounds = array<i64: 8, 12006>}, {pipeline_mode = #tpu.pipeline_mode<synchronous>, transform_indices = @transform_1, window_bounds = array<i64: 12006, 18>}, {pipeline_mode = #tpu.pipeline_mode<synchronous>, transform_indices = @transform_2, window_bounds = array<i64: 1, 16>}, {pipeline_mode = #tpu.pipeline_mode<synchronous>, transform_indices = @transform_3, window_bounds = array<i64: 2, 16>}, {transform_indices = @transform_4, window_bounds = array<i64: 2>}, {transform_indices = @transform_5, window_bounds = array<i64: 2>}, {transform_indices = @transform_6, window_bounds = array<i64: 1>}, {transform_indices = @transform_7, window_bounds = array<i64: 8, 1>}]} {
    %c0 = arith.constant 0 : index
    %c0_0 = arith.constant 0 : index
    %0 = vector.load %arg1[%c0, %c0_0] : memref<8x12006xf32, #tpu.memory_space<vmem>>, vector<8x12006xf32>
    %c0_1 = arith.constant 0 : index
    %c0_2 = arith.constant 0 : index
    %1 = vector.load %arg2[%c0_1, %c0_2] : memref<12006x18xf32, #tpu.memory_space<vmem>>, vector<12006x18xf32>
    %cst = arith.constant dense<0.000000e+00> : vector<8x18xf32>
    %2 = tpu.matmul %0, %1, %cst {dimension_numbers = #tpu.dot_dimension_numbers<[1], [0], [0], [1], [0, 0, 1, 1], [], []>} : vector<8x12006xf32>, vector<12006x18xf32>, vector<8x18xf32> -> vector<8x18xf32>
    %3 = vector.extract_strided_slice %2 {offsets = [0, 0], sizes = [8, 16], strides = [1, 1]} : vector<8x18xf32> to vector<8x16xf32>
    %c0_3 = arith.constant 0 : index
    %c0_4 = arith.constant 0 : index
    %4 = vector.load %arg3[%c0_3, %c0_4] : memref<1x16xf32, #tpu.memory_space<vmem>>, vector<1x16xf32>
    %5 = vector.broadcast %4 : vector<1x16xf32> to vector<8x16xf32>
    %6 = arith.addf %3, %5 : vector<8x16xf32>
    %cst_5 = arith.constant 0.000000e+00 : f32
    %7 = vector.broadcast %cst_5 : f32 to vector<8x16xf32>
    %8 = arith.cmpf ogt, %6, %7 : vector<8x16xf32>
    %cst_6 = arith.constant 0.00999999977 : f32
    %9 = vector.broadcast %cst_6 : f32 to vector<8x16xf32>
    %10 = arith.mulf %9, %6 : vector<8x16xf32>
    %11 = arith.select %8, %6, %10 : vector<8x16xi1>, vector<8x16xf32>
    %c0_7 = arith.constant 0 : index
    %c0_8 = arith.constant 0 : index
    %12 = vector.load %arg4[%c0_7, %c0_8] : memref<2x16xf32, #tpu.memory_space<vmem>>, vector<2x16xf32>
    %13 = vector.extract_strided_slice %12 {offsets = [0, 0], sizes = [1, 16], strides = [1, 1]} : vector<2x16xf32> to vector<1x16xf32>
    %14 = vector.broadcast %13 : vector<1x16xf32> to vector<8x16xf32>
    %15 = arith.mulf %11, %14 : vector<8x16xf32>
    %cst_9 = arith.constant dense<0.000000e+00> : vector<8xf32>
    %16 = vector.multi_reduction <add>, %15, %cst_9 [1] : vector<8x16xf32> to vector<8xf32>
    %17 = vector.shape_cast %16 : vector<8xf32> to vector<8x1xf32>
    %18 = vector.extract_strided_slice %12 {offsets = [1, 0], sizes = [1, 16], strides = [1, 1]} : vector<2x16xf32> to vector<1x16xf32>
    %19 = vector.broadcast %18 : vector<1x16xf32> to vector<8x16xf32>
    %20 = arith.mulf %11, %19 : vector<8x16xf32>
    %cst_10 = arith.constant dense<0.000000e+00> : vector<8xf32>
    %21 = vector.multi_reduction <add>, %20, %cst_10 [1] : vector<8x16xf32> to vector<8xf32>
    %22 = vector.shape_cast %21 : vector<8xf32> to vector<8x1xf32>
    %23 = vector.extract_strided_slice %2 {offsets = [0, 16], sizes = [8, 1], strides = [1, 1]} : vector<8x18xf32> to vector<8x1xf32>
    %24 = arith.addf %17, %23 : vector<8x1xf32>
    %c0_11 = arith.constant 0 : index
    %25 = memref.load %arg5[%c0_11] : memref<2xf32, #tpu.memory_space<smem>>
    %26 = vector.broadcast %25 : f32 to vector<8x1xf32>
    %27 = arith.addf %24, %26 : vector<8x1xf32>
    %cst_12 = arith.constant 0.000000e+00 : f32
    %28 = vector.broadcast %cst_12 : f32 to vector<8x1xf32>
    %29 = arith.cmpf ogt, %27, %28 : vector<8x1xf32>
    %cst_13 = arith.constant 0.00999999977 : f32
    %30 = vector.broadcast %cst_13 : f32 to vector<8x1xf32>
    %31 = arith.mulf %30, %27 : vector<8x1xf32>
    %32 = arith.select %29, %27, %31 : vector<8x1xi1>, vector<8x1xf32>
    %33 = vector.extract_strided_slice %2 {offsets = [0, 17], sizes = [8, 1], strides = [1, 1]} : vector<8x18xf32> to vector<8x1xf32>
    %34 = arith.addf %22, %33 : vector<8x1xf32>
    %c1 = arith.constant 1 : index
    %35 = memref.load %arg5[%c1] : memref<2xf32, #tpu.memory_space<smem>>
    %36 = vector.broadcast %35 : f32 to vector<8x1xf32>
    %37 = arith.addf %34, %36 : vector<8x1xf32>
    %cst_14 = arith.constant 0.000000e+00 : f32
    %38 = vector.broadcast %cst_14 : f32 to vector<8x1xf32>
    %39 = arith.cmpf ogt, %37, %38 : vector<8x1xf32>
    %cst_15 = arith.constant 0.00999999977 : f32
    %40 = vector.broadcast %cst_15 : f32 to vector<8x1xf32>
    %41 = arith.mulf %40, %37 : vector<8x1xf32>
    %42 = arith.select %39, %37, %41 : vector<8x1xi1>, vector<8x1xf32>
    %c0_16 = arith.constant 0 : index
    %43 = memref.load %arg6[%c0_16] : memref<2xf32, #tpu.memory_space<smem>>
    %44 = vector.broadcast %43 : f32 to vector<8x1xf32>
    %45 = arith.mulf %32, %44 : vector<8x1xf32>
    %c1_17 = arith.constant 1 : index
    %46 = memref.load %arg6[%c1_17] : memref<2xf32, #tpu.memory_space<smem>>
    %47 = vector.broadcast %46 : f32 to vector<8x1xf32>
    %48 = arith.mulf %42, %47 : vector<8x1xf32>
    %49 = arith.addf %45, %48 : vector<8x1xf32>
    %c0_18 = arith.constant 0 : index
    %50 = memref.load %arg7[%c0_18] : memref<1xf32, #tpu.memory_space<smem>>
    %51 = vector.broadcast %50 : f32 to vector<8x1xf32>
    %52 = arith.addf %49, %51 : vector<8x1xf32>
    %c0_19 = arith.constant 0 : index
    %c0_20 = arith.constant 0 : index
    %53 = vector.load %arg8[%c0_19, %c0_20] : memref<8x1xf32, #tpu.memory_space<vmem>>, vector<8x1xf32>
    tpu.vector_store %arg8[%c0_19, %c0_20], %52 {strides = array<i32>} : memref<8x1xf32, #tpu.memory_space<vmem>>, vector<8x1xf32>,
    return
  }
  func.func @transform_0(%arg0: i32) -> (i32, i32) {
    %c0_i32 = arith.constant 0 : i32
    %c0_i32_0 = arith.constant 0 : i32
    return %arg0, %c0_i32 : i32, i32
  }
  func.func @transform_1(%arg0: i32) -> (i32, i32) {
    %c0_i32 = arith.constant 0 : i32
    %c0_i32_0 = arith.constant 0 : i32
    %c0_i32_1 = arith.constant 0 : i32
    return %c0_i32, %c0_i32_0 : i32, i32
  }
  func.func @transform_2(%arg0: i32) -> (i32, i32) {
    %c0_i32 = arith.constant 0 : i32
    %c0_i32_0 = arith.constant 0 : i32
    %c0_i32_1 = arith.constant 0 : i32
    return %c0_i32, %c0_i32_0 : i32, i32
  }
  func.func @transform_3(%arg0: i32) -> (i32, i32) {
    %c0_i32 = arith.constant 0 : i32
    %c0_i32_0 = arith.constant 0 : i32
    %c0_i32_1 = arith.constant 0 : i32
    return %c0_i32, %c0_i32_0 : i32, i32
  }
  func.func @transform_4(%arg0: i32) -> i32 {
    %c0_i32 = arith.constant 0 : i32
    %c0_i32_0 = arith.constant 0 : i32
    return %c0_i32 : i32
  }
  func.func @transform_5(%arg0: i32) -> i32 {
    %c0_i32 = arith.constant 0 : i32
    %c0_i32_0 = arith.constant 0 : i32
    return %c0_i32 : i32
  }
  func.func @transform_6(%arg0: i32) -> i32 {
    %c0_i32 = arith.constant 0 : i32
    %c0_i32_0 = arith.constant 0 : i32
    return %c0_i32 : i32
  }
  func.func @transform_7(%arg0: i32) -> (i32, i32) {
    %c0_i32 = arith.constant 0 : i32
    %c0_i32_0 = arith.constant 0 : i32
    return %arg0, %c0_i32 : i32, i32
  }
}

</mosaic_0001>

<llo_original>
// kernel: tpu_custom_call.1
$region0: #{tpu_custom_call.1}
  #allocation0 [shape = 'u32[]', space=smem, size = 0x4, offset = 0x4, fixed_abs, tag = 'smem constant byte address 0x4 - core index']
  #allocation1 [shape = 'u32[144,128]{1,0:T(1,128)}', space=vmem, size = 0x12000, scoped, tag = 'internal scratch']
  #allocation2 [shape = 'f32[1]{0:T(128)S(6)}', space=smem, size = 0x200, scoped, tag = 'scoped memory for tpu_custom_call.1']
  %s0 = inlined_call_operand.vmem [shape: f32[8,12006], index: 0, kind: input, shape index: {}]
  %s1 = inlined_call_operand.vmem [shape: f32[12006,18], index: 1, kind: input, shape index: {}]
  %s2 = inlined_call_operand.vmem [shape: f32[1,16], index: 2, kind: input, shape index: {}]
  %s3 = inlined_call_operand.vmem [shape: f32[2,16], index: 3, kind: input, shape index: {}]
  %s4 = inlined_call_operand.vmem [shape: f32[2], index: 4, kind: input, shape index: {}]
  %s5 = inlined_call_operand.vmem [shape: f32[2], index: 5, kind: input, shape index: {}]
  %s6 = inlined_call_operand.<no memory space> [shape: f32[1], index: 6, kind: input, shape index: {}]
  %s7 = inlined_call_operand.vmem [shape: f32[8,1], index: 7, kind: output, shape index: {}]
  %s8 = sld [smem:[#allocation0]]
  $region46: #{tpu_custom_call.1} parent=0
    _
  %s10 = ssub.s32 1, %s8
  %s11 = scalar_select 0, %s10, %s8
  %12 = sst [smem:[#allocation2]] %s6
  $region1: #{tpu_custom_call.1} parent=0
    #allocation3 [shape = 'u8[512]{0}', space=smem, size = 0x200, scoped, tag = 'input window, operand 4, single buffered']
    #allocation4 [shape = 's32[1]{0}', space=sflag, size = 0x4, scoped, tag = 'scoped memory for tpu_custom_call.1']
    #allocation5 [shape = 'u8[512]{0}', space=smem, size = 0x200, scoped, tag = 'input window, operand 5, single buffered']
    #allocation6 [shape = 's32[1]{0}', space=sflag, size = 0x4, scoped, tag = 'scoped memory for tpu_custom_call.1']
    %13 = vsyncpa [#allocation4], 0
    %14 = vsyncpa [#allocation6], 0
    // Predicated region
    $region2: #{tpu_custom_call.1} parent=1 // pred_check
      _
    $region3: #{tpu_custom_call.1} parent=1 // pred_check_branch
      %16 = sbr.rel (0) target = $region5
    $region4: #{tpu_custom_call.1} parent=1 // pred_region
      _
    $region5: #{tpu_custom_call.1} parent=1 // pred_fallthru
      _
    // Predicated region
    $region6: #{tpu_custom_call.1} parent=1 // pred_check
      _
    $region7: #{tpu_custom_call.1} parent=1 // pred_check_branch
      %18 = sbr.rel (0) target = $region9
    $region8: #{tpu_custom_call.1} parent=1 // pred_region
      _
    $region9: #{tpu_custom_call.1} parent=1 // pred_fallthru
      _
    // Predicated region
    $region10: #{tpu_custom_call.1} parent=1 // pred_check
      _
    $region11: #{tpu_custom_call.1} parent=1 // pred_check_branch
      %20 = sbr.rel (0) target = $region13
    $region12: #{tpu_custom_call.1} parent=1 // pred_region
      _
    $region13: #{tpu_custom_call.1} parent=1 // pred_fallthru
      _
    // Predicated region
    $region14: #{tpu_custom_call.1} parent=1 // pred_check
      _
    $region15: #{tpu_custom_call.1} parent=1 // pred_check_branch
      %22 = sbr.rel (0) target = $region17
    $region16: #{tpu_custom_call.1} parent=1 // pred_region
      _
    $region17: #{tpu_custom_call.1} parent=1 // pred_fallthru
      _
    // Predicated region
    $region18: #{tpu_custom_call.1} parent=1 // pred_check
      _
    $region19: #{tpu_custom_call.1} parent=1 // pred_check_branch
      %24 = sbr.rel (0) target = $region21
    $region20: #{tpu_custom_call.1} parent=1 // pred_region
      %s26 = ssub.s32 16, 16
      %27 = vsyncadd [#allocation4], %s26
      %s29 = sshll.u32 %s4, 4
      %s30 = int_to_ptr.vmem [resolvable:$true] %s29
      %32 = dma.vmem_to_smem %s30, 16, [#allocation3], [#allocation4]
    $region21: #{tpu_custom_call.1} parent=1 // pred_fallthru
      _
    // Predicated region
    $region22: #{tpu_custom_call.1} parent=1 // pred_check
      _
    $region23: #{tpu_custom_call.1} parent=1 // pred_check_branch
      %34 = sbr.rel (0) target = $region25
    $region24: #{tpu_custom_call.1} parent=1 // pred_region
      %s36 = ssub.s32 16, 16
      %37 = vsyncadd [#allocation6], %s36
      %s39 = sshll.u32 %s5, 4
      %s40 = int_to_ptr.vmem [resolvable:$true] %s39
      %42 = dma.vmem_to_smem %s40, 16, [#allocation5], [#allocation6]
    $region25: #{tpu_custom_call.1} parent=1 // pred_fallthru
      _
    // Predicated region
    $region26: #{tpu_custom_call.1} parent=1 // pred_check
      _
    $region27: #{tpu_custom_call.1} parent=1 // pred_check_branch
      %44 = sbr.rel (0) target = $region29
    $region28: #{tpu_custom_call.1} parent=1 // pred_region
      _
    $region29: #{tpu_custom_call.1} parent=1 // pred_fallthru
      _
    // Predicated region
    $region30: #{tpu_custom_call.1} parent=1 // pred_check
      _
    $region31: #{tpu_custom_call.1} parent=1 // pred_check_branch
      %46 = sbr.rel (0) target = $region33
    $region32: #{tpu_custom_call.1} parent=1 // pred_region
      %47 = dma.done [#allocation4], 16
    $region33: #{tpu_custom_call.1} parent=1 // pred_fallthru
      _
    // Predicated region
    $region34: #{tpu_custom_call.1} parent=1 // pred_check
      _
    $region35: #{tpu_custom_call.1} parent=1 // pred_check_branch
      %49 = sbr.rel (0) target = $region37
    $region36: #{tpu_custom_call.1} parent=1 // pred_region
      %50 = dma.done [#allocation6], 16
    $region37: #{tpu_custom_call.1} parent=1 // pred_fallthru
      _
    %51 = sfence
    %v52 = vld [vmem:[%s0] sm:$0xff]
    %v53 = vld [vmem:[%s0 + $0x8] sm:$0xff]
    %v54 = vld [vmem:[%s0 + $0x10] sm:$0xff]
    %v55 = vld [vmem:[%s0 + $0x18] sm:$0xff]
    %v56 = vld [vmem:[%s0 + $0x20] sm:$0xff]
    %v57 = vld [vmem:[%s0 + $0x28] sm:$0xff]
    %v58 = vld [vmem:[%s0 + $0x30] sm:$0xff]
    %v59 = vld [vmem:[%s0 + $0x38] sm:$0xff]
    %v60 = vld [vmem:[%s0 + $0x40] sm:$0xff]
    %v61 = vld [vmem:[%s0 + $0x48] sm:$0xff]
    %v62 = vld [vmem:[%s0 + $0x50] sm:$0xff]
    %v63 = vld [vmem:[%s0 + $0x58] sm:$0xff]
    %v64 = vld [vmem:[%s0 + $0x60] sm:$0xff]
    %v65 = vld [vmem:[%s0 + $0x68] sm:$0xff]
    %v66 = vld [vmem:[%s0 + $0x70] sm:$0xff]
    %v67 = vld [vmem:[%s0 + $0x78] sm:$0xff]
    %v68 = vld [vmem:[%s0 + $0x80] sm:$0xff]
    %v69 = vld [vmem:[%s0 + $0x88] sm:$0xff]
    %v70 = vld [vmem:[%s0 + $0x90] sm:$0xff]
    %v71 = vld [vmem:[%s0 + $0x98] sm:$0xff]
    %v72 = vld [vmem:[%s0 + $0xa0] sm:$0xff]
    %v73 = vld [vmem:[%s0 + $0xa8] sm:$0xff]
    %v74 = vld [vmem:[%s0 + $0xb0] sm:$0xff]
    %v75 = vld [vmem:[%s0 + $0xb8] sm:$0xff]
    %v76 = vld [vmem:[%s0 + $0xc0] sm:$0xff]
    %v77 = vld [vmem:[%s0 + $0xc8] sm:$0xff]
    %v78 = vld [vmem:[%s0 + $0xd0] sm:$0xff]
    %v79 = vld [vmem:[%s0 + $0xd8] sm:$0xff]
    %v80 = vld [vmem:[%s0 + $0xe0] sm:$0xff]
    %v81 = vld [vmem:[%s0 + $0xe8] sm:$0xff]
    %v82 = vld [vmem:[%s0 + $0xf0] sm:$0xff]
    %v83 = vld [vmem:[%s0 + $0xf8] sm:$0xff]
    %v84 = vld [vmem:[%s0 + $0x100] sm:$0xff]
    %v85 = vld [vmem:[%s0 + $0x108] sm:$0xff]
    %v86 = vld [vmem:[%s0 + $0x110] sm:$0xff]
    %v87 = vld [vmem:[%s0 + $0x118] sm:$0xff]
    %v88 = vld [vmem:[%s0 + $0x120] sm:$0xff]
    %v89 = vld [vmem:[%s0 + $0x128] sm:$0xff]
    %v90 = vld [vmem:[%s0 + $0x130] sm:$0xff]
    %v91 = vld [vmem:[%s0 + $0x138] sm:$0xff]
    %v92 = vld [vmem:[%s0 + $0x140] sm:$0xff]
    %v93 = vld [vmem:[%s0 + $0x148] sm:$0xff]
    %v94 = vld [vmem:[%s0 + $0x150] sm:$0xff]
    %v95 = vld [vmem:[%s0 + $0x158] sm:$0xff]
    %v96 = vld [vmem:[%s0 + $0x160] sm:$0xff]
    %v97 = vld [vmem:[%s0 + $0x168] sm:$0xff]
    %v98 = vld [vmem:[%s0 + $0x170] sm:$0xff]
    %v99 = vld [vmem:[%s0 + $0x178] sm:$0xff]
    %v100 = vld [vmem:[%s0 + $0x180] sm:$0xff]
    %v101 = vld [vmem:[%s0 + $0x188] sm:$0xff]
    %v102 = vld [vmem:[%s0 + $0x190] sm:$0xff]
    %v103 = vld [vmem:[%s0 + $0x198] sm:$0xff]
    %v104 = vld [vmem:[%s0 + $0x1a0] sm:$0xff]
    %v105 = vld [vmem:[%s0 + $0x1a8] sm:$0xff]
    %v106 = vld [vmem:[%s0 + $0x1b0] sm:$0xff]
    %v107 = vld [vmem:[%s0 + $0x1b8] sm:$0xff]
    %v108 = vld [vmem:[%s0 + $0x1c0] sm:$0xff]
    %v109 = vld [vmem:[%s0 + $0x1c8] sm:$0xff]
    %v110 = vld [vmem:[%s0 + $0x1d0] sm:$0xff]
    %v111 = vld [vmem:[%s0 + $0x1d8] sm:$0xff]
    %v112 = vld [vmem:[%s0 + $0x1e0] sm:$0xff]
    %v113 = vld [vmem:[%s0 + $0x1e8] sm:$0xff]
    %v114 = vld [vmem:[%s0 + $0x1f0] sm:$0xff]
    %v115 = vld [vmem:[%s0 + $0x1f8] sm:$0xff]
    %v116 = vld [vmem:[%s0 + $0x200] sm:$0xff]
    %v117 = vld [vmem:[%s0 + $0x208] sm:$0xff]
    %v118 = vld [vmem:[%s0 + $0x210] sm:$0xff]
    %v119 = vld [vmem:[%s0 + $0x218] sm:$0xff]
    %v120 = vld [vmem:[%s0 + $0x220] sm:$0xff]
    %v121 = vld [vmem:[%s0 + $0x228] sm:$0xff]
    %v122 = vld [vmem:[%s0 + $0x230] sm:$0xff]
    %v123 = vld [vmem:[%s0 + $0x238] sm:$0xff]
    %v124 = vld [vmem:[%s0 + $0x240] sm:$0xff]
    %v125 = vld [vmem:[%s0 + $0x248] sm:$0xff]
    %v126 = vld [vmem:[%s0 + $0x250] sm:$0xff]
    %v127 = vld [vmem:[%s0 + $0x258] sm:$0xff]
    %v128 = vld [vmem:[%s0 + $0x260] sm:$0xff]
    %v129 = vld [vmem:[%s0 + $0x268] sm:$0xff]
    %v130 = vld [vmem:[%s0 + $0x270] sm:$0xff]
    %v131 = vld [vmem:[%s0 + $0x278] sm:$0xff]
    %v132 = vld [vmem:[%s0 + $0x280] sm:$0xff]
    %v133 = vld [vmem:[%s0 + $0x288] sm:$0xff]
    %v134 = vld [vmem:[%s0 + $0x290] sm:$0xff]
    %v135 = vld [vmem:[%s0 + $0x298] sm:$0xff]
    %v136 = vld [vmem:[%s0 + $0x2a0] sm:$0xff]
    %v137 = vld [vmem:[%s0 + $0x2a8] sm:$0xff]
    %v138 = vld [vmem:[%s0 + $0x2b0] sm:$0xff]
    %v139 = vld [vmem:[%s0 + $0x2b8] sm:$0xff]
    %v140 = vld [vmem:[%s0 + $0x2c0] sm:$0xff]
    %v141 = vld [vmem:[%s0 + $0x2c8] sm:$0xff]
    %v142 = vld [vmem:[%s0 + $0x2d0] sm:$0xff]
    %v143 = vld [vmem:[%s0 + $0x2d8] sm:$0xff]
    %v144 = vld [vmem:[%s0 + $0x2e0] sm:$0xff]
    %v145 = vld [vmem:[%s0 + $0x2e8] sm:$0xff]
    %v146 = vld [vmem:[%s1] sm:$0xff]
    %v147 = vld [vmem:[%s1 + $0x8] sm:$0xff]
    %v148 = vld [vmem:[%s1 + $0x10] sm:$0xff]
    %v149 = vld [vmem:[%s1 + $0x18] sm:$0xff]
    %v150 = vld [vmem:[%s1 + $0x20] sm:$0xff]
    %v151 = vld [vmem:[%s1 + $0x28] sm:$0xff]
    %v152 = vld [vmem:[%s1 + $0x30] sm:$0xff]
    %v153 = vld [vmem:[%s1 + $0x38] sm:$0xff]
    %v154 = vld [vmem:[%s1 + $0x40] sm:$0xff]
    %v155 = vld [vmem:[%s1 + $0x48] sm:$0xff]
    %v156 = vld [vmem:[%s1 + $0x50] sm:$0xff]
    %v157 = vld [vmem:[%s1 + $0x58] sm:$0xff]
    %v158 = vld [vmem:[%s1 + $0x60] sm:$0xff]
    %v159 = vld [vmem:[%s1 + $0x68] sm:$0xff]
    %v160 = vld [vmem:[%s1 + $0x70] sm:$0xff]
    %v161 = vld [vmem:[%s1 + $0x78] sm:$0xff]
    %v162 = vld [vmem:[%s1 + $0x80] sm:$0xff]
    %v163 = vld [vmem:[%s1 + $0x88] sm:$0xff]
    %v164 = vld [vmem:[%s1 + $0x90] sm:$0xff]
    %v165 = vld [vmem:[%s1 + $0x98] sm:$0xff]
    %v166 = vld [vmem:[%s1 + $0xa0] sm:$0xff]
    %v167 = vld [vmem:[%s1 + $0xa8] sm:$0xff]
    %v168 = vld [vmem:[%s1 + $0xb0] sm:$0xff]
    %v169 = vld [vmem:[%s1 + $0xb8] sm:$0xff]
    %v170 = vld [vmem:[%s1 + $0xc0] sm:$0xff]
    %v171 = vld [vmem:[%s1 + $0xc8] sm:$0xff]
    %v172 = vld [vmem:[%s1 + $0xd0] sm:$0xff]
    %v173 = vld [vmem:[%s1 + $0xd8] sm:$0xff]
    %v174 = vld [vmem:[%s1 + $0xe0] sm:$0xff]
    %v175 = vld [vmem:[%s1 + $0xe8] sm:$0xff]
    %v176 = vld [vmem:[%s1 + $0xf0] sm:$0xff]
    %v177 = vld [vmem:[%s1 + $0xf8] sm:$0xff]
    %v178 = vld [vmem:[%s1 + $0x100] sm:$0xff]
    %v179 = vld [vmem:[%s1 + $0x108] sm:$0xff]
    %v180 = vld [vmem:[%s1 + $0x110] sm:$0xff]
    %v181 = vld [vmem:[%s1 + $0x118] sm:$0xff]
    %v182 = vld [vmem:[%s1 + $0x120] sm:$0xff]
    %v183 = vld [vmem:[%s1 + $0x128] sm:$0xff]
    %v184 = vld [vmem:[%s1 + $0x130] sm:$0xff]
    %v185 = vld [vmem:[%s1 + $0x138] sm:$0xff]
    %v186 = vld [vmem:[%s1 + $0x140] sm:$0xff]
    %v187 = vld [vmem:[%s1 + $0x148] sm:$0xff]
    %v188 = vld [vmem:[%s1 + $0x150] sm:$0xff]
    %v189 = vld [vmem:[%s1 + $0x158] sm:$0xff]
    %v190 = vld [vmem:[%s1 + $0x160] sm:$0xff]
    %v191 = vld [vmem:[%s1 + $0x168] sm:$0xff]
    %v192 = vld [vmem:[%s1 + $0x170] sm:$0xff]
    %v193 = vld [vmem:[%s1 + $0x178] sm:$0xff]
    %v194 = vld [vmem:[%s1 + $0x180] sm:$0xff]
    %v195 = vld [vmem:[%s1 + $0x188] sm:$0xff]
    %v196 = vld [vmem:[%s1 + $0x190] sm:$0xff]
    %v197 = vld [vmem:[%s1 + $0x198] sm:$0xff]
    %v198 = vld [vmem:[%s1 + $0x1a0] sm:$0xff]
    %v199 = vld [vmem:[%s1 + $0x1a8] sm:$0xff]
    %v200 = vld [vmem:[%s1 + $0x1b0] sm:$0xff]
    %v201 = vld [vmem:[%s1 + $0x1b8] sm:$0xff]
    %v202 = vld [vmem:[%s1 + $0x1c0] sm:$0xff]
    %v203 = vld [vmem:[%s1 + $0x1c8] sm:$0xff]
    %v204 = vld [vmem:[%s1 + $0x1d0] sm:$0xff]
    %v205 = vld [vmem:[%s1 + $0x1d8] sm:$0xff]
    %v206 = vld [vmem:[%s1 + $0x1e0] sm:$0xff]
    %v207 = vld [vmem:[%s1 + $0x1e8] sm:$0xff]
    %v208 = vld [vmem:[%s1 + $0x1f0] sm:$0xff]
    %v209 = vld [vmem:[%s1 + $0x1f8] sm:$0xff]
    %v210 = vld [vmem:[%s1 + $0x200] sm:$0xff]
    %v211 = vld [vmem:[%s1 + $0x208] sm:$0xff]
    %v212 = vld [vmem:[%s1 + $0x210] sm:$0xff]
    %v213 = vld [vmem:[%s1 + $0x218] sm:$0xff]
    %v214 = vld [vmem:[%s1 + $0x220] sm:$0xff]
    %v215 = vld [vmem:[%s1 + $0x228] sm:$0xff]
    %v216 = vld [vmem:[%s1 + $0x230] sm:$0xff]
    %v217 = vld [vmem:[%s1 + $0x238] sm:$0xff]
    %v218 = vld [vmem:[%s1 + $0x240] sm:$0xff]
    %v219 = vld [vmem:[%s1 + $0x248] sm:$0xff]
    %v220 = vld [vmem:[%s1 + $0x250] sm:$0xff]
    %v221 = vld [vmem:[%s1 + $0x258] sm:$0xff]
    %v222 = vld [vmem:[%s1 + $0x260] sm:$0xff]
    %v223 = vld [vmem:[%s1 + $0x268] sm:$0xff]
    %v224 = vld [vmem:[%s1 + $0x270] sm:$0xff]
    %v225 = vld [vmem:[%s1 + $0x278] sm:$0xff]
    %v226 = vld [vmem:[%s1 + $0x280] sm:$0xff]
    %v227 = vld [vmem:[%s1 + $0x288] sm:$0xff]
    %v228 = vld [vmem:[%s1 + $0x290] sm:$0xff]
    %v229 = vld [vmem:[%s1 + $0x298] sm:$0xff]
    %v230 = vld [vmem:[%s1 + $0x2a0] sm:$0xff]
    %v231 = vld [vmem:[%s1 + $0x2a8] sm:$0xff]
    %v232 = vld [vmem:[%s1 + $0x2b0] sm:$0xff]
    %v233 = vld [vmem:[%s1 + $0x2b8] sm:$0xff]
    %v234 = vld [vmem:[%s1 + $0x2c0] sm:$0xff]
    %v235 = vld [vmem:[%s1 + $0x2c8] sm:$0xff]
    %v236 = vld [vmem:[%s1 + $0x2d0] sm:$0xff]
    %v237 = vld [vmem:[%s1 + $0x2d8] sm:$0xff]
    %v238 = vld [vmem:[%s1 + $0x2e0] sm:$0xff]
    %v239 = vld [vmem:[%s1 + $0x2e8] sm:$0xff]
    %v240 = vld [vmem:[%s1 + $0x2f0] sm:$0xff]
    %v241 = vld [vmem:[%s1 + $0x2f8] sm:$0xff]
    %v242 = vld [vmem:[%s1 + $0x300] sm:$0xff]
    %v243 = vld [vmem:[%s1 + $0x308] sm:$0xff]
    %v244 = vld [vmem:[%s1 + $0x310] sm:$0xff]
    %v245 = vld [vmem:[%s1 + $0x318] sm:$0xff]
    %v246 = vld [vmem:[%s1 + $0x320] sm:$0xff]
    %v247 = vld [vmem:[%s1 + $0x328] sm:$0xff]
    %v248 = vld [vmem:[%s1 + $0x330] sm:$0xff]
    %v249 = vld [vmem:[%s1 + $0x338] sm:$0xff]
    %v250 = vld [vmem:[%s1 + $0x340] sm:$0xff]
    %v251 = vld [vmem:[%s1 + $0x348] sm:$0xff]
    %v252 = vld [vmem:[%s1 + $0x350] sm:$0xff]
    %v253 = vld [vmem:[%s1 + $0x358] sm:$0xff]
    %v254 = vld [vmem:[%s1 + $0x360] sm:$0xff]
    %v255 = vld [vmem:[%s1 + $0x368] sm:$0xff]
    %v256 = vld [vmem:[%s1 + $0x370] sm:$0xff]
    %v257 = vld [vmem:[%s1 + $0x378] sm:$0xff]
    %v258 = vld [vmem:[%s1 + $0x380] sm:$0xff]
    %v259 = vld [vmem:[%s1 + $0x388] sm:$0xff]
    %v260 = vld [vmem:[%s1 + $0x390] sm:$0xff]
    %v261 = vld [vmem:[%s1 + $0x398] sm:$0xff]
    %v262 = vld [vmem:[%s1 + $0x3a0] sm:$0xff]
    %v263 = vld [vmem:[%s1 + $0x3a8] sm:$0xff]
    %v264 = vld [vmem:[%s1 + $0x3b0] sm:$0xff]
    %v265 = vld [vmem:[%s1 + $0x3b8] sm:$0xff]
    %v266 = vld [vmem:[%s1 + $0x3c0] sm:$0xff]
    %v267 = vld [vmem:[%s1 + $0x3c8] sm:$0xff]
    %v268 = vld [vmem:[%s1 + $0x3d0] sm:$0xff]
    %v269 = vld [vmem:[%s1 + $0x3d8] sm:$0xff]
    %v270 = vld [vmem:[%s1 + $0x3e0] sm:$0xff]
    %v271 = vld [vmem:[%s1 + $0x3e8] sm:$0xff]
    %v272 = vld [vmem:[%s1 + $0x3f0] sm:$0xff]
    %v273 = vld [vmem:[%s1 + $0x3f8] sm:$0xff]
    %v274 = vld [vmem:[%s1 + $0x400] sm:$0xff]
    %v275 = vld [vmem:[%s1 + $0x408] sm:$0xff]
    %v276 = vld [vmem:[%s1 + $0x410] sm:$0xff]
    %v277 = vld [vmem:[%s1 + $0x418] sm:$0xff]
    %v278 = vld [vmem:[%s1 + $0x420] sm:$0xff]
    %v279 = vld [vmem:[%s1 + $0x428] sm:$0xff]
    %v280 = vld [vmem:[%s1 + $0x430] sm:$0xff]
    %v281 = vld [vmem:[%s1 + $0x438] sm:$0xff]
    %v282 = vld [vmem:[%s1 + $0x440] sm:$0xff]
    %v283 = vld [vmem:[%s1 + $0x448] sm:$0xff]
    %v284 = vld [vmem:[%s1 + $0x450] sm:$0xff]
    %v285 = vld [vmem:[%s1 + $0x458] sm:$0xff]
    %v286 = vld [vmem:[%s1 + $0x460] sm:$0xff]
    %v287 = vld [vmem:[%s1 + $0x468] sm:$0xff]
    %v288 = vld [vmem:[%s1 + $0x470] sm:$0xff]
    %v289 = vld [vmem:[%s1 + $0x478] sm:$0xff]
    %v290 = vld [vmem:[%s1 + $0x480] sm:$0xff]
    %v291 = vld [vmem:[%s1 + $0x488] sm:$0xff]
    %v292 = vld [vmem:[%s1 + $0x490] sm:$0xff]
    %v293 = vld [vmem:[%s1 + $0x498] sm:$0xff]
    %v294 = vld [vmem:[%s1 + $0x4a0] sm:$0xff]
    %v295 = vld [vmem:[%s1 + $0x4a8] sm:$0xff]
    %v296 = vld [vmem:[%s1 + $0x4b0] sm:$0xff]
    %v297 = vld [vmem:[%s1 + $0x4b8] sm:$0xff]
    %v298 = vld [vmem:[%s1 + $0x4c0] sm:$0xff]
    %v299 = vld [vmem:[%s1 + $0x4c8] sm:$0xff]
    %v300 = vld [vmem:[%s1 + $0x4d0] sm:$0xff]
    %v301 = vld [vmem:[%s1 + $0x4d8] sm:$0xff]
    %v302 = vld [vmem:[%s1 + $0x4e0] sm:$0xff]
    %v303 = vld [vmem:[%s1 + $0x4e8] sm:$0xff]
    %v304 = vld [vmem:[%s1 + $0x4f0] sm:$0xff]
    %v305 = vld [vmem:[%s1 + $0x4f8] sm:$0xff]
    %v306 = vld [vmem:[%s1 + $0x500] sm:$0xff]
    %v307 = vld [vmem:[%s1 + $0x508] sm:$0xff]
    %v308 = vld [vmem:[%s1 + $0x510] sm:$0xff]
    %v309 = vld [vmem:[%s1 + $0x518] sm:$0xff]
    %v310 = vld [vmem:[%s1 + $0x520] sm:$0xff]
    %v311 = vld [vmem:[%s1 + $0x528] sm:$0xff]
    %v312 = vld [vmem:[%s1 + $0x530] sm:$0xff]
    %v313 = vld [vmem:[%s1 + $0x538] sm:$0xff]
    %v314 = vld [vmem:[%s1 + $0x540] sm:$0xff]
    %v315 = vld [vmem:[%s1 + $0x548] sm:$0xff]
    %v316 = vld [vmem:[%s1 + $0x550] sm:$0xff]
    %v317 = vld [vmem:[%s1 + $0x558] sm:$0xff]
    %v318 = vld [vmem:[%s1 + $0x560] sm:$0xff]
    %v319 = vld [vmem:[%s1 + $0x568] sm:$0xff]
    %v320 = vld [vmem:[%s1 + $0x570] sm:$0xff]
    %v321 = vld [vmem:[%s1 + $0x578] sm:$0xff]
    %v322 = vld [vmem:[%s1 + $0x580] sm:$0xff]
    %v323 = vld [vmem:[%s1 + $0x588] sm:$0xff]
    %v324 = vld [vmem:[%s1 + $0x590] sm:$0xff]
    %v325 = vld [vmem:[%s1 + $0x598] sm:$0xff]
    %v326 = vld [vmem:[%s1 + $0x5a0] sm:$0xff]
    %v327 = vld [vmem:[%s1 + $0x5a8] sm:$0xff]
    %v328 = vld [vmem:[%s1 + $0x5b0] sm:$0xff]
    %v329 = vld [vmem:[%s1 + $0x5b8] sm:$0xff]
    %v330 = vld [vmem:[%s1 + $0x5c0] sm:$0xff]
    %v331 = vld [vmem:[%s1 + $0x5c8] sm:$0xff]
    %v332 = vld [vmem:[%s1 + $0x5d0] sm:$0xff]
    %v333 = vld [vmem:[%s1 + $0x5d8] sm:$0xff]
    %v334 = vld [vmem:[%s1 + $0x5e0] sm:$0xff]
    %v335 = vld [vmem:[%s1 + $0x5e8] sm:$0xff]
    %v336 = vld [vmem:[%s1 + $0x5f0] sm:$0xff]
    %v337 = vld [vmem:[%s1 + $0x5f8] sm:$0xff]
    %v338 = vld [vmem:[%s1 + $0x600] sm:$0xff]
    %v339 = vld [vmem:[%s1 + $0x608] sm:$0xff]
    %v340 = vld [vmem:[%s1 + $0x610] sm:$0xff]
    %v341 = vld [vmem:[%s1 + $0x618] sm:$0xff]
    %v342 = vld [vmem:[%s1 + $0x620] sm:$0xff]
    %v343 = vld [vmem:[%s1 + $0x628] sm:$0xff]
    %v344 = vld [vmem:[%s1 + $0x630] sm:$0xff]
    %v345 = vld [vmem:[%s1 + $0x638] sm:$0xff]
    %v346 = vld [vmem:[%s1 + $0x640] sm:$0xff]
    %v347 = vld [vmem:[%s1 + $0x648] sm:$0xff]
    %v348 = vld [vmem:[%s1 + $0x650] sm:$0xff]
    %v349 = vld [vmem:[%s1 + $0x658] sm:$0xff]
    %v350 = vld [vmem:[%s1 + $0x660] sm:$0xff]
    %v351 = vld [vmem:[%s1 + $0x668] sm:$0xff]
    %v352 = vld [vmem:[%s1 + $0x670] sm:$0xff]
    %v353 = vld [vmem:[%s1 + $0x678] sm:$0xff]
    %v354 = vld [vmem:[%s1 + $0x680] sm:$0xff]
    %v355 = vld [vmem:[%s1 + $0x688] sm:$0xff]
    %v356 = vld [vmem:[%s1 + $0x690] sm:$0xff]
    %v357 = vld [vmem:[%s1 + $0x698] sm:$0xff]
    %v358 = vld [vmem:[%s1 + $0x6a0] sm:$0xff]
    %v359 = vld [vmem:[%s1 + $0x6a8] sm:$0xff]
    %v360 = vld [vmem:[%s1 + $0x6b0] sm:$0xff]
    %v361 = vld [vmem:[%s1 + $0x6b8] sm:$0xff]
    %v362 = vld [vmem:[%s1 + $0x6c0] sm:$0xff]
    %v363 = vld [vmem:[%s1 + $0x6c8] sm:$0xff]
    %v364 = vld [vmem:[%s1 + $0x6d0] sm:$0xff]
    %v365 = vld [vmem:[%s1 + $0x6d8] sm:$0xff]
    %v366 = vld [vmem:[%s1 + $0x6e0] sm:$0xff]
    %v367 = vld [vmem:[%s1 + $0x6e8] sm:$0xff]
    %v368 = vld [vmem:[%s1 + $0x6f0] sm:$0xff]
    %v369 = vld [vmem:[%s1 + $0x6f8] sm:$0xff]
    %v370 = vld [vmem:[%s1 + $0x700] sm:$0xff]
    %v371 = vld [vmem:[%s1 + $0x708] sm:$0xff]
    %v372 = vld [vmem:[%s1 + $0x710] sm:$0xff]
    %v373 = vld [vmem:[%s1 + $0x718] sm:$0xff]
    %v374 = vld [vmem:[%s1 + $0x720] sm:$0xff]
    %v375 = vld [vmem:[%s1 + $0x728] sm:$0xff]
    %v376 = vld [vmem:[%s1 + $0x730] sm:$0xff]
    %v377 = vld [vmem:[%s1 + $0x738] sm:$0xff]
    %v378 = vld [vmem:[%s1 + $0x740] sm:$0xff]
    %v379 = vld [vmem:[%s1 + $0x748] sm:$0xff]
    %v380 = vld [vmem:[%s1 + $0x750] sm:$0xff]
    %v381 = vld [vmem:[%s1 + $0x758] sm:$0xff]
    %v382 = vld [vmem:[%s1 + $0x760] sm:$0xff]
    %v383 = vld [vmem:[%s1 + $0x768] sm:$0xff]
    %v384 = vld [vmem:[%s1 + $0x770] sm:$0xff]
    %v385 = vld [vmem:[%s1 + $0x778] sm:$0xff]
    %v386 = vld [vmem:[%s1 + $0x780] sm:$0xff]
    %v387 = vld [vmem:[%s1 + $0x788] sm:$0xff]
    %v388 = vld [vmem:[%s1 + $0x790] sm:$0xff]
    %v389 = vld [vmem:[%s1 + $0x798] sm:$0xff]
    %v390 = vld [vmem:[%s1 + $0x7a0] sm:$0xff]
    %v391 = vld [vmem:[%s1 + $0x7a8] sm:$0xff]
    %v392 = vld [vmem:[%s1 + $0x7b0] sm:$0xff]
    %v393 = vld [vmem:[%s1 + $0x7b8] sm:$0xff]
    %v394 = vld [vmem:[%s1 + $0x7c0] sm:$0xff]
    %v395 = vld [vmem:[%s1 + $0x7c8] sm:$0xff]
    %v396 = vld [vmem:[%s1 + $0x7d0] sm:$0xff]
    %v397 = vld [vmem:[%s1 + $0x7d8] sm:$0xff]
    %v398 = vld [vmem:[%s1 + $0x7e0] sm:$0xff]
    %v399 = vld [vmem:[%s1 + $0x7e8] sm:$0xff]
    %v400 = vld [vmem:[%s1 + $0x7f0] sm:$0xff]
    %v401 = vld [vmem:[%s1 + $0x7f8] sm:$0xff]
    %v402 = vld [vmem:[%s1 + $0x800] sm:$0xff]
    %v403 = vld [vmem:[%s1 + $0x808] sm:$0xff]
    %v404 = vld [vmem:[%s1 + $0x810] sm:$0xff]
    %v405 = vld [vmem:[%s1 + $0x818] sm:$0xff]
    %v406 = vld [vmem:[%s1 + $0x820] sm:$0xff]
    %v407 = vld [vmem:[%s1 + $0x828] sm:$0xff]
    %v408 = vld [vmem:[%s1 + $0x830] sm:$0xff]
    %v409 = vld [vmem:[%s1 + $0x838] sm:$0xff]
    %v410 = vld [vmem:[%s1 + $0x840] sm:$0xff]
    %v411 = vld [vmem:[%s1 + $0x848] sm:$0xff]
    %v412 = vld [vmem:[%s1 + $0x850] sm:$0xff]
    %v413 = vld [vmem:[%s1 + $0x858] sm:$0xff]
    %v414 = vld [vmem:[%s1 + $0x860] sm:$0xff]
    %v415 = vld [vmem:[%s1 + $0x868] sm:$0xff]
    %v416 = vld [vmem:[%s1 + $0x870] sm:$0xff]
    %v417 = vld [vmem:[%s1 + $0x878] sm:$0xff]
    %v418 = vld [vmem:[%s1 + $0x880] sm:$0xff]
    %v419 = vld [vmem:[%s1 + $0x888] sm:$0xff]
    %v420 = vld [vmem:[%s1 + $0x890] sm:$0xff]
    %v421 = vld [vmem:[%s1 + $0x898] sm:$0xff]
    %v422 = vld [vmem:[%s1 + $0x8a0] sm:$0xff]
    %v423 = vld [vmem:[%s1 + $0x8a8] sm:$0xff]
    %v424 = vld [vmem:[%s1 + $0x8b0] sm:$0xff]
    %v425 = vld [vmem:[%s1 + $0x8b8] sm:$0xff]
    %v426 = vld [vmem:[%s1 + $0x8c0] sm:$0xff]
    %v427 = vld [vmem:[%s1 + $0x8c8] sm:$0xff]
    %v428 = vld [vmem:[%s1 + $0x8d0] sm:$0xff]
    %v429 = vld [vmem:[%s1 + $0x8d8] sm:$0xff]
    %v430 = vld [vmem:[%s1 + $0x8e0] sm:$0xff]
    %v431 = vld [vmem:[%s1 + $0x8e8] sm:$0xff]
    %v432 = vld [vmem:[%s1 + $0x8f0] sm:$0xff]
    %v433 = vld [vmem:[%s1 + $0x8f8] sm:$0xff]
    %v434 = vld [vmem:[%s1 + $0x900] sm:$0xff]
    %v435 = vld [vmem:[%s1 + $0x908] sm:$0xff]
    %v436 = vld [vmem:[%s1 + $0x910] sm:$0xff]
    %v437 = vld [vmem:[%s1 + $0x918] sm:$0xff]
    %v438 = vld [vmem:[%s1 + $0x920] sm:$0xff]
    %v439 = vld [vmem:[%s1 + $0x928] sm:$0xff]
    %v440 = vld [vmem:[%s1 + $0x930] sm:$0xff]
    %v441 = vld [vmem:[%s1 + $0x938] sm:$0xff]
    %v442 = vld [vmem:[%s1 + $0x940] sm:$0xff]
    %v443 = vld [vmem:[%s1 + $0x948] sm:$0xff]
    %v444 = vld [vmem:[%s1 + $0x950] sm:$0xff]
    %v445 = vld [vmem:[%s1 + $0x958] sm:$0xff]
    %v446 = vld [vmem:[%s1 + $0x960] sm:$0xff]
    %v447 = vld [vmem:[%s1 + $0x968] sm:$0xff]
    %v448 = vld [vmem:[%s1 + $0x970] sm:$0xff]
    %v449 = vld [vmem:[%s1 + $0x978] sm:$0xff]
    %v450 = vld [vmem:[%s1 + $0x980] sm:$0xff]
    %v451 = vld [vmem:[%s1 + $0x988] sm:$0xff]
    %v452 = vld [vmem:[%s1 + $0x990] sm:$0xff]
    %v453 = vld [vmem:[%s1 + $0x998] sm:$0xff]
    %v454 = vld [vmem:[%s1 + $0x9a0] sm:$0xff]
    %v455 = vld [vmem:[%s1 + $0x9a8] sm:$0xff]
    %v456 = vld [vmem:[%s1 + $0x9b0] sm:$0xff]
    %v457 = vld [vmem:[%s1 + $0x9b8] sm:$0xff]
    %v458 = vld [vmem:[%s1 + $0x9c0] sm:$0xff]
    %v459 = vld [vmem:[%s1 + $0x9c8] sm:$0xff]
    %v460 = vld [vmem:[%s1 + $0x9d0] sm:$0xff]
    %v461 = vld [vmem:[%s1 + $0x9d8] sm:$0xff]
    %v462 = vld [vmem:[%s1 + $0x9e0] sm:$0xff]
    %v463 = vld [vmem:[%s1 + $0x9e8] sm:$0xff]
    %v464 = vld [vmem:[%s1 + $0x9f0] sm:$0xff]
    %v465 = vld [vmem:[%s1 + $0x9f8] sm:$0xff]
    %v466 = vld [vmem:[%s1 + $0xa00] sm:$0xff]
    %v467 = vld [vmem:[%s1 + $0xa08] sm:$0xff]
    %v468 = vld [vmem:[%s1 + $0xa10] sm:$0xff]
    %v469 = vld [vmem:[%s1 + $0xa18] sm:$0xff]
    %v470 = vld [vmem:[%s1 + $0xa20] sm:$0xff]
    %v471 = vld [vmem:[%s1 + $0xa28] sm:$0xff]
    %v472 = vld [vmem:[%s1 + $0xa30] sm:$0xff]
    %v473 = vld [vmem:[%s1 + $0xa38] sm:$0xff]
    %v474 = vld [vmem:[%s1 + $0xa40] sm:$0xff]
    %v475 = vld [vmem:[%s1 + $0xa48] sm:$0xff]
    %v476 = vld [vmem:[%s1 + $0xa50] sm:$0xff]
    %v477 = vld [vmem:[%s1 + $0xa58] sm:$0xff]
    %v478 = vld [vmem:[%s1 + $0xa60] sm:$0xff]
    %v479 = vld [vmem:[%s1 + $0xa68] sm:$0xff]
    %v480 = vld [vmem:[%s1 + $0xa70] sm:$0xff]
    %v481 = vld [vmem:[%s1 + $0xa78] sm:$0xff]
    %v482 = vld [vmem:[%s1 + $0xa80] sm:$0xff]
    %v483 = vld [vmem:[%s1 + $0xa88] sm:$0xff]
    %v484 = vld [vmem:[%s1 + $0xa90] sm:$0xff]
    %v485 = vld [vmem:[%s1 + $0xa98] sm:$0xff]
    %v486 = vld [vmem:[%s1 + $0xaa0] sm:$0xff]
    %v487 = vld [vmem:[%s1 + $0xaa8] sm:$0xff]
    %v488 = vld [vmem:[%s1 + $0xab0] sm:$0xff]
    %v489 = vld [vmem:[%s1 + $0xab8] sm:$0xff]
    %v490 = vld [vmem:[%s1 + $0xac0] sm:$0xff]
    %v491 = vld [vmem:[%s1 + $0xac8] sm:$0xff]
    %v492 = vld [vmem:[%s1 + $0xad0] sm:$0xff]
    %v493 = vld [vmem:[%s1 + $0xad8] sm:$0xff]
    %v494 = vld [vmem:[%s1 + $0xae0] sm:$0xff]
    %v495 = vld [vmem:[%s1 + $0xae8] sm:$0xff]
    %v496 = vld [vmem:[%s1 + $0xaf0] sm:$0xff]
    %v497 = vld [vmem:[%s1 + $0xaf8] sm:$0xff]
    %v498 = vld [vmem:[%s1 + $0xb00] sm:$0xff]
    %v499 = vld [vmem:[%s1 + $0xb08] sm:$0xff]
    %v500 = vld [vmem:[%s1 + $0xb10] sm:$0xff]
    %v501 = vld [vmem:[%s1 + $0xb18] sm:$0xff]
    %v502 = vld [vmem:[%s1 + $0xb20] sm:$0xff]
    %v503 = vld [vmem:[%s1 + $0xb28] sm:$0xff]
    %v504 = vld [vmem:[%s1 + $0xb30] sm:$0xff]
    %v505 = vld [vmem:[%s1 + $0xb38] sm:$0xff]
    %v506 = vld [vmem:[%s1 + $0xb40] sm:$0xff]
    %v507 = vld [vmem:[%s1 + $0xb48] sm:$0xff]
    %v508 = vld [vmem:[%s1 + $0xb50] sm:$0xff]
    %v509 = vld [vmem:[%s1 + $0xb58] sm:$0xff]
    %v510 = vld [vmem:[%s1 + $0xb60] sm:$0xff]
    %v511 = vld [vmem:[%s1 + $0xb68] sm:$0xff]
    %v512 = vld [vmem:[%s1 + $0xb70] sm:$0xff]
    %v513 = vld [vmem:[%s1 + $0xb78] sm:$0xff]
    %v514 = vld [vmem:[%s1 + $0xb80] sm:$0xff]
    %v515 = vld [vmem:[%s1 + $0xb88] sm:$0xff]
    %v516 = vld [vmem:[%s1 + $0xb90] sm:$0xff]
    %v517 = vld [vmem:[%s1 + $0xb98] sm:$0xff]
    %v518 = vld [vmem:[%s1 + $0xba0] sm:$0xff]
    %v519 = vld [vmem:[%s1 + $0xba8] sm:$0xff]
    %v520 = vld [vmem:[%s1 + $0xbb0] sm:$0xff]
    %v521 = vld [vmem:[%s1 + $0xbb8] sm:$0xff]
    %v522 = vld [vmem:[%s1 + $0xbc0] sm:$0xff]
    %v523 = vld [vmem:[%s1 + $0xbc8] sm:$0xff]
    %v524 = vld [vmem:[%s1 + $0xbd0] sm:$0xff]
    %v525 = vld [vmem:[%s1 + $0xbd8] sm:$0xff]
    %v526 = vld [vmem:[%s1 + $0xbe0] sm:$0xff]
    %v527 = vld [vmem:[%s1 + $0xbe8] sm:$0xff]
    %v528 = vld [vmem:[%s1 + $0xbf0] sm:$0xff]
    %v529 = vld [vmem:[%s1 + $0xbf8] sm:$0xff]
    %v530 = vld [vmem:[%s1 + $0xc00] sm:$0xff]
    %v531 = vld [vmem:[%s1 + $0xc08] sm:$0xff]
    %v532 = vld [vmem:[%s1 + $0xc10] sm:$0xff]
    %v533 = vld [vmem:[%s1 + $0xc18] sm:$0xff]
    %v534 = vld [vmem:[%s1 + $0xc20] sm:$0xff]
    %v535 = vld [vmem:[%s1 + $0xc28] sm:$0xff]
    %v536 = vld [vmem:[%s1 + $0xc30] sm:$0xff]
    %v537 = vld [vmem:[%s1 + $0xc38] sm:$0xff]
    %v538 = vld [vmem:[%s1 + $0xc40] sm:$0xff]
    %v539 = vld [vmem:[%s1 + $0xc48] sm:$0xff]
    %v540 = vld [vmem:[%s1 + $0xc50] sm:$0xff]
    %v541 = vld [vmem:[%s1 + $0xc58] sm:$0xff]
    %v542 = vld [vmem:[%s1 + $0xc60] sm:$0xff]
    %v543 = vld [vmem:[%s1 + $0xc68] sm:$0xff]
    %v544 = vld [vmem:[%s1 + $0xc70] sm:$0xff]
    %v545 = vld [vmem:[%s1 + $0xc78] sm:$0xff]
    %v546 = vld [vmem:[%s1 + $0xc80] sm:$0xff]
    %v547 = vld [vmem:[%s1 + $0xc88] sm:$0xff]
    %v548 = vld [vmem:[%s1 + $0xc90] sm:$0xff]
    %v549 = vld [vmem:[%s1 + $0xc98] sm:$0xff]
    %v550 = vld [vmem:[%s1 + $0xca0] sm:$0xff]
    %v551 = vld [vmem:[%s1 + $0xca8] sm:$0xff]
    %v552 = vld [vmem:[%s1 + $0xcb0] sm:$0xff]
    %v553 = vld [vmem:[%s1 + $0xcb8] sm:$0xff]
    %v554 = vld [vmem:[%s1 + $0xcc0] sm:$0xff]
    %v555 = vld [vmem:[%s1 + $0xcc8] sm:$0xff]
    %v556 = vld [vmem:[%s1 + $0xcd0] sm:$0xff]
    %v557 = vld [vmem:[%s1 + $0xcd8] sm:$0xff]
    %v558 = vld [vmem:[%s1 + $0xce0] sm:$0xff]
    %v559 = vld [vmem:[%s1 + $0xce8] sm:$0xff]
    %v560 = vld [vmem:[%s1 + $0xcf0] sm:$0xff]
    %v561 = vld [vmem:[%s1 + $0xcf8] sm:$0xff]
    %v562 = vld [vmem:[%s1 + $0xd00] sm:$0xff]
    %v563 = vld [vmem:[%s1 + $0xd08] sm:$0xff]
    %v564 = vld [vmem:[%s1 + $0xd10] sm:$0xff]
    %v565 = vld [vmem:[%s1 + $0xd18] sm:$0xff]
    %v566 = vld [vmem:[%s1 + $0xd20] sm:$0xff]
    %v567 = vld [vmem:[%s1 + $0xd28] sm:$0xff]
    %v568 = vld [vmem:[%s1 + $0xd30] sm:$0xff]
    %v569 = vld [vmem:[%s1 + $0xd38] sm:$0xff]
    %v570 = vld [vmem:[%s1 + $0xd40] sm:$0xff]
    %v571 = vld [vmem:[%s1 + $0xd48] sm:$0xff]
    %v572 = vld [vmem:[%s1 + $0xd50] sm:$0xff]
    %v573 = vld [vmem:[%s1 + $0xd58] sm:$0xff]
    %v574 = vld [vmem:[%s1 + $0xd60] sm:$0xff]
    %v575 = vld [vmem:[%s1 + $0xd68] sm:$0xff]
    %v576 = vld [vmem:[%s1 + $0xd70] sm:$0xff]
    %v577 = vld [vmem:[%s1 + $0xd78] sm:$0xff]
    %v578 = vld [vmem:[%s1 + $0xd80] sm:$0xff]
    %v579 = vld [vmem:[%s1 + $0xd88] sm:$0xff]
    %v580 = vld [vmem:[%s1 + $0xd90] sm:$0xff]
    %v581 = vld [vmem:[%s1 + $0xd98] sm:$0xff]
    %v582 = vld [vmem:[%s1 + $0xda0] sm:$0xff]
    %v583 = vld [vmem:[%s1 + $0xda8] sm:$0xff]
    %v584 = vld [vmem:[%s1 + $0xdb0] sm:$0xff]
    %v585 = vld [vmem:[%s1 + $0xdb8] sm:$0xff]
    %v586 = vld [vmem:[%s1 + $0xdc0] sm:$0xff]
    %v587 = vld [vmem:[%s1 + $0xdc8] sm:$0xff]
    %v588 = vld [vmem:[%s1 + $0xdd0] sm:$0xff]
    %v589 = vld [vmem:[%s1 + $0xdd8] sm:$0xff]
    %v590 = vld [vmem:[%s1 + $0xde0] sm:$0xff]
    %v591 = vld [vmem:[%s1 + $0xde8] sm:$0xff]
    %v592 = vld [vmem:[%s1 + $0xdf0] sm:$0xff]
    %v593 = vld [vmem:[%s1 + $0xdf8] sm:$0xff]
    %v594 = vld [vmem:[%s1 + $0xe00] sm:$0xff]
    %v595 = vld [vmem:[%s1 + $0xe08] sm:$0xff]
    %v596 = vld [vmem:[%s1 + $0xe10] sm:$0xff]
    %v597 = vld [vmem:[%s1 + $0xe18] sm:$0xff]
    %v598 = vld [vmem:[%s1 + $0xe20] sm:$0xff]
    %v599 = vld [vmem:[%s1 + $0xe28] sm:$0xff]
    %v600 = vld [vmem:[%s1 + $0xe30] sm:$0xff]
    %v601 = vld [vmem:[%s1 + $0xe38] sm:$0xff]
    %v602 = vld [vmem:[%s1 + $0xe40] sm:$0xff]
    %v603 = vld [vmem:[%s1 + $0xe48] sm:$0xff]
    %v604 = vld [vmem:[%s1 + $0xe50] sm:$0xff]
    %v605 = vld [vmem:[%s1 + $0xe58] sm:$0xff]
    %v606 = vld [vmem:[%s1 + $0xe60] sm:$0xff]
    %v607 = vld [vmem:[%s1 + $0xe68] sm:$0xff]
    %v608 = vld [vmem:[%s1 + $0xe70] sm:$0xff]
    %v609 = vld [vmem:[%s1 + $0xe78] sm:$0xff]
    %v610 = vld [vmem:[%s1 + $0xe80] sm:$0xff]
    %v611 = vld [vmem:[%s1 + $0xe88] sm:$0xff]
    %v612 = vld [vmem:[%s1 + $0xe90] sm:$0xff]
    %v613 = vld [vmem:[%s1 + $0xe98] sm:$0xff]
    %v614 = vld [vmem:[%s1 + $0xea0] sm:$0xff]
    %v615 = vld [vmem:[%s1 + $0xea8] sm:$0xff]
    %v616 = vld [vmem:[%s1 + $0xeb0] sm:$0xff]
    %v617 = vld [vmem:[%s1 + $0xeb8] sm:$0xff]
    %v618 = vld [vmem:[%s1 + $0xec0] sm:$0xff]
    %v619 = vld [vmem:[%s1 + $0xec8] sm:$0xff]
    %v620 = vld [vmem:[%s1 + $0xed0] sm:$0xff]
    %v621 = vld [vmem:[%s1 + $0xed8] sm:$0xff]
    %v622 = vld [vmem:[%s1 + $0xee0] sm:$0xff]
    %v623 = vld [vmem:[%s1 + $0xee8] sm:$0xff]
    %v624 = vld [vmem:[%s1 + $0xef0] sm:$0xff]
    %v625 = vld [vmem:[%s1 + $0xef8] sm:$0xff]
    %v626 = vld [vmem:[%s1 + $0xf00] sm:$0xff]
    %v627 = vld [vmem:[%s1 + $0xf08] sm:$0xff]
    %v628 = vld [vmem:[%s1 + $0xf10] sm:$0xff]
    %v629 = vld [vmem:[%s1 + $0xf18] sm:$0xff]
    %v630 = vld [vmem:[%s1 + $0xf20] sm:$0xff]
    %v631 = vld [vmem:[%s1 + $0xf28] sm:$0xff]
    %v632 = vld [vmem:[%s1 + $0xf30] sm:$0xff]
    %v633 = vld [vmem:[%s1 + $0xf38] sm:$0xff]
    %v634 = vld [vmem:[%s1 + $0xf40] sm:$0xff]
    %v635 = vld [vmem:[%s1 + $0xf48] sm:$0xff]
    %v636 = vld [vmem:[%s1 + $0xf50] sm:$0xff]
    %v637 = vld [vmem:[%s1 + $0xf58] sm:$0xff]
    %v638 = vld [vmem:[%s1 + $0xf60] sm:$0xff]
    %v639 = vld [vmem:[%s1 + $0xf68] sm:$0xff]
    %v640 = vld [vmem:[%s1 + $0xf70] sm:$0xff]
    %v641 = vld [vmem:[%s1 + $0xf78] sm:$0xff]
    %v642 = vld [vmem:[%s1 + $0xf80] sm:$0xff]
    %v643 = vld [vmem:[%s1 + $0xf88] sm:$0xff]
    %v644 = vld [vmem:[%s1 + $0xf90] sm:$0xff]
    %v645 = vld [vmem:[%s1 + $0xf98] sm:$0xff]
    %v646 = vld [vmem:[%s1 + $0xfa0] sm:$0xff]
    %v647 = vld [vmem:[%s1 + $0xfa8] sm:$0xff]
    %v648 = vld [vmem:[%s1 + $0xfb0] sm:$0xff]
    %v649 = vld [vmem:[%s1 + $0xfb8] sm:$0xff]
    %v650 = vld [vmem:[%s1 + $0xfc0] sm:$0xff]
    %v651 = vld [vmem:[%s1 + $0xfc8] sm:$0xff]
    %v652 = vld [vmem:[%s1 + $0xfd0] sm:$0xff]
    %v653 = vld [vmem:[%s1 + $0xfd8] sm:$0xff]
    %v654 = vld [vmem:[%s1 + $0xfe0] sm:$0xff]
    %v655 = vld [vmem:[%s1 + $0xfe8] sm:$0xff]
    %v656 = vld [vmem:[%s1 + $0xff0] sm:$0xff]
    %v657 = vld [vmem:[%s1 + $0xff8] sm:$0xff]
    %v658 = vld [vmem:[%s1 + $0x1000] sm:$0xff]
    %v659 = vld [vmem:[%s1 + $0x1008] sm:$0xff]
    %v660 = vld [vmem:[%s1 + $0x1010] sm:$0xff]
    %v661 = vld [vmem:[%s1 + $0x1018] sm:$0xff]
    %v662 = vld [vmem:[%s1 + $0x1020] sm:$0xff]
    %v663 = vld [vmem:[%s1 + $0x1028] sm:$0xff]
    %v664 = vld [vmem:[%s1 + $0x1030] sm:$0xff]
    %v665 = vld [vmem:[%s1 + $0x1038] sm:$0xff]
    %v666 = vld [vmem:[%s1 + $0x1040] sm:$0xff]
    %v667 = vld [vmem:[%s1 + $0x1048] sm:$0xff]
    %v668 = vld [vmem:[%s1 + $0x1050] sm:$0xff]
    %v669 = vld [vmem:[%s1 + $0x1058] sm:$0xff]
    %v670 = vld [vmem:[%s1 + $0x1060] sm:$0xff]
    %v671 = vld [vmem:[%s1 + $0x1068] sm:$0xff]
    %v672 = vld [vmem:[%s1 + $0x1070] sm:$0xff]
    %v673 = vld [vmem:[%s1 + $0x1078] sm:$0xff]
    %v674 = vld [vmem:[%s1 + $0x1080] sm:$0xff]
    %v675 = vld [vmem:[%s1 + $0x1088] sm:$0xff]
    %v676 = vld [vmem:[%s1 + $0x1090] sm:$0xff]
    %v677 = vld [vmem:[%s1 + $0x1098] sm:$0xff]
    %v678 = vld [vmem:[%s1 + $0x10a0] sm:$0xff]
    %v679 = vld [vmem:[%s1 + $0x10a8] sm:$0xff]
    %v680 = vld [vmem:[%s1 + $0x10b0] sm:$0xff]
    %v681 = vld [vmem:[%s1 + $0x10b8] sm:$0xff]
    %v682 = vld [vmem:[%s1 + $0x10c0] sm:$0xff]
    %v683 = vld [vmem:[%s1 + $0x10c8] sm:$0xff]
    %v684 = vld [vmem:[%s1 + $0x10d0] sm:$0xff]
    %v685 = vld [vmem:[%s1 + $0x10d8] sm:$0xff]
    %v686 = vld [vmem:[%s1 + $0x10e0] sm:$0xff]
    %v687 = vld [vmem:[%s1 + $0x10e8] sm:$0xff]
    %v688 = vld [vmem:[%s1 + $0x10f0] sm:$0xff]
    %v689 = vld [vmem:[%s1 + $0x10f8] sm:$0xff]
    %v690 = vld [vmem:[%s1 + $0x1100] sm:$0xff]
    %v691 = vld [vmem:[%s1 + $0x1108] sm:$0xff]
    %v692 = vld [vmem:[%s1 + $0x1110] sm:$0xff]
    %v693 = vld [vmem:[%s1 + $0x1118] sm:$0xff]
    %v694 = vld [vmem:[%s1 + $0x1120] sm:$0xff]
    %v695 = vld [vmem:[%s1 + $0x1128] sm:$0xff]
    %v696 = vld [vmem:[%s1 + $0x1130] sm:$0xff]
    %v697 = vld [vmem:[%s1 + $0x1138] sm:$0xff]
    %v698 = vld [vmem:[%s1 + $0x1140] sm:$0xff]
    %v699 = vld [vmem:[%s1 + $0x1148] sm:$0xff]
    %v700 = vld [vmem:[%s1 + $0x1150] sm:$0xff]
    %v701 = vld [vmem:[%s1 + $0x1158] sm:$0xff]
    %v702 = vld [vmem:[%s1 + $0x1160] sm:$0xff]
    %v703 = vld [vmem:[%s1 + $0x1168] sm:$0xff]
    %v704 = vld [vmem:[%s1 + $0x1170] sm:$0xff]
    %v705 = vld [vmem:[%s1 + $0x1178] sm:$0xff]
    %v706 = vld [vmem:[%s1 + $0x1180] sm:$0xff]
    %v707 = vld [vmem:[%s1 + $0x1188] sm:$0xff]
    %v708 = vld [vmem:[%s1 + $0x1190] sm:$0xff]
    %v709 = vld [vmem:[%s1 + $0x1198] sm:$0xff]
    %v710 = vld [vmem:[%s1 + $0x11a0] sm:$0xff]
    %v711 = vld [vmem:[%s1 + $0x11a8] sm:$0xff]
    %v712 = vld [vmem:[%s1 + $0x11b0] sm:$0xff]
    %v713 = vld [vmem:[%s1 + $0x11b8] sm:$0xff]
    %v714 = vld [vmem:[%s1 + $0x11c0] sm:$0xff]
    %v715 = vld [vmem:[%s1 + $0x11c8] sm:$0xff]
    %v716 = vld [vmem:[%s1 + $0x11d0] sm:$0xff]
    %v717 = vld [vmem:[%s1 + $0x11d8] sm:$0xff]
    %v718 = vld [vmem:[%s1 + $0x11e0] sm:$0xff]
    %v719 = vld [vmem:[%s1 + $0x11e8] sm:$0xff]
    %v720 = vld [vmem:[%s1 + $0x11f0] sm:$0xff]
    %v721 = vld [vmem:[%s1 + $0x11f8] sm:$0xff]
    %v722 = vld [vmem:[%s1 + $0x1200] sm:$0xff]
    %v723 = vld [vmem:[%s1 + $0x1208] sm:$0xff]
    %v724 = vld [vmem:[%s1 + $0x1210] sm:$0xff]
    %v725 = vld [vmem:[%s1 + $0x1218] sm:$0xff]
    %v726 = vld [vmem:[%s1 + $0x1220] sm:$0xff]
    %v727 = vld [vmem:[%s1 + $0x1228] sm:$0xff]
    %v728 = vld [vmem:[%s1 + $0x1230] sm:$0xff]
    %v729 = vld [vmem:[%s1 + $0x1238] sm:$0xff]
    %v730 = vld [vmem:[%s1 + $0x1240] sm:$0xff]
    %v731 = vld [vmem:[%s1 + $0x1248] sm:$0xff]
    %v732 = vld [vmem:[%s1 + $0x1250] sm:$0xff]
    %v733 = vld [vmem:[%s1 + $0x1258] sm:$0xff]
    %v734 = vld [vmem:[%s1 + $0x1260] sm:$0xff]
    %v735 = vld [vmem:[%s1 + $0x1268] sm:$0xff]
    %v736 = vld [vmem:[%s1 + $0x1270] sm:$0xff]
    %v737 = vld [vmem:[%s1 + $0x1278] sm:$0xff]
    %v738 = vld [vmem:[%s1 + $0x1280] sm:$0xff]
    %v739 = vld [vmem:[%s1 + $0x1288] sm:$0xff]
    %v740 = vld [vmem:[%s1 + $0x1290] sm:$0xff]
    %v741 = vld [vmem:[%s1 + $0x1298] sm:$0xff]
    %v742 = vld [vmem:[%s1 + $0x12a0] sm:$0xff]
    %v743 = vld [vmem:[%s1 + $0x12a8] sm:$0xff]
    %v744 = vld [vmem:[%s1 + $0x12b0] sm:$0xff]
    %v745 = vld [vmem:[%s1 + $0x12b8] sm:$0xff]
    %v746 = vld [vmem:[%s1 + $0x12c0] sm:$0xff]
    %v747 = vld [vmem:[%s1 + $0x12c8] sm:$0xff]
    %v748 = vld [vmem:[%s1 + $0x12d0] sm:$0xff]
    %v749 = vld [vmem:[%s1 + $0x12d8] sm:$0xff]
    %v750 = vld [vmem:[%s1 + $0x12e0] sm:$0xff]
    %v751 = vld [vmem:[%s1 + $0x12e8] sm:$0xff]
    %v752 = vld [vmem:[%s1 + $0x12f0] sm:$0xff]
    %v753 = vld [vmem:[%s1 + $0x12f8] sm:$0xff]
    %v754 = vld [vmem:[%s1 + $0x1300] sm:$0xff]
    %v755 = vld [vmem:[%s1 + $0x1308] sm:$0xff]
    %v756 = vld [vmem:[%s1 + $0x1310] sm:$0xff]
    %v757 = vld [vmem:[%s1 + $0x1318] sm:$0xff]
    %v758 = vld [vmem:[%s1 + $0x1320] sm:$0xff]
    %v759 = vld [vmem:[%s1 + $0x1328] sm:$0xff]
    %v760 = vld [vmem:[%s1 + $0x1330] sm:$0xff]
    %v761 = vld [vmem:[%s1 + $0x1338] sm:$0xff]
    %v762 = vld [vmem:[%s1 + $0x1340] sm:$0xff]
    %v763 = vld [vmem:[%s1 + $0x1348] sm:$0xff]
    %v764 = vld [vmem:[%s1 + $0x1350] sm:$0xff]
    %v765 = vld [vmem:[%s1 + $0x1358] sm:$0xff]
    %v766 = vld [vmem:[%s1 + $0x1360] sm:$0xff]
    %v767 = vld [vmem:[%s1 + $0x1368] sm:$0xff]
    %v768 = vld [vmem:[%s1 + $0x1370] sm:$0xff]
    %v769 = vld [vmem:[%s1 + $0x1378] sm:$0xff]
    %v770 = vld [vmem:[%s1 + $0x1380] sm:$0xff]
    %v771 = vld [vmem:[%s1 + $0x1388] sm:$0xff]
    %v772 = vld [vmem:[%s1 + $0x1390] sm:$0xff]
    %v773 = vld [vmem:[%s1 + $0x1398] sm:$0xff]
    %v774 = vld [vmem:[%s1 + $0x13a0] sm:$0xff]
    %v775 = vld [vmem:[%s1 + $0x13a8] sm:$0xff]
    %v776 = vld [vmem:[%s1 + $0x13b0] sm:$0xff]
    %v777 = vld [vmem:[%s1 + $0x13b8] sm:$0xff]
    %v778 = vld [vmem:[%s1 + $0x13c0] sm:$0xff]
    %v779 = vld [vmem:[%s1 + $0x13c8] sm:$0xff]
    %v780 = vld [vmem:[%s1 + $0x13d0] sm:$0xff]
    %v781 = vld [vmem:[%s1 + $0x13d8] sm:$0xff]
    %v782 = vld [vmem:[%s1 + $0x13e0] sm:$0xff]
    %v783 = vld [vmem:[%s1 + $0x13e8] sm:$0xff]
    %v784 = vld [vmem:[%s1 + $0x13f0] sm:$0xff]
    %v785 = vld [vmem:[%s1 + $0x13f8] sm:$0xff]
    %v786 = vld [vmem:[%s1 + $0x1400] sm:$0xff]
    %v787 = vld [vmem:[%s1 + $0x1408] sm:$0xff]
    %v788 = vld [vmem:[%s1 + $0x1410] sm:$0xff]
    %v789 = vld [vmem:[%s1 + $0x1418] sm:$0xff]
    %v790 = vld [vmem:[%s1 + $0x1420] sm:$0xff]
    %v791 = vld [vmem:[%s1 + $0x1428] sm:$0xff]
    %v792 = vld [vmem:[%s1 + $0x1430] sm:$0xff]
    %v793 = vld [vmem:[%s1 + $0x1438] sm:$0xff]
    %v794 = vld [vmem:[%s1 + $0x1440] sm:$0xff]
    %v795 = vld [vmem:[%s1 + $0x1448] sm:$0xff]
    %v796 = vld [vmem:[%s1 + $0x1450] sm:$0xff]
    %v797 = vld [vmem:[%s1 + $0x1458] sm:$0xff]
    %v798 = vld [vmem:[%s1 + $0x1460] sm:$0xff]
    %v799 = vld [vmem:[%s1 + $0x1468] sm:$0xff]
    %v800 = vld [vmem:[%s1 + $0x1470] sm:$0xff]
    %v801 = vld [vmem:[%s1 + $0x1478] sm:$0xff]
    %v802 = vld [vmem:[%s1 + $0x1480] sm:$0xff]
    %v803 = vld [vmem:[%s1 + $0x1488] sm:$0xff]
    %v804 = vld [vmem:[%s1 + $0x1490] sm:$0xff]
    %v805 = vld [vmem:[%s1 + $0x1498] sm:$0xff]
    %v806 = vld [vmem:[%s1 + $0x14a0] sm:$0xff]
    %v807 = vld [vmem:[%s1 + $0x14a8] sm:$0xff]
    %v808 = vld [vmem:[%s1 + $0x14b0] sm:$0xff]
    %v809 = vld [vmem:[%s1 + $0x14b8] sm:$0xff]
    %v810 = vld [vmem:[%s1 + $0x14c0] sm:$0xff]
    %v811 = vld [vmem:[%s1 + $0x14c8] sm:$0xff]
    %v812 = vld [vmem:[%s1 + $0x14d0] sm:$0xff]
    %v813 = vld [vmem:[%s1 + $0x14d8] sm:$0xff]
    %v814 = vld [vmem:[%s1 + $0x14e0] sm:$0xff]
    %v815 = vld [vmem:[%s1 + $0x14e8] sm:$0xff]
    %v816 = vld [vmem:[%s1 + $0x14f0] sm:$0xff]
    %v817 = vld [vmem:[%s1 + $0x14f8] sm:$0xff]
    %v818 = vld [vmem:[%s1 + $0x1500] sm:$0xff]
    %v819 = vld [vmem:[%s1 + $0x1508] sm:$0xff]
    %v820 = vld [vmem:[%s1 + $0x1510] sm:$0xff]
    %v821 = vld [vmem:[%s1 + $0x1518] sm:$0xff]
    %v822 = vld [vmem:[%s1 + $0x1520] sm:$0xff]
    %v823 = vld [vmem:[%s1 + $0x1528] sm:$0xff]
    %v824 = vld [vmem:[%s1 + $0x1530] sm:$0xff]
    %v825 = vld [vmem:[%s1 + $0x1538] sm:$0xff]
    %v826 = vld [vmem:[%s1 + $0x1540] sm:$0xff]
    %v827 = vld [vmem:[%s1 + $0x1548] sm:$0xff]
    %v828 = vld [vmem:[%s1 + $0x1550] sm:$0xff]
    %v829 = vld [vmem:[%s1 + $0x1558] sm:$0xff]
    %v830 = vld [vmem:[%s1 + $0x1560] sm:$0xff]
    %v831 = vld [vmem:[%s1 + $0x1568] sm:$0xff]
    %v832 = vld [vmem:[%s1 + $0x1570] sm:$0xff]
    %v833 = vld [vmem:[%s1 + $0x1578] sm:$0xff]
    %v834 = vld [vmem:[%s1 + $0x1580] sm:$0xff]
    %v835 = vld [vmem:[%s1 + $0x1588] sm:$0xff]
    %v836 = vld [vmem:[%s1 + $0x1590] sm:$0xff]
    %v837 = vld [vmem:[%s1 + $0x1598] sm:$0xff]
    %v838 = vld [vmem:[%s1 + $0x15a0] sm:$0xff]
    %v839 = vld [vmem:[%s1 + $0x15a8] sm:$0xff]
    %v840 = vld [vmem:[%s1 + $0x15b0] sm:$0xff]
    %v841 = vld [vmem:[%s1 + $0x15b8] sm:$0xff]
    %v842 = vld [vmem:[%s1 + $0x15c0] sm:$0xff]
    %v843 = vld [vmem:[%s1 + $0x15c8] sm:$0xff]
    %v844 = vld [vmem:[%s1 + $0x15d0] sm:$0xff]
    %v845 = vld [vmem:[%s1 + $0x15d8] sm:$0xff]
    %v846 = vld [vmem:[%s1 + $0x15e0] sm:$0xff]
    %v847 = vld [vmem:[%s1 + $0x15e8] sm:$0xff]
    %v848 = vld [vmem:[%s1 + $0x15f0] sm:$0xff]
    %v849 = vld [vmem:[%s1 + $0x15f8] sm:$0xff]
    %v850 = vld [vmem:[%s1 + $0x1600] sm:$0xff]
    %v851 = vld [vmem:[%s1 + $0x1608] sm:$0xff]
    %v852 = vld [vmem:[%s1 + $0x1610] sm:$0xff]
    %v853 = vld [vmem:[%s1 + $0x1618] sm:$0xff]
    %v854 = vld [vmem:[%s1 + $0x1620] sm:$0xff]
    %v855 = vld [vmem:[%s1 + $0x1628] sm:$0xff]
    %v856 = vld [vmem:[%s1 + $0x1630] sm:$0xff]
    %v857 = vld [vmem:[%s1 + $0x1638] sm:$0xff]
    %v858 = vld [vmem:[%s1 + $0x1640] sm:$0xff]
    %v859 = vld [vmem:[%s1 + $0x1648] sm:$0xff]
    %v860 = vld [vmem:[%s1 + $0x1650] sm:$0xff]
    %v861 = vld [vmem:[%s1 + $0x1658] sm:$0xff]
    %v862 = vld [vmem:[%s1 + $0x1660] sm:$0xff]
    %v863 = vld [vmem:[%s1 + $0x1668] sm:$0xff]
    %v864 = vld [vmem:[%s1 + $0x1670] sm:$0xff]
    %v865 = vld [vmem:[%s1 + $0x1678] sm:$0xff]
    %v866 = vld [vmem:[%s1 + $0x1680] sm:$0xff]
    %v867 = vld [vmem:[%s1 + $0x1688] sm:$0xff]
    %v868 = vld [vmem:[%s1 + $0x1690] sm:$0xff]
    %v869 = vld [vmem:[%s1 + $0x1698] sm:$0xff]
    %v870 = vld [vmem:[%s1 + $0x16a0] sm:$0xff]
    %v871 = vld [vmem:[%s1 + $0x16a8] sm:$0xff]
    %v872 = vld [vmem:[%s1 + $0x16b0] sm:$0xff]
    %v873 = vld [vmem:[%s1 + $0x16b8] sm:$0xff]
    %v874 = vld [vmem:[%s1 + $0x16c0] sm:$0xff]
    %v875 = vld [vmem:[%s1 + $0x16c8] sm:$0xff]
    %v876 = vld [vmem:[%s1 + $0x16d0] sm:$0xff]
    %v877 = vld [vmem:[%s1 + $0x16d8] sm:$0xff]
    %v878 = vld [vmem:[%s1 + $0x16e0] sm:$0xff]
    %v879 = vld [vmem:[%s1 + $0x16e8] sm:$0xff]
    %v880 = vld [vmem:[%s1 + $0x16f0] sm:$0xff]
    %v881 = vld [vmem:[%s1 + $0x16f8] sm:$0xff]
    %v882 = vld [vmem:[%s1 + $0x1700] sm:$0xff]
    %v883 = vld [vmem:[%s1 + $0x1708] sm:$0xff]
    %v884 = vld [vmem:[%s1 + $0x1710] sm:$0xff]
    %v885 = vld [vmem:[%s1 + $0x1718] sm:$0xff]
    %v886 = vld [vmem:[%s1 + $0x1720] sm:$0xff]
    %v887 = vld [vmem:[%s1 + $0x1728] sm:$0xff]
    %v888 = vld [vmem:[%s1 + $0x1730] sm:$0xff]
    %v889 = vld [vmem:[%s1 + $0x1738] sm:$0xff]
    %v890 = vld [vmem:[%s1 + $0x1740] sm:$0xff]
    %v891 = vld [vmem:[%s1 + $0x1748] sm:$0xff]
    %v892 = vld [vmem:[%s1 + $0x1750] sm:$0xff]
    %v893 = vld [vmem:[%s1 + $0x1758] sm:$0xff]
    %v894 = vld [vmem:[%s1 + $0x1760] sm:$0xff]
    %v895 = vld [vmem:[%s1 + $0x1768] sm:$0xff]
    %v896 = vld [vmem:[%s1 + $0x1770] sm:$0xff]
    %v897 = vld [vmem:[%s1 + $0x1778] sm:$0xff]
    %v898 = vld [vmem:[%s1 + $0x1780] sm:$0xff]
    %v899 = vld [vmem:[%s1 + $0x1788] sm:$0xff]
    %v900 = vld [vmem:[%s1 + $0x1790] sm:$0xff]
    %v901 = vld [vmem:[%s1 + $0x1798] sm:$0xff]
    %v902 = vld [vmem:[%s1 + $0x17a0] sm:$0xff]
    %v903 = vld [vmem:[%s1 + $0x17a8] sm:$0xff]
    %v904 = vld [vmem:[%s1 + $0x17b0] sm:$0xff]
    %v905 = vld [vmem:[%s1 + $0x17b8] sm:$0xff]
    %v906 = vld [vmem:[%s1 + $0x17c0] sm:$0xff]
    %v907 = vld [vmem:[%s1 + $0x17c8] sm:$0xff]
    %v908 = vld [vmem:[%s1 + $0x17d0] sm:$0xff]
    %v909 = vld [vmem:[%s1 + $0x17d8] sm:$0xff]
    %v910 = vld [vmem:[%s1 + $0x17e0] sm:$0xff]
    %v911 = vld [vmem:[%s1 + $0x17e8] sm:$0xff]
    %v912 = vld [vmem:[%s1 + $0x17f0] sm:$0xff]
    %v913 = vld [vmem:[%s1 + $0x17f8] sm:$0xff]
    %v914 = vld [vmem:[%s1 + $0x1800] sm:$0xff]
    %v915 = vld [vmem:[%s1 + $0x1808] sm:$0xff]
    %v916 = vld [vmem:[%s1 + $0x1810] sm:$0xff]
    %v917 = vld [vmem:[%s1 + $0x1818] sm:$0xff]
    %v918 = vld [vmem:[%s1 + $0x1820] sm:$0xff]
    %v919 = vld [vmem:[%s1 + $0x1828] sm:$0xff]
    %v920 = vld [vmem:[%s1 + $0x1830] sm:$0xff]
    %v921 = vld [vmem:[%s1 + $0x1838] sm:$0xff]
    %v922 = vld [vmem:[%s1 + $0x1840] sm:$0xff]
    %v923 = vld [vmem:[%s1 + $0x1848] sm:$0xff]
    %v924 = vld [vmem:[%s1 + $0x1850] sm:$0xff]
    %v925 = vld [vmem:[%s1 + $0x1858] sm:$0xff]
    %v926 = vld [vmem:[%s1 + $0x1860] sm:$0xff]
    %v927 = vld [vmem:[%s1 + $0x1868] sm:$0xff]
    %v928 = vld [vmem:[%s1 + $0x1870] sm:$0xff]
    %v929 = vld [vmem:[%s1 + $0x1878] sm:$0xff]
    %v930 = vld [vmem:[%s1 + $0x1880] sm:$0xff]
    %v931 = vld [vmem:[%s1 + $0x1888] sm:$0xff]
    %v932 = vld [vmem:[%s1 + $0x1890] sm:$0xff]
    %v933 = vld [vmem:[%s1 + $0x1898] sm:$0xff]
    %v934 = vld [vmem:[%s1 + $0x18a0] sm:$0xff]
    %v935 = vld [vmem:[%s1 + $0x18a8] sm:$0xff]
    %v936 = vld [vmem:[%s1 + $0x18b0] sm:$0xff]
    %v937 = vld [vmem:[%s1 + $0x18b8] sm:$0xff]
    %v938 = vld [vmem:[%s1 + $0x18c0] sm:$0xff]
    %v939 = vld [vmem:[%s1 + $0x18c8] sm:$0xff]
    %v940 = vld [vmem:[%s1 + $0x18d0] sm:$0xff]
    %v941 = vld [vmem:[%s1 + $0x18d8] sm:$0xff]
    %v942 = vld [vmem:[%s1 + $0x18e0] sm:$0xff]
    %v943 = vld [vmem:[%s1 + $0x18e8] sm:$0xff]
    %v944 = vld [vmem:[%s1 + $0x18f0] sm:$0xff]
    %v945 = vld [vmem:[%s1 + $0x18f8] sm:$0xff]
    %v946 = vld [vmem:[%s1 + $0x1900] sm:$0xff]
    %v947 = vld [vmem:[%s1 + $0x1908] sm:$0xff]
    %v948 = vld [vmem:[%s1 + $0x1910] sm:$0xff]
    %v949 = vld [vmem:[%s1 + $0x1918] sm:$0xff]
    %v950 = vld [vmem:[%s1 + $0x1920] sm:$0xff]
    %v951 = vld [vmem:[%s1 + $0x1928] sm:$0xff]
    %v952 = vld [vmem:[%s1 + $0x1930] sm:$0xff]
    %v953 = vld [vmem:[%s1 + $0x1938] sm:$0xff]
    %v954 = vld [vmem:[%s1 + $0x1940] sm:$0xff]
    %v955 = vld [vmem:[%s1 + $0x1948] sm:$0xff]
    %v956 = vld [vmem:[%s1 + $0x1950] sm:$0xff]
    %v957 = vld [vmem:[%s1 + $0x1958] sm:$0xff]
    %v958 = vld [vmem:[%s1 + $0x1960] sm:$0xff]
    %v959 = vld [vmem:[%s1 + $0x1968] sm:$0xff]
    %v960 = vld [vmem:[%s1 + $0x1970] sm:$0xff]
    %v961 = vld [vmem:[%s1 + $0x1978] sm:$0xff]
    %v962 = vld [vmem:[%s1 + $0x1980] sm:$0xff]
    %v963 = vld [vmem:[%s1 + $0x1988] sm:$0xff]
    %v964 = vld [vmem:[%s1 + $0x1990] sm:$0xff]
    %v965 = vld [vmem:[%s1 + $0x1998] sm:$0xff]
    %v966 = vld [vmem:[%s1 + $0x19a0] sm:$0xff]
    %v967 = vld [vmem:[%s1 + $0x19a8] sm:$0xff]
    %v968 = vld [vmem:[%s1 + $0x19b0] sm:$0xff]
    %v969 = vld [vmem:[%s1 + $0x19b8] sm:$0xff]
    %v970 = vld [vmem:[%s1 + $0x19c0] sm:$0xff]
    %v971 = vld [vmem:[%s1 + $0x19c8] sm:$0xff]
    %v972 = vld [vmem:[%s1 + $0x19d0] sm:$0xff]
    %v973 = vld [vmem:[%s1 + $0x19d8] sm:$0xff]
    %v974 = vld [vmem:[%s1 + $0x19e0] sm:$0xff]
    %v975 = vld [vmem:[%s1 + $0x19e8] sm:$0xff]
    %v976 = vld [vmem:[%s1 + $0x19f0] sm:$0xff]
    %v977 = vld [vmem:[%s1 + $0x19f8] sm:$0xff]
    %v978 = vld [vmem:[%s1 + $0x1a00] sm:$0xff]
    %v979 = vld [vmem:[%s1 + $0x1a08] sm:$0xff]
    %v980 = vld [vmem:[%s1 + $0x1a10] sm:$0xff]
    %v981 = vld [vmem:[%s1 + $0x1a18] sm:$0xff]
    %v982 = vld [vmem:[%s1 + $0x1a20] sm:$0xff]
    %v983 = vld [vmem:[%s1 + $0x1a28] sm:$0xff]
    %v984 = vld [vmem:[%s1 + $0x1a30] sm:$0xff]
    %v985 = vld [vmem:[%s1 + $0x1a38] sm:$0xff]
    %v986 = vld [vmem:[%s1 + $0x1a40] sm:$0xff]
    %v987 = vld [vmem:[%s1 + $0x1a48] sm:$0xff]
    %v988 = vld [vmem:[%s1 + $0x1a50] sm:$0xff]
    %v989 = vld [vmem:[%s1 + $0x1a58] sm:$0xff]
    %v990 = vld [vmem:[%s1 + $0x1a60] sm:$0xff]
    %v991 = vld [vmem:[%s1 + $0x1a68] sm:$0xff]
    %v992 = vld [vmem:[%s1 + $0x1a70] sm:$0xff]
    %v993 = vld [vmem:[%s1 + $0x1a78] sm:$0xff]
    %v994 = vld [vmem:[%s1 + $0x1a80] sm:$0xff]
    %v995 = vld [vmem:[%s1 + $0x1a88] sm:$0xff]
    %v996 = vld [vmem:[%s1 + $0x1a90] sm:$0xff]
    %v997 = vld [vmem:[%s1 + $0x1a98] sm:$0xff]
    %v998 = vld [vmem:[%s1 + $0x1aa0] sm:$0xff]
    %v999 = vld [vmem:[%s1 + $0x1aa8] sm:$0xff]
    %v1000 = vld [vmem:[%s1 + $0x1ab0] sm:$0xff]
    %v1001 = vld [vmem:[%s1 + $0x1ab8] sm:$0xff]
    %v1002 = vld [vmem:[%s1 + $0x1ac0] sm:$0xff]
    %v1003 = vld [vmem:[%s1 + $0x1ac8] sm:$0xff]
    %v1004 = vld [vmem:[%s1 + $0x1ad0] sm:$0xff]
    %v1005 = vld [vmem:[%s1 + $0x1ad8] sm:$0xff]
    %v1006 = vld [vmem:[%s1 + $0x1ae0] sm:$0xff]
    %v1007 = vld [vmem:[%s1 + $0x1ae8] sm:$0xff]
    %v1008 = vld [vmem:[%s1 + $0x1af0] sm:$0xff]
    %v1009 = vld [vmem:[%s1 + $0x1af8] sm:$0xff]
    %v1010 = vld [vmem:[%s1 + $0x1b00] sm:$0xff]
    %v1011 = vld [vmem:[%s1 + $0x1b08] sm:$0xff]
    %v1012 = vld [vmem:[%s1 + $0x1b10] sm:$0xff]
    %v1013 = vld [vmem:[%s1 + $0x1b18] sm:$0xff]
    %v1014 = vld [vmem:[%s1 + $0x1b20] sm:$0xff]
    %v1015 = vld [vmem:[%s1 + $0x1b28] sm:$0xff]
    %v1016 = vld [vmem:[%s1 + $0x1b30] sm:$0xff]
    %v1017 = vld [vmem:[%s1 + $0x1b38] sm:$0xff]
    %v1018 = vld [vmem:[%s1 + $0x1b40] sm:$0xff]
    %v1019 = vld [vmem:[%s1 + $0x1b48] sm:$0xff]
    %v1020 = vld [vmem:[%s1 + $0x1b50] sm:$0xff]
    %v1021 = vld [vmem:[%s1 + $0x1b58] sm:$0xff]
    %v1022 = vld [vmem:[%s1 + $0x1b60] sm:$0xff]
    %v1023 = vld [vmem:[%s1 + $0x1b68] sm:$0xff]
    %v1024 = vld [vmem:[%s1 + $0x1b70] sm:$0xff]
    %v1025 = vld [vmem:[%s1 + $0x1b78] sm:$0xff]
    %v1026 = vld [vmem:[%s1 + $0x1b80] sm:$0xff]
    %v1027 = vld [vmem:[%s1 + $0x1b88] sm:$0xff]
    %v1028 = vld [vmem:[%s1 + $0x1b90] sm:$0xff]
    %v1029 = vld [vmem:[%s1 + $0x1b98] sm:$0xff]
    %v1030 = vld [vmem:[%s1 + $0x1ba0] sm:$0xff]
    %v1031 = vld [vmem:[%s1 + $0x1ba8] sm:$0xff]
    %v1032 = vld [vmem:[%s1 + $0x1bb0] sm:$0xff]
    %v1033 = vld [vmem:[%s1 + $0x1bb8] sm:$0xff]
    %v1034 = vld [vmem:[%s1 + $0x1bc0] sm:$0xff]
    %v1035 = vld [vmem:[%s1 + $0x1bc8] sm:$0xff]
    %v1036 = vld [vmem:[%s1 + $0x1bd0] sm:$0xff]
    %v1037 = vld [vmem:[%s1 + $0x1bd8] sm:$0xff]
    %v1038 = vld [vmem:[%s1 + $0x1be0] sm:$0xff]
    %v1039 = vld [vmem:[%s1 + $0x1be8] sm:$0xff]
    %v1040 = vld [vmem:[%s1 + $0x1bf0] sm:$0xff]
    %v1041 = vld [vmem:[%s1 + $0x1bf8] sm:$0xff]
    %v1042 = vld [vmem:[%s1 + $0x1c00] sm:$0xff]
    %v1043 = vld [vmem:[%s1 + $0x1c08] sm:$0xff]
    %v1044 = vld [vmem:[%s1 + $0x1c10] sm:$0xff]
    %v1045 = vld [vmem:[%s1 + $0x1c18] sm:$0xff]
    %v1046 = vld [vmem:[%s1 + $0x1c20] sm:$0xff]
    %v1047 = vld [vmem:[%s1 + $0x1c28] sm:$0xff]
    %v1048 = vld [vmem:[%s1 + $0x1c30] sm:$0xff]
    %v1049 = vld [vmem:[%s1 + $0x1c38] sm:$0xff]
    %v1050 = vld [vmem:[%s1 + $0x1c40] sm:$0xff]
    %v1051 = vld [vmem:[%s1 + $0x1c48] sm:$0xff]
    %v1052 = vld [vmem:[%s1 + $0x1c50] sm:$0xff]
    %v1053 = vld [vmem:[%s1 + $0x1c58] sm:$0xff]
    %v1054 = vld [vmem:[%s1 + $0x1c60] sm:$0xff]
    %v1055 = vld [vmem:[%s1 + $0x1c68] sm:$0xff]
    %v1056 = vld [vmem:[%s1 + $0x1c70] sm:$0xff]
    %v1057 = vld [vmem:[%s1 + $0x1c78] sm:$0xff]
    %v1058 = vld [vmem:[%s1 + $0x1c80] sm:$0xff]
    %v1059 = vld [vmem:[%s1 + $0x1c88] sm:$0xff]
    %v1060 = vld [vmem:[%s1 + $0x1c90] sm:$0xff]
    %v1061 = vld [vmem:[%s1 + $0x1c98] sm:$0xff]
    %v1062 = vld [vmem:[%s1 + $0x1ca0] sm:$0xff]
    %v1063 = vld [vmem:[%s1 + $0x1ca8] sm:$0xff]
    %v1064 = vld [vmem:[%s1 + $0x1cb0] sm:$0xff]
    %v1065 = vld [vmem:[%s1 + $0x1cb8] sm:$0xff]
    %v1066 = vld [vmem:[%s1 + $0x1cc0] sm:$0xff]
    %v1067 = vld [vmem:[%s1 + $0x1cc8] sm:$0xff]
    %v1068 = vld [vmem:[%s1 + $0x1cd0] sm:$0xff]
    %v1069 = vld [vmem:[%s1 + $0x1cd8] sm:$0xff]
    %v1070 = vld [vmem:[%s1 + $0x1ce0] sm:$0xff]
    %v1071 = vld [vmem:[%s1 + $0x1ce8] sm:$0xff]
    %v1072 = vld [vmem:[%s1 + $0x1cf0] sm:$0xff]
    %v1073 = vld [vmem:[%s1 + $0x1cf8] sm:$0xff]
    %v1074 = vld [vmem:[%s1 + $0x1d00] sm:$0xff]
    %v1075 = vld [vmem:[%s1 + $0x1d08] sm:$0xff]
    %v1076 = vld [vmem:[%s1 + $0x1d10] sm:$0xff]
    %v1077 = vld [vmem:[%s1 + $0x1d18] sm:$0xff]
    %v1078 = vld [vmem:[%s1 + $0x1d20] sm:$0xff]
    %v1079 = vld [vmem:[%s1 + $0x1d28] sm:$0xff]
    %v1080 = vld [vmem:[%s1 + $0x1d30] sm:$0xff]
    %v1081 = vld [vmem:[%s1 + $0x1d38] sm:$0xff]
    %v1082 = vld [vmem:[%s1 + $0x1d40] sm:$0xff]
    %v1083 = vld [vmem:[%s1 + $0x1d48] sm:$0xff]
    %v1084 = vld [vmem:[%s1 + $0x1d50] sm:$0xff]
    %v1085 = vld [vmem:[%s1 + $0x1d58] sm:$0xff]
    %v1086 = vld [vmem:[%s1 + $0x1d60] sm:$0xff]
    %v1087 = vld [vmem:[%s1 + $0x1d68] sm:$0xff]
    %v1088 = vld [vmem:[%s1 + $0x1d70] sm:$0xff]
    %v1089 = vld [vmem:[%s1 + $0x1d78] sm:$0xff]
    %v1090 = vld [vmem:[%s1 + $0x1d80] sm:$0xff]
    %v1091 = vld [vmem:[%s1 + $0x1d88] sm:$0xff]
    %v1092 = vld [vmem:[%s1 + $0x1d90] sm:$0xff]
    %v1093 = vld [vmem:[%s1 + $0x1d98] sm:$0xff]
    %v1094 = vld [vmem:[%s1 + $0x1da0] sm:$0xff]
    %v1095 = vld [vmem:[%s1 + $0x1da8] sm:$0xff]
    %v1096 = vld [vmem:[%s1 + $0x1db0] sm:$0xff]
    %v1097 = vld [vmem:[%s1 + $0x1db8] sm:$0xff]
    %v1098 = vld [vmem:[%s1 + $0x1dc0] sm:$0xff]
    %v1099 = vld [vmem:[%s1 + $0x1dc8] sm:$0xff]
    %v1100 = vld [vmem:[%s1 + $0x1dd0] sm:$0xff]
    %v1101 = vld [vmem:[%s1 + $0x1dd8] sm:$0xff]
    %v1102 = vld [vmem:[%s1 + $0x1de0] sm:$0xff]
    %v1103 = vld [vmem:[%s1 + $0x1de8] sm:$0xff]
    %v1104 = vld [vmem:[%s1 + $0x1df0] sm:$0xff]
    %v1105 = vld [vmem:[%s1 + $0x1df8] sm:$0xff]
    %v1106 = vld [vmem:[%s1 + $0x1e00] sm:$0xff]
    %v1107 = vld [vmem:[%s1 + $0x1e08] sm:$0xff]
    %v1108 = vld [vmem:[%s1 + $0x1e10] sm:$0xff]
    %v1109 = vld [vmem:[%s1 + $0x1e18] sm:$0xff]
    %v1110 = vld [vmem:[%s1 + $0x1e20] sm:$0xff]
    %v1111 = vld [vmem:[%s1 + $0x1e28] sm:$0xff]
    %v1112 = vld [vmem:[%s1 + $0x1e30] sm:$0xff]
    %v1113 = vld [vmem:[%s1 + $0x1e38] sm:$0xff]
    %v1114 = vld [vmem:[%s1 + $0x1e40] sm:$0xff]
    %v1115 = vld [vmem:[%s1 + $0x1e48] sm:$0xff]
    %v1116 = vld [vmem:[%s1 + $0x1e50] sm:$0xff]
    %v1117 = vld [vmem:[%s1 + $0x1e58] sm:$0xff]
    %v1118 = vld [vmem:[%s1 + $0x1e60] sm:$0xff]
    %v1119 = vld [vmem:[%s1 + $0x1e68] sm:$0xff]
    %v1120 = vld [vmem:[%s1 + $0x1e70] sm:$0xff]
    %v1121 = vld [vmem:[%s1 + $0x1e78] sm:$0xff]
    %v1122 = vld [vmem:[%s1 + $0x1e80] sm:$0xff]
    %v1123 = vld [vmem:[%s1 + $0x1e88] sm:$0xff]
    %v1124 = vld [vmem:[%s1 + $0x1e90] sm:$0xff]
    %v1125 = vld [vmem:[%s1 + $0x1e98] sm:$0xff]
    %v1126 = vld [vmem:[%s1 + $0x1ea0] sm:$0xff]
    %v1127 = vld [vmem:[%s1 + $0x1ea8] sm:$0xff]
    %v1128 = vld [vmem:[%s1 + $0x1eb0] sm:$0xff]
    %v1129 = vld [vmem:[%s1 + $0x1eb8] sm:$0xff]
    %v1130 = vld [vmem:[%s1 + $0x1ec0] sm:$0xff]
    %v1131 = vld [vmem:[%s1 + $0x1ec8] sm:$0xff]
    %v1132 = vld [vmem:[%s1 + $0x1ed0] sm:$0xff]
    %v1133 = vld [vmem:[%s1 + $0x1ed8] sm:$0xff]
    %v1134 = vld [vmem:[%s1 + $0x1ee0] sm:$0xff]
    %v1135 = vld [vmem:[%s1 + $0x1ee8] sm:$0xff]
    %v1136 = vld [vmem:[%s1 + $0x1ef0] sm:$0xff]
    %v1137 = vld [vmem:[%s1 + $0x1ef8] sm:$0xff]
    %v1138 = vld [vmem:[%s1 + $0x1f00] sm:$0xff]
    %v1139 = vld [vmem:[%s1 + $0x1f08] sm:$0xff]
    %v1140 = vld [vmem:[%s1 + $0x1f10] sm:$0xff]
    %v1141 = vld [vmem:[%s1 + $0x1f18] sm:$0xff]
    %v1142 = vld [vmem:[%s1 + $0x1f20] sm:$0xff]
    %v1143 = vld [vmem:[%s1 + $0x1f28] sm:$0xff]
    %v1144 = vld [vmem:[%s1 + $0x1f30] sm:$0xff]
    %v1145 = vld [vmem:[%s1 + $0x1f38] sm:$0xff]
    %v1146 = vld [vmem:[%s1 + $0x1f40] sm:$0xff]
    %v1147 = vld [vmem:[%s1 + $0x1f48] sm:$0xff]
    %v1148 = vld [vmem:[%s1 + $0x1f50] sm:$0xff]
    %v1149 = vld [vmem:[%s1 + $0x1f58] sm:$0xff]
    %v1150 = vld [vmem:[%s1 + $0x1f60] sm:$0xff]
    %v1151 = vld [vmem:[%s1 + $0x1f68] sm:$0xff]
    %v1152 = vld [vmem:[%s1 + $0x1f70] sm:$0xff]
    %v1153 = vld [vmem:[%s1 + $0x1f78] sm:$0xff]
    %v1154 = vld [vmem:[%s1 + $0x1f80] sm:$0xff]
    %v1155 = vld [vmem:[%s1 + $0x1f88] sm:$0xff]
    %v1156 = vld [vmem:[%s1 + $0x1f90] sm:$0xff]
    %v1157 = vld [vmem:[%s1 + $0x1f98] sm:$0xff]
    %v1158 = vld [vmem:[%s1 + $0x1fa0] sm:$0xff]
    %v1159 = vld [vmem:[%s1 + $0x1fa8] sm:$0xff]
    %v1160 = vld [vmem:[%s1 + $0x1fb0] sm:$0xff]
    %v1161 = vld [vmem:[%s1 + $0x1fb8] sm:$0xff]
    %v1162 = vld [vmem:[%s1 + $0x1fc0] sm:$0xff]
    %v1163 = vld [vmem:[%s1 + $0x1fc8] sm:$0xff]
    %v1164 = vld [vmem:[%s1 + $0x1fd0] sm:$0xff]
    %v1165 = vld [vmem:[%s1 + $0x1fd8] sm:$0xff]
    %v1166 = vld [vmem:[%s1 + $0x1fe0] sm:$0xff]
    %v1167 = vld [vmem:[%s1 + $0x1fe8] sm:$0xff]
    %v1168 = vld [vmem:[%s1 + $0x1ff0] sm:$0xff]
    %v1169 = vld [vmem:[%s1 + $0x1ff8] sm:$0xff]
    %v1170 = vld [vmem:[%s1 + $0x2000] sm:$0xff]
    %v1171 = vld [vmem:[%s1 + $0x2008] sm:$0xff]
    %v1172 = vld [vmem:[%s1 + $0x2010] sm:$0xff]
    %v1173 = vld [vmem:[%s1 + $0x2018] sm:$0xff]
    %v1174 = vld [vmem:[%s1 + $0x2020] sm:$0xff]
    %v1175 = vld [vmem:[%s1 + $0x2028] sm:$0xff]
    %v1176 = vld [vmem:[%s1 + $0x2030] sm:$0xff]
    %v1177 = vld [vmem:[%s1 + $0x2038] sm:$0xff]
    %v1178 = vld [vmem:[%s1 + $0x2040] sm:$0xff]
    %v1179 = vld [vmem:[%s1 + $0x2048] sm:$0xff]
    %v1180 = vld [vmem:[%s1 + $0x2050] sm:$0xff]
    %v1181 = vld [vmem:[%s1 + $0x2058] sm:$0xff]
    %v1182 = vld [vmem:[%s1 + $0x2060] sm:$0xff]
    %v1183 = vld [vmem:[%s1 + $0x2068] sm:$0xff]
    %v1184 = vld [vmem:[%s1 + $0x2070] sm:$0xff]
    %v1185 = vld [vmem:[%s1 + $0x2078] sm:$0xff]
    %v1186 = vld [vmem:[%s1 + $0x2080] sm:$0xff]
    %v1187 = vld [vmem:[%s1 + $0x2088] sm:$0xff]
    %v1188 = vld [vmem:[%s1 + $0x2090] sm:$0xff]
    %v1189 = vld [vmem:[%s1 + $0x2098] sm:$0xff]
    %v1190 = vld [vmem:[%s1 + $0x20a0] sm:$0xff]
    %v1191 = vld [vmem:[%s1 + $0x20a8] sm:$0xff]
    %v1192 = vld [vmem:[%s1 + $0x20b0] sm:$0xff]
    %v1193 = vld [vmem:[%s1 + $0x20b8] sm:$0xff]
    %v1194 = vld [vmem:[%s1 + $0x20c0] sm:$0xff]
    %v1195 = vld [vmem:[%s1 + $0x20c8] sm:$0xff]
    %v1196 = vld [vmem:[%s1 + $0x20d0] sm:$0xff]
    %v1197 = vld [vmem:[%s1 + $0x20d8] sm:$0xff]
    %v1198 = vld [vmem:[%s1 + $0x20e0] sm:$0xff]
    %v1199 = vld [vmem:[%s1 + $0x20e8] sm:$0xff]
    %v1200 = vld [vmem:[%s1 + $0x20f0] sm:$0xff]
    %v1201 = vld [vmem:[%s1 + $0x20f8] sm:$0xff]
    %v1202 = vld [vmem:[%s1 + $0x2100] sm:$0xff]
    %v1203 = vld [vmem:[%s1 + $0x2108] sm:$0xff]
    %v1204 = vld [vmem:[%s1 + $0x2110] sm:$0xff]
    %v1205 = vld [vmem:[%s1 + $0x2118] sm:$0xff]
    %v1206 = vld [vmem:[%s1 + $0x2120] sm:$0xff]
    %v1207 = vld [vmem:[%s1 + $0x2128] sm:$0xff]
    %v1208 = vld [vmem:[%s1 + $0x2130] sm:$0xff]
    %v1209 = vld [vmem:[%s1 + $0x2138] sm:$0xff]
    %v1210 = vld [vmem:[%s1 + $0x2140] sm:$0xff]
    %v1211 = vld [vmem:[%s1 + $0x2148] sm:$0xff]
    %v1212 = vld [vmem:[%s1 + $0x2150] sm:$0xff]
    %v1213 = vld [vmem:[%s1 + $0x2158] sm:$0xff]
    %v1214 = vld [vmem:[%s1 + $0x2160] sm:$0xff]
    %v1215 = vld [vmem:[%s1 + $0x2168] sm:$0xff]
    %v1216 = vld [vmem:[%s1 + $0x2170] sm:$0xff]
    %v1217 = vld [vmem:[%s1 + $0x2178] sm:$0xff]
    %v1218 = vld [vmem:[%s1 + $0x2180] sm:$0xff]
    %v1219 = vld [vmem:[%s1 + $0x2188] sm:$0xff]
    %v1220 = vld [vmem:[%s1 + $0x2190] sm:$0xff]
    %v1221 = vld [vmem:[%s1 + $0x2198] sm:$0xff]
    %v1222 = vld [vmem:[%s1 + $0x21a0] sm:$0xff]
    %v1223 = vld [vmem:[%s1 + $0x21a8] sm:$0xff]
    %v1224 = vld [vmem:[%s1 + $0x21b0] sm:$0xff]
    %v1225 = vld [vmem:[%s1 + $0x21b8] sm:$0xff]
    %v1226 = vld [vmem:[%s1 + $0x21c0] sm:$0xff]
    %v1227 = vld [vmem:[%s1 + $0x21c8] sm:$0xff]
    %v1228 = vld [vmem:[%s1 + $0x21d0] sm:$0xff]
    %v1229 = vld [vmem:[%s1 + $0x21d8] sm:$0xff]
    %v1230 = vld [vmem:[%s1 + $0x21e0] sm:$0xff]
    %v1231 = vld [vmem:[%s1 + $0x21e8] sm:$0xff]
    %v1232 = vld [vmem:[%s1 + $0x21f0] sm:$0xff]
    %v1233 = vld [vmem:[%s1 + $0x21f8] sm:$0xff]
    %v1234 = vld [vmem:[%s1 + $0x2200] sm:$0xff]
    %v1235 = vld [vmem:[%s1 + $0x2208] sm:$0xff]
    %v1236 = vld [vmem:[%s1 + $0x2210] sm:$0xff]
    %v1237 = vld [vmem:[%s1 + $0x2218] sm:$0xff]
    %v1238 = vld [vmem:[%s1 + $0x2220] sm:$0xff]
    %v1239 = vld [vmem:[%s1 + $0x2228] sm:$0xff]
    %v1240 = vld [vmem:[%s1 + $0x2230] sm:$0xff]
    %v1241 = vld [vmem:[%s1 + $0x2238] sm:$0xff]
    %v1242 = vld [vmem:[%s1 + $0x2240] sm:$0xff]
    %v1243 = vld [vmem:[%s1 + $0x2248] sm:$0xff]
    %v1244 = vld [vmem:[%s1 + $0x2250] sm:$0xff]
    %v1245 = vld [vmem:[%s1 + $0x2258] sm:$0xff]
    %v1246 = vld [vmem:[%s1 + $0x2260] sm:$0xff]
    %v1247 = vld [vmem:[%s1 + $0x2268] sm:$0xff]
    %v1248 = vld [vmem:[%s1 + $0x2270] sm:$0xff]
    %v1249 = vld [vmem:[%s1 + $0x2278] sm:$0xff]
    %v1250 = vld [vmem:[%s1 + $0x2280] sm:$0xff]
    %v1251 = vld [vmem:[%s1 + $0x2288] sm:$0xff]
    %v1252 = vld [vmem:[%s1 + $0x2290] sm:$0xff]
    %v1253 = vld [vmem:[%s1 + $0x2298] sm:$0xff]
    %v1254 = vld [vmem:[%s1 + $0x22a0] sm:$0xff]
    %v1255 = vld [vmem:[%s1 + $0x22a8] sm:$0xff]
    %v1256 = vld [vmem:[%s1 + $0x22b0] sm:$0xff]
    %v1257 = vld [vmem:[%s1 + $0x22b8] sm:$0xff]
    %v1258 = vld [vmem:[%s1 + $0x22c0] sm:$0xff]
    %v1259 = vld [vmem:[%s1 + $0x22c8] sm:$0xff]
    %v1260 = vld [vmem:[%s1 + $0x22d0] sm:$0xff]
    %v1261 = vld [vmem:[%s1 + $0x22d8] sm:$0xff]
    %v1262 = vld [vmem:[%s1 + $0x22e0] sm:$0xff]
    %v1263 = vld [vmem:[%s1 + $0x22e8] sm:$0xff]
    %v1264 = vld [vmem:[%s1 + $0x22f0] sm:$0xff]
    %v1265 = vld [vmem:[%s1 + $0x22f8] sm:$0xff]
    %v1266 = vld [vmem:[%s1 + $0x2300] sm:$0xff]
    %v1267 = vld [vmem:[%s1 + $0x2308] sm:$0xff]
    %v1268 = vld [vmem:[%s1 + $0x2310] sm:$0xff]
    %v1269 = vld [vmem:[%s1 + $0x2318] sm:$0xff]
    %v1270 = vld [vmem:[%s1 + $0x2320] sm:$0xff]
    %v1271 = vld [vmem:[%s1 + $0x2328] sm:$0xff]
    %v1272 = vld [vmem:[%s1 + $0x2330] sm:$0xff]
    %v1273 = vld [vmem:[%s1 + $0x2338] sm:$0xff]
    %v1274 = vld [vmem:[%s1 + $0x2340] sm:$0xff]
    %v1275 = vld [vmem:[%s1 + $0x2348] sm:$0xff]
    %v1276 = vld [vmem:[%s1 + $0x2350] sm:$0xff]
    %v1277 = vld [vmem:[%s1 + $0x2358] sm:$0xff]
    %v1278 = vld [vmem:[%s1 + $0x2360] sm:$0xff]
    %v1279 = vld [vmem:[%s1 + $0x2368] sm:$0xff]
    %v1280 = vld [vmem:[%s1 + $0x2370] sm:$0xff]
    %v1281 = vld [vmem:[%s1 + $0x2378] sm:$0xff]
    %v1282 = vld [vmem:[%s1 + $0x2380] sm:$0xff]
    %v1283 = vld [vmem:[%s1 + $0x2388] sm:$0xff]
    %v1284 = vld [vmem:[%s1 + $0x2390] sm:$0xff]
    %v1285 = vld [vmem:[%s1 + $0x2398] sm:$0xff]
    %v1286 = vld [vmem:[%s1 + $0x23a0] sm:$0xff]
    %v1287 = vld [vmem:[%s1 + $0x23a8] sm:$0xff]
    %v1288 = vld [vmem:[%s1 + $0x23b0] sm:$0xff]
    %v1289 = vld [vmem:[%s1 + $0x23b8] sm:$0xff]
    %v1290 = vld [vmem:[%s1 + $0x23c0] sm:$0xff]
    %v1291 = vld [vmem:[%s1 + $0x23c8] sm:$0xff]
    %v1292 = vld [vmem:[%s1 + $0x23d0] sm:$0xff]
    %v1293 = vld [vmem:[%s1 + $0x23d8] sm:$0xff]
    %v1294 = vld [vmem:[%s1 + $0x23e0] sm:$0xff]
    %v1295 = vld [vmem:[%s1 + $0x23e8] sm:$0xff]
    %v1296 = vld [vmem:[%s1 + $0x23f0] sm:$0xff]
    %v1297 = vld [vmem:[%s1 + $0x23f8] sm:$0xff]
    %v1298 = vld [vmem:[%s1 + $0x2400] sm:$0xff]
    %v1299 = vld [vmem:[%s1 + $0x2408] sm:$0xff]
    %v1300 = vld [vmem:[%s1 + $0x2410] sm:$0xff]
    %v1301 = vld [vmem:[%s1 + $0x2418] sm:$0xff]
    %v1302 = vld [vmem:[%s1 + $0x2420] sm:$0xff]
    %v1303 = vld [vmem:[%s1 + $0x2428] sm:$0xff]
    %v1304 = vld [vmem:[%s1 + $0x2430] sm:$0xff]
    %v1305 = vld [vmem:[%s1 + $0x2438] sm:$0xff]
    %v1306 = vld [vmem:[%s1 + $0x2440] sm:$0xff]
    %v1307 = vld [vmem:[%s1 + $0x2448] sm:$0xff]
    %v1308 = vld [vmem:[%s1 + $0x2450] sm:$0xff]
    %v1309 = vld [vmem:[%s1 + $0x2458] sm:$0xff]
    %v1310 = vld [vmem:[%s1 + $0x2460] sm:$0xff]
    %v1311 = vld [vmem:[%s1 + $0x2468] sm:$0xff]
    %v1312 = vld [vmem:[%s1 + $0x2470] sm:$0xff]
    %v1313 = vld [vmem:[%s1 + $0x2478] sm:$0xff]
    %v1314 = vld [vmem:[%s1 + $0x2480] sm:$0xff]
    %v1315 = vld [vmem:[%s1 + $0x2488] sm:$0xff]
    %v1316 = vld [vmem:[%s1 + $0x2490] sm:$0xff]
    %v1317 = vld [vmem:[%s1 + $0x2498] sm:$0xff]
    %v1318 = vld [vmem:[%s1 + $0x24a0] sm:$0xff]
    %v1319 = vld [vmem:[%s1 + $0x24a8] sm:$0xff]
    %v1320 = vld [vmem:[%s1 + $0x24b0] sm:$0xff]
    %v1321 = vld [vmem:[%s1 + $0x24b8] sm:$0xff]
    %v1322 = vld [vmem:[%s1 + $0x24c0] sm:$0xff]
    %v1323 = vld [vmem:[%s1 + $0x24c8] sm:$0xff]
    %v1324 = vld [vmem:[%s1 + $0x24d0] sm:$0xff]
    %v1325 = vld [vmem:[%s1 + $0x24d8] sm:$0xff]
    %v1326 = vld [vmem:[%s1 + $0x24e0] sm:$0xff]
    %v1327 = vld [vmem:[%s1 + $0x24e8] sm:$0xff]
    %v1328 = vld [vmem:[%s1 + $0x24f0] sm:$0xff]
    %v1329 = vld [vmem:[%s1 + $0x24f8] sm:$0xff]
    %v1330 = vld [vmem:[%s1 + $0x2500] sm:$0xff]
    %v1331 = vld [vmem:[%s1 + $0x2508] sm:$0xff]
    %v1332 = vld [vmem:[%s1 + $0x2510] sm:$0xff]
    %v1333 = vld [vmem:[%s1 + $0x2518] sm:$0xff]
    %v1334 = vld [vmem:[%s1 + $0x2520] sm:$0xff]
    %v1335 = vld [vmem:[%s1 + $0x2528] sm:$0xff]
    %v1336 = vld [vmem:[%s1 + $0x2530] sm:$0xff]
    %v1337 = vld [vmem:[%s1 + $0x2538] sm:$0xff]
    %v1338 = vld [vmem:[%s1 + $0x2540] sm:$0xff]
    %v1339 = vld [vmem:[%s1 + $0x2548] sm:$0xff]
    %v1340 = vld [vmem:[%s1 + $0x2550] sm:$0xff]
    %v1341 = vld [vmem:[%s1 + $0x2558] sm:$0xff]
    %v1342 = vld [vmem:[%s1 + $0x2560] sm:$0xff]
    %v1343 = vld [vmem:[%s1 + $0x2568] sm:$0xff]
    %v1344 = vld [vmem:[%s1 + $0x2570] sm:$0xff]
    %v1345 = vld [vmem:[%s1 + $0x2578] sm:$0xff]
    %v1346 = vld [vmem:[%s1 + $0x2580] sm:$0xff]
    %v1347 = vld [vmem:[%s1 + $0x2588] sm:$0xff]
    %v1348 = vld [vmem:[%s1 + $0x2590] sm:$0xff]
    %v1349 = vld [vmem:[%s1 + $0x2598] sm:$0xff]
    %v1350 = vld [vmem:[%s1 + $0x25a0] sm:$0xff]
    %v1351 = vld [vmem:[%s1 + $0x25a8] sm:$0xff]
    %v1352 = vld [vmem:[%s1 + $0x25b0] sm:$0xff]
    %v1353 = vld [vmem:[%s1 + $0x25b8] sm:$0xff]
    %v1354 = vld [vmem:[%s1 + $0x25c0] sm:$0xff]
    %v1355 = vld [vmem:[%s1 + $0x25c8] sm:$0xff]
    %v1356 = vld [vmem:[%s1 + $0x25d0] sm:$0xff]
    %v1357 = vld [vmem:[%s1 + $0x25d8] sm:$0xff]
    %v1358 = vld [vmem:[%s1 + $0x25e0] sm:$0xff]
    %v1359 = vld [vmem:[%s1 + $0x25e8] sm:$0xff]
    %v1360 = vld [vmem:[%s1 + $0x25f0] sm:$0xff]
    %v1361 = vld [vmem:[%s1 + $0x25f8] sm:$0xff]
    %v1362 = vld [vmem:[%s1 + $0x2600] sm:$0xff]
    %v1363 = vld [vmem:[%s1 + $0x2608] sm:$0xff]
    %v1364 = vld [vmem:[%s1 + $0x2610] sm:$0xff]
    %v1365 = vld [vmem:[%s1 + $0x2618] sm:$0xff]
    %v1366 = vld [vmem:[%s1 + $0x2620] sm:$0xff]
    %v1367 = vld [vmem:[%s1 + $0x2628] sm:$0xff]
    %v1368 = vld [vmem:[%s1 + $0x2630] sm:$0xff]
    %v1369 = vld [vmem:[%s1 + $0x2638] sm:$0xff]
    %v1370 = vld [vmem:[%s1 + $0x2640] sm:$0xff]
    %v1371 = vld [vmem:[%s1 + $0x2648] sm:$0xff]
    %v1372 = vld [vmem:[%s1 + $0x2650] sm:$0xff]
    %v1373 = vld [vmem:[%s1 + $0x2658] sm:$0xff]
    %v1374 = vld [vmem:[%s1 + $0x2660] sm:$0xff]
    %v1375 = vld [vmem:[%s1 + $0x2668] sm:$0xff]
    %v1376 = vld [vmem:[%s1 + $0x2670] sm:$0xff]
    %v1377 = vld [vmem:[%s1 + $0x2678] sm:$0xff]
    %v1378 = vld [vmem:[%s1 + $0x2680] sm:$0xff]
    %v1379 = vld [vmem:[%s1 + $0x2688] sm:$0xff]
    %v1380 = vld [vmem:[%s1 + $0x2690] sm:$0xff]
    %v1381 = vld [vmem:[%s1 + $0x2698] sm:$0xff]
    %v1382 = vld [vmem:[%s1 + $0x26a0] sm:$0xff]
    %v1383 = vld [vmem:[%s1 + $0x26a8] sm:$0xff]
    %v1384 = vld [vmem:[%s1 + $0x26b0] sm:$0xff]
    %v1385 = vld [vmem:[%s1 + $0x26b8] sm:$0xff]
    %v1386 = vld [vmem:[%s1 + $0x26c0] sm:$0xff]
    %v1387 = vld [vmem:[%s1 + $0x26c8] sm:$0xff]
    %v1388 = vld [vmem:[%s1 + $0x26d0] sm:$0xff]
    %v1389 = vld [vmem:[%s1 + $0x26d8] sm:$0xff]
    %v1390 = vld [vmem:[%s1 + $0x26e0] sm:$0xff]
    %v1391 = vld [vmem:[%s1 + $0x26e8] sm:$0xff]
    %v1392 = vld [vmem:[%s1 + $0x26f0] sm:$0xff]
    %v1393 = vld [vmem:[%s1 + $0x26f8] sm:$0xff]
    %v1394 = vld [vmem:[%s1 + $0x2700] sm:$0xff]
    %v1395 = vld [vmem:[%s1 + $0x2708] sm:$0xff]
    %v1396 = vld [vmem:[%s1 + $0x2710] sm:$0xff]
    %v1397 = vld [vmem:[%s1 + $0x2718] sm:$0xff]
    %v1398 = vld [vmem:[%s1 + $0x2720] sm:$0xff]
    %v1399 = vld [vmem:[%s1 + $0x2728] sm:$0xff]
    %v1400 = vld [vmem:[%s1 + $0x2730] sm:$0xff]
    %v1401 = vld [vmem:[%s1 + $0x2738] sm:$0xff]
    %v1402 = vld [vmem:[%s1 + $0x2740] sm:$0xff]
    %v1403 = vld [vmem:[%s1 + $0x2748] sm:$0xff]
    %v1404 = vld [vmem:[%s1 + $0x2750] sm:$0xff]
    %v1405 = vld [vmem:[%s1 + $0x2758] sm:$0xff]
    %v1406 = vld [vmem:[%s1 + $0x2760] sm:$0xff]
    %v1407 = vld [vmem:[%s1 + $0x2768] sm:$0xff]
    %v1408 = vld [vmem:[%s1 + $0x2770] sm:$0xff]
    %v1409 = vld [vmem:[%s1 + $0x2778] sm:$0xff]
    %v1410 = vld [vmem:[%s1 + $0x2780] sm:$0xff]
    %v1411 = vld [vmem:[%s1 + $0x2788] sm:$0xff]
    %v1412 = vld [vmem:[%s1 + $0x2790] sm:$0xff]
    %v1413 = vld [vmem:[%s1 + $0x2798] sm:$0xff]
    %v1414 = vld [vmem:[%s1 + $0x27a0] sm:$0xff]
    %v1415 = vld [vmem:[%s1 + $0x27a8] sm:$0xff]
    %v1416 = vld [vmem:[%s1 + $0x27b0] sm:$0xff]
    %v1417 = vld [vmem:[%s1 + $0x27b8] sm:$0xff]
    %v1418 = vld [vmem:[%s1 + $0x27c0] sm:$0xff]
    %v1419 = vld [vmem:[%s1 + $0x27c8] sm:$0xff]
    %v1420 = vld [vmem:[%s1 + $0x27d0] sm:$0xff]
    %v1421 = vld [vmem:[%s1 + $0x27d8] sm:$0xff]
    %v1422 = vld [vmem:[%s1 + $0x27e0] sm:$0xff]
    %v1423 = vld [vmem:[%s1 + $0x27e8] sm:$0xff]
    %v1424 = vld [vmem:[%s1 + $0x27f0] sm:$0xff]
    %v1425 = vld [vmem:[%s1 + $0x27f8] sm:$0xff]
    %v1426 = vld [vmem:[%s1 + $0x2800] sm:$0xff]
    %v1427 = vld [vmem:[%s1 + $0x2808] sm:$0xff]
    %v1428 = vld [vmem:[%s1 + $0x2810] sm:$0xff]
    %v1429 = vld [vmem:[%s1 + $0x2818] sm:$0xff]
    %v1430 = vld [vmem:[%s1 + $0x2820] sm:$0xff]
    %v1431 = vld [vmem:[%s1 + $0x2828] sm:$0xff]
    %v1432 = vld [vmem:[%s1 + $0x2830] sm:$0xff]
    %v1433 = vld [vmem:[%s1 + $0x2838] sm:$0xff]
    %v1434 = vld [vmem:[%s1 + $0x2840] sm:$0xff]
    %v1435 = vld [vmem:[%s1 + $0x2848] sm:$0xff]
    %v1436 = vld [vmem:[%s1 + $0x2850] sm:$0xff]
    %v1437 = vld [vmem:[%s1 + $0x2858] sm:$0xff]
    %v1438 = vld [vmem:[%s1 + $0x2860] sm:$0xff]
    %v1439 = vld [vmem:[%s1 + $0x2868] sm:$0xff]
    %v1440 = vld [vmem:[%s1 + $0x2870] sm:$0xff]
    %v1441 = vld [vmem:[%s1 + $0x2878] sm:$0xff]
    %v1442 = vld [vmem:[%s1 + $0x2880] sm:$0xff]
    %v1443 = vld [vmem:[%s1 + $0x2888] sm:$0xff]
    %v1444 = vld [vmem:[%s1 + $0x2890] sm:$0xff]
    %v1445 = vld [vmem:[%s1 + $0x2898] sm:$0xff]
    %v1446 = vld [vmem:[%s1 + $0x28a0] sm:$0xff]
    %v1447 = vld [vmem:[%s1 + $0x28a8] sm:$0xff]
    %v1448 = vld [vmem:[%s1 + $0x28b0] sm:$0xff]
    %v1449 = vld [vmem:[%s1 + $0x28b8] sm:$0xff]
    %v1450 = vld [vmem:[%s1 + $0x28c0] sm:$0xff]
    %v1451 = vld [vmem:[%s1 + $0x28c8] sm:$0xff]
    %v1452 = vld [vmem:[%s1 + $0x28d0] sm:$0xff]
    %v1453 = vld [vmem:[%s1 + $0x28d8] sm:$0xff]
    %v1454 = vld [vmem:[%s1 + $0x28e0] sm:$0xff]
    %v1455 = vld [vmem:[%s1 + $0x28e8] sm:$0xff]
    %v1456 = vld [vmem:[%s1 + $0x28f0] sm:$0xff]
    %v1457 = vld [vmem:[%s1 + $0x28f8] sm:$0xff]
    %v1458 = vld [vmem:[%s1 + $0x2900] sm:$0xff]
    %v1459 = vld [vmem:[%s1 + $0x2908] sm:$0xff]
    %v1460 = vld [vmem:[%s1 + $0x2910] sm:$0xff]
    %v1461 = vld [vmem:[%s1 + $0x2918] sm:$0xff]
    %v1462 = vld [vmem:[%s1 + $0x2920] sm:$0xff]
    %v1463 = vld [vmem:[%s1 + $0x2928] sm:$0xff]
    %v1464 = vld [vmem:[%s1 + $0x2930] sm:$0xff]
    %v1465 = vld [vmem:[%s1 + $0x2938] sm:$0xff]
    %v1466 = vld [vmem:[%s1 + $0x2940] sm:$0xff]
    %v1467 = vld [vmem:[%s1 + $0x2948] sm:$0xff]
    %v1468 = vld [vmem:[%s1 + $0x2950] sm:$0xff]
    %v1469 = vld [vmem:[%s1 + $0x2958] sm:$0xff]
    %v1470 = vld [vmem:[%s1 + $0x2960] sm:$0xff]
    %v1471 = vld [vmem:[%s1 + $0x2968] sm:$0xff]
    %v1472 = vld [vmem:[%s1 + $0x2970] sm:$0xff]
    %v1473 = vld [vmem:[%s1 + $0x2978] sm:$0xff]
    %v1474 = vld [vmem:[%s1 + $0x2980] sm:$0xff]
    %v1475 = vld [vmem:[%s1 + $0x2988] sm:$0xff]
    %v1476 = vld [vmem:[%s1 + $0x2990] sm:$0xff]
    %v1477 = vld [vmem:[%s1 + $0x2998] sm:$0xff]
    %v1478 = vld [vmem:[%s1 + $0x29a0] sm:$0xff]
    %v1479 = vld [vmem:[%s1 + $0x29a8] sm:$0xff]
    %v1480 = vld [vmem:[%s1 + $0x29b0] sm:$0xff]
    %v1481 = vld [vmem:[%s1 + $0x29b8] sm:$0xff]
    %v1482 = vld [vmem:[%s1 + $0x29c0] sm:$0xff]
    %v1483 = vld [vmem:[%s1 + $0x29c8] sm:$0xff]
    %v1484 = vld [vmem:[%s1 + $0x29d0] sm:$0xff]
    %v1485 = vld [vmem:[%s1 + $0x29d8] sm:$0xff]
    %v1486 = vld [vmem:[%s1 + $0x29e0] sm:$0xff]
    %v1487 = vld [vmem:[%s1 + $0x29e8] sm:$0xff]
    %v1488 = vld [vmem:[%s1 + $0x29f0] sm:$0xff]
    %v1489 = vld [vmem:[%s1 + $0x29f8] sm:$0xff]
    %v1490 = vld [vmem:[%s1 + $0x2a00] sm:$0xff]
    %v1491 = vld [vmem:[%s1 + $0x2a08] sm:$0xff]
    %v1492 = vld [vmem:[%s1 + $0x2a10] sm:$0xff]
    %v1493 = vld [vmem:[%s1 + $0x2a18] sm:$0xff]
    %v1494 = vld [vmem:[%s1 + $0x2a20] sm:$0xff]
    %v1495 = vld [vmem:[%s1 + $0x2a28] sm:$0xff]
    %v1496 = vld [vmem:[%s1 + $0x2a30] sm:$0xff]
    %v1497 = vld [vmem:[%s1 + $0x2a38] sm:$0xff]
    %v1498 = vld [vmem:[%s1 + $0x2a40] sm:$0xff]
    %v1499 = vld [vmem:[%s1 + $0x2a48] sm:$0xff]
    %v1500 = vld [vmem:[%s1 + $0x2a50] sm:$0xff]
    %v1501 = vld [vmem:[%s1 + $0x2a58] sm:$0xff]
    %v1502 = vld [vmem:[%s1 + $0x2a60] sm:$0xff]
    %v1503 = vld [vmem:[%s1 + $0x2a68] sm:$0xff]
    %v1504 = vld [vmem:[%s1 + $0x2a70] sm:$0xff]
    %v1505 = vld [vmem:[%s1 + $0x2a78] sm:$0xff]
    %v1506 = vld [vmem:[%s1 + $0x2a80] sm:$0xff]
    %v1507 = vld [vmem:[%s1 + $0x2a88] sm:$0xff]
    %v1508 = vld [vmem:[%s1 + $0x2a90] sm:$0xff]
    %v1509 = vld [vmem:[%s1 + $0x2a98] sm:$0xff]
    %v1510 = vld [vmem:[%s1 + $0x2aa0] sm:$0xff]
    %v1511 = vld [vmem:[%s1 + $0x2aa8] sm:$0xff]
    %v1512 = vld [vmem:[%s1 + $0x2ab0] sm:$0xff]
    %v1513 = vld [vmem:[%s1 + $0x2ab8] sm:$0xff]
    %v1514 = vld [vmem:[%s1 + $0x2ac0] sm:$0xff]
    %v1515 = vld [vmem:[%s1 + $0x2ac8] sm:$0xff]
    %v1516 = vld [vmem:[%s1 + $0x2ad0] sm:$0xff]
    %v1517 = vld [vmem:[%s1 + $0x2ad8] sm:$0xff]
    %v1518 = vld [vmem:[%s1 + $0x2ae0] sm:$0xff]
    %v1519 = vld [vmem:[%s1 + $0x2ae8] sm:$0xff]
    %v1520 = vld [vmem:[%s1 + $0x2af0] sm:$0xff]
    %v1521 = vld [vmem:[%s1 + $0x2af8] sm:$0xff]
    %v1522 = vld [vmem:[%s1 + $0x2b00] sm:$0xff]
    %v1523 = vld [vmem:[%s1 + $0x2b08] sm:$0xff]
    %v1524 = vld [vmem:[%s1 + $0x2b10] sm:$0xff]
    %v1525 = vld [vmem:[%s1 + $0x2b18] sm:$0xff]
    %v1526 = vld [vmem:[%s1 + $0x2b20] sm:$0xff]
    %v1527 = vld [vmem:[%s1 + $0x2b28] sm:$0xff]
    %v1528 = vld [vmem:[%s1 + $0x2b30] sm:$0xff]
    %v1529 = vld [vmem:[%s1 + $0x2b38] sm:$0xff]
    %v1530 = vld [vmem:[%s1 + $0x2b40] sm:$0xff]
    %v1531 = vld [vmem:[%s1 + $0x2b48] sm:$0xff]
    %v1532 = vld [vmem:[%s1 + $0x2b50] sm:$0xff]
    %v1533 = vld [vmem:[%s1 + $0x2b58] sm:$0xff]
    %v1534 = vld [vmem:[%s1 + $0x2b60] sm:$0xff]
    %v1535 = vld [vmem:[%s1 + $0x2b68] sm:$0xff]
    %v1536 = vld [vmem:[%s1 + $0x2b70] sm:$0xff]
    %v1537 = vld [vmem:[%s1 + $0x2b78] sm:$0xff]
    %v1538 = vld [vmem:[%s1 + $0x2b80] sm:$0xff]
    %v1539 = vld [vmem:[%s1 + $0x2b88] sm:$0xff]
    %v1540 = vld [vmem:[%s1 + $0x2b90] sm:$0xff]
    %v1541 = vld [vmem:[%s1 + $0x2b98] sm:$0xff]
    %v1542 = vld [vmem:[%s1 + $0x2ba0] sm:$0xff]
    %v1543 = vld [vmem:[%s1 + $0x2ba8] sm:$0xff]
    %v1544 = vld [vmem:[%s1 + $0x2bb0] sm:$0xff]
    %v1545 = vld [vmem:[%s1 + $0x2bb8] sm:$0xff]
    %v1546 = vld [vmem:[%s1 + $0x2bc0] sm:$0xff]
    %v1547 = vld [vmem:[%s1 + $0x2bc8] sm:$0xff]
    %v1548 = vld [vmem:[%s1 + $0x2bd0] sm:$0xff]
    %v1549 = vld [vmem:[%s1 + $0x2bd8] sm:$0xff]
    %v1550 = vld [vmem:[%s1 + $0x2be0] sm:$0xff]
    %v1551 = vld [vmem:[%s1 + $0x2be8] sm:$0xff]
    %v1552 = vld [vmem:[%s1 + $0x2bf0] sm:$0xff]
    %v1553 = vld [vmem:[%s1 + $0x2bf8] sm:$0xff]
    %v1554 = vld [vmem:[%s1 + $0x2c00] sm:$0xff]
    %v1555 = vld [vmem:[%s1 + $0x2c08] sm:$0xff]
    %v1556 = vld [vmem:[%s1 + $0x2c10] sm:$0xff]
    %v1557 = vld [vmem:[%s1 + $0x2c18] sm:$0xff]
    %v1558 = vld [vmem:[%s1 + $0x2c20] sm:$0xff]
    %v1559 = vld [vmem:[%s1 + $0x2c28] sm:$0xff]
    %v1560 = vld [vmem:[%s1 + $0x2c30] sm:$0xff]
    %v1561 = vld [vmem:[%s1 + $0x2c38] sm:$0xff]
    %v1562 = vld [vmem:[%s1 + $0x2c40] sm:$0xff]
    %v1563 = vld [vmem:[%s1 + $0x2c48] sm:$0xff]
    %v1564 = vld [vmem:[%s1 + $0x2c50] sm:$0xff]
    %v1565 = vld [vmem:[%s1 + $0x2c58] sm:$0xff]
    %v1566 = vld [vmem:[%s1 + $0x2c60] sm:$0xff]
    %v1567 = vld [vmem:[%s1 + $0x2c68] sm:$0xff]
    %v1568 = vld [vmem:[%s1 + $0x2c70] sm:$0xff]
    %v1569 = vld [vmem:[%s1 + $0x2c78] sm:$0xff]
    %v1570 = vld [vmem:[%s1 + $0x2c80] sm:$0xff]
    %v1571 = vld [vmem:[%s1 + $0x2c88] sm:$0xff]
    %v1572 = vld [vmem:[%s1 + $0x2c90] sm:$0xff]
    %v1573 = vld [vmem:[%s1 + $0x2c98] sm:$0xff]
    %v1574 = vld [vmem:[%s1 + $0x2ca0] sm:$0xff]
    %v1575 = vld [vmem:[%s1 + $0x2ca8] sm:$0xff]
    %v1576 = vld [vmem:[%s1 + $0x2cb0] sm:$0xff]
    %v1577 = vld [vmem:[%s1 + $0x2cb8] sm:$0xff]
    %v1578 = vld [vmem:[%s1 + $0x2cc0] sm:$0xff]
    %v1579 = vld [vmem:[%s1 + $0x2cc8] sm:$0xff]
    %v1580 = vld [vmem:[%s1 + $0x2cd0] sm:$0xff]
    %v1581 = vld [vmem:[%s1 + $0x2cd8] sm:$0xff]
    %v1582 = vld [vmem:[%s1 + $0x2ce0] sm:$0xff]
    %v1583 = vld [vmem:[%s1 + $0x2ce8] sm:$0xff]
    %v1584 = vld [vmem:[%s1 + $0x2cf0] sm:$0xff]
    %v1585 = vld [vmem:[%s1 + $0x2cf8] sm:$0xff]
    %v1586 = vld [vmem:[%s1 + $0x2d00] sm:$0xff]
    %v1587 = vld [vmem:[%s1 + $0x2d08] sm:$0xff]
    %v1588 = vld [vmem:[%s1 + $0x2d10] sm:$0xff]
    %v1589 = vld [vmem:[%s1 + $0x2d18] sm:$0xff]
    %v1590 = vld [vmem:[%s1 + $0x2d20] sm:$0xff]
    %v1591 = vld [vmem:[%s1 + $0x2d28] sm:$0xff]
    %v1592 = vld [vmem:[%s1 + $0x2d30] sm:$0xff]
    %v1593 = vld [vmem:[%s1 + $0x2d38] sm:$0xff]
    %v1594 = vld [vmem:[%s1 + $0x2d40] sm:$0xff]
    %v1595 = vld [vmem:[%s1 + $0x2d48] sm:$0xff]
    %v1596 = vld [vmem:[%s1 + $0x2d50] sm:$0xff]
    %v1597 = vld [vmem:[%s1 + $0x2d58] sm:$0xff]
    %v1598 = vld [vmem:[%s1 + $0x2d60] sm:$0xff]
    %v1599 = vld [vmem:[%s1 + $0x2d68] sm:$0xff]
    %v1600 = vld [vmem:[%s1 + $0x2d70] sm:$0xff]
    %v1601 = vld [vmem:[%s1 + $0x2d78] sm:$0xff]
    %v1602 = vld [vmem:[%s1 + $0x2d80] sm:$0xff]
    %v1603 = vld [vmem:[%s1 + $0x2d88] sm:$0xff]
    %v1604 = vld [vmem:[%s1 + $0x2d90] sm:$0xff]
    %v1605 = vld [vmem:[%s1 + $0x2d98] sm:$0xff]
    %v1606 = vld [vmem:[%s1 + $0x2da0] sm:$0xff]
    %v1607 = vld [vmem:[%s1 + $0x2da8] sm:$0xff]
    %v1608 = vld [vmem:[%s1 + $0x2db0] sm:$0xff]
    %v1609 = vld [vmem:[%s1 + $0x2db8] sm:$0xff]
    %v1610 = vld [vmem:[%s1 + $0x2dc0] sm:$0xff]
    %v1611 = vld [vmem:[%s1 + $0x2dc8] sm:$0xff]
    %v1612 = vld [vmem:[%s1 + $0x2dd0] sm:$0xff]
    %v1613 = vld [vmem:[%s1 + $0x2dd8] sm:$0xff]
    %v1614 = vld [vmem:[%s1 + $0x2de0] sm:$0xff]
    %v1615 = vld [vmem:[%s1 + $0x2de8] sm:$0xff]
    %v1616 = vld [vmem:[%s1 + $0x2df0] sm:$0xff]
    %v1617 = vld [vmem:[%s1 + $0x2df8] sm:$0xff]
    %v1618 = vld [vmem:[%s1 + $0x2e00] sm:$0xff]
    %v1619 = vld [vmem:[%s1 + $0x2e08] sm:$0xff]
    %v1620 = vld [vmem:[%s1 + $0x2e10] sm:$0xff]
    %v1621 = vld [vmem:[%s1 + $0x2e18] sm:$0xff]
    %v1622 = vld [vmem:[%s1 + $0x2e20] sm:$0xff]
    %v1623 = vld [vmem:[%s1 + $0x2e28] sm:$0xff]
    %v1624 = vld [vmem:[%s1 + $0x2e30] sm:$0xff]
    %v1625 = vld [vmem:[%s1 + $0x2e38] sm:$0xff]
    %v1626 = vld [vmem:[%s1 + $0x2e40] sm:$0xff]
    %v1627 = vld [vmem:[%s1 + $0x2e48] sm:$0xff]
    %v1628 = vld [vmem:[%s1 + $0x2e50] sm:$0xff]
    %v1629 = vld [vmem:[%s1 + $0x2e58] sm:$0xff]
    %v1630 = vld [vmem:[%s1 + $0x2e60] sm:$0xff]
    %v1631 = vld [vmem:[%s1 + $0x2e68] sm:$0xff]
    %v1632 = vld [vmem:[%s1 + $0x2e70] sm:$0xff]
    %v1633 = vld [vmem:[%s1 + $0x2e78] sm:$0xff]
    %v1634 = vld [vmem:[%s1 + $0x2e80] sm:$0xff]
    %v1635 = vld [vmem:[%s1 + $0x2e88] sm:$0xff]
    %v1636 = vld [vmem:[%s1 + $0x2e90] sm:$0xff]
    %v1637 = vld [vmem:[%s1 + $0x2e98] sm:$0xff]
    %v1638 = vld [vmem:[%s1 + $0x2ea0] sm:$0xff]
    %v1639 = vld [vmem:[%s1 + $0x2ea8] sm:$0xff]
    %v1640 = vld [vmem:[%s1 + $0x2eb0] sm:$0xff]
    %v1641 = vld [vmem:[%s1 + $0x2eb8] sm:$0xff]
    %v1642 = vld [vmem:[%s1 + $0x2ec0] sm:$0xff]
    %v1643 = vld [vmem:[%s1 + $0x2ec8] sm:$0xff]
    %v1644 = vld [vmem:[%s1 + $0x2ed0] sm:$0xff]
    %v1645 = vld [vmem:[%s1 + $0x2ed8] sm:$0xff]
    %v1646 = vld [vmem:[%s1 + $0x2ee0] sm:$0x3f]
    %vm1647 = vcmask 834560
    %v1649 = vsel %vm1647, %v145, 0
    %vm1651 = vcmask 1045504
    %v1653 = vsel %vm1651, %v1646, 0
    %1655 = vmatprep.subr.mxu0 0.0
    %1656 = vmatpush1.msra.mxu0 %v146
    %1657 = vmatprep.subr.mxu0 0.0
    %1658 = vmatpush1.msra.mxu0 %v147
    %1659 = vmatprep.subr.mxu0 0.0
    %1660 = vmatpush1.msra.mxu0 %v148
    %1661 = vmatprep.subr.mxu0 0.0
    %1662 = vmatpush1.msra.mxu0 %v149
    %1663 = vmatprep.subr.mxu0 0.0
    %1664 = vmatpush1.msra.mxu0 %v150
    %1665 = vmatprep.subr.mxu0 0.0
    %1666 = vmatpush1.msra.mxu0 %v151
    %1667 = vmatprep.subr.mxu0 0.0
    %1668 = vmatpush1.msra.mxu0 %v152
    %1669 = vmatprep.subr.mxu0 0.0
    %1670 = vmatpush1.msra.mxu0 %v153
    %1671 = vmatprep.subr.mxu0 0.0
    %1672 = vmatpush1.msra.mxu0 %v154
    %1673 = vmatprep.subr.mxu0 0.0
    %1674 = vmatpush1.msra.mxu0 %v155
    %1675 = vmatprep.subr.mxu0 0.0
    %1676 = vmatpush1.msra.mxu0 %v156
    %1677 = vmatprep.subr.mxu0 0.0
    %1678 = vmatpush1.msra.mxu0 %v157
    %1679 = vmatprep.subr.mxu0 0.0
    %1680 = vmatpush1.msra.mxu0 %v158
    %1681 = vmatprep.subr.mxu0 0.0
    %1682 = vmatpush1.msra.mxu0 %v159
    %1683 = vmatprep.subr.mxu0 0.0
    %1684 = vmatpush1.msra.mxu0 %v160
    %1685 = vmatprep.subr.mxu0 0.0
    %1686 = vmatpush1.msra.mxu0 %v161
    %1687 = vmatprep.subr.mxu0 0.0
    %1688 = vmatpush1.msra.mxu0 %v162
    %1689 = vmatprep.subr.mxu0 0.0
    %1690 = vmatpush1.msra.mxu0 %v163
    %1691 = vmatprep.subr.mxu0 0.0
    %1692 = vmatpush1.msra.mxu0 %v164
    %1693 = vmatprep.subr.mxu0 0.0
    %1694 = vmatpush1.msra.mxu0 %v165
    %1695 = vmatprep.subr.mxu0 0.0
    %1696 = vmatpush1.msra.mxu0 %v166
    %1697 = vmatprep.subr.mxu0 0.0
    %1698 = vmatpush1.msra.mxu0 %v167
    %1699 = vmatprep.subr.mxu0 0.0
    %1700 = vmatpush1.msra.mxu0 %v168
    %1701 = vmatprep.subr.mxu0 0.0
    %1702 = vmatpush1.msra.mxu0 %v169
    %1703 = vmatprep.subr.mxu0 0.0
    %1704 = vmatpush1.msra.mxu0 %v170
    %1705 = vmatprep.subr.mxu0 0.0
    %1706 = vmatpush1.msra.mxu0 %v171
    %1707 = vmatprep.subr.mxu0 0.0
    %1708 = vmatpush1.msra.mxu0 %v172
    %1709 = vmatprep.subr.mxu0 0.0
    %1710 = vmatpush1.msra.mxu0 %v173
    %1711 = vmatprep.subr.mxu0 0.0
    %1712 = vmatpush1.msra.mxu0 %v174
    %1713 = vmatprep.subr.mxu0 0.0
    %1714 = vmatpush1.msra.mxu0 %v175
    %1715 = vmatprep.subr.mxu0 0.0
    %1716 = vmatpush1.msra.mxu0 %v176
    %1717 = vmatprep.subr.mxu0 0.0
    %1718 = vmatpush1.msra.mxu0 %v177
    %1719 = vmatprep.mubr.f32.mxu0 %v53
    %1720 = vmatmul.mubr.f32.gmra.mrb[0].mxu0 %v52
    %v1721 = vpop.f32.mrb[0].mxu0
    %v1722 = vadd.f32 0.0, %v1721
    %v1723 = vpop.f32.mrb[0].mxu0
    %1724 = vdwg.mxu0
    %1725 = vmatprep.subr.mxu0 0.0
    %1726 = vmatpush1.msra.mxu0 %v178
    %1727 = vmatprep.subr.mxu0 0.0
    %1728 = vmatpush1.msra.mxu0 %v179
    %1729 = vmatprep.subr.mxu0 0.0
    %1730 = vmatpush1.msra.mxu0 %v180
    %1731 = vmatprep.subr.mxu0 0.0
    %1732 = vmatpush1.msra.mxu0 %v181
    %1733 = vmatprep.subr.mxu0 0.0
    %1734 = vmatpush1.msra.mxu0 %v182
    %1735 = vmatprep.subr.mxu0 0.0
    %1736 = vmatpush1.msra.mxu0 %v183
    %1737 = vmatprep.subr.mxu0 0.0
    %1738 = vmatpush1.msra.mxu0 %v184
    %1739 = vmatprep.subr.mxu0 0.0
    %1740 = vmatpush1.msra.mxu0 %v185
    %1741 = vmatprep.subr.mxu0 0.0
    %1742 = vmatpush1.msra.mxu0 %v186
    %1743 = vmatprep.subr.mxu0 0.0
    %1744 = vmatpush1.msra.mxu0 %v187
    %1745 = vmatprep.subr.mxu0 0.0
    %1746 = vmatpush1.msra.mxu0 %v188
    %1747 = vmatprep.subr.mxu0 0.0
    %1748 = vmatpush1.msra.mxu0 %v189
    %1749 = vmatprep.subr.mxu0 0.0
    %1750 = vmatpush1.msra.mxu0 %v190
    %1751 = vmatprep.subr.mxu0 0.0
    %1752 = vmatpush1.msra.mxu0 %v191
    %1753 = vmatprep.subr.mxu0 0.0
    %1754 = vmatpush1.msra.mxu0 %v192
    %1755 = vmatprep.subr.mxu0 0.0
    %1756 = vmatpush1.msra.mxu0 %v193
    %1757 = vmatprep.subr.mxu0 0.0
    %1758 = vmatpush1.msra.mxu0 %v194
    %1759 = vmatprep.subr.mxu0 0.0
    %1760 = vmatpush1.msra.mxu0 %v195
    %1761 = vmatprep.subr.mxu0 0.0
    %1762 = vmatpush1.msra.mxu0 %v196
    %1763 = vmatprep.subr.mxu0 0.0
    %1764 = vmatpush1.msra.mxu0 %v197
    %1765 = vmatprep.subr.mxu0 0.0
    %1766 = vmatpush1.msra.mxu0 %v198
    %1767 = vmatprep.subr.mxu0 0.0
    %1768 = vmatpush1.msra.mxu0 %v199
    %1769 = vmatprep.subr.mxu0 0.0
    %1770 = vmatpush1.msra.mxu0 %v200
    %1771 = vmatprep.subr.mxu0 0.0
    %1772 = vmatpush1.msra.mxu0 %v201
    %1773 = vmatprep.subr.mxu0 0.0
    %1774 = vmatpush1.msra.mxu0 %v202
    %1775 = vmatprep.subr.mxu0 0.0
    %1776 = vmatpush1.msra.mxu0 %v203
    %1777 = vmatprep.subr.mxu0 0.0
    %1778 = vmatpush1.msra.mxu0 %v204
    %1779 = vmatprep.subr.mxu0 0.0
    %1780 = vmatpush1.msra.mxu0 %v205
    %1781 = vmatprep.subr.mxu0 0.0
    %1782 = vmatpush1.msra.mxu0 %v206
    %1783 = vmatprep.subr.mxu0 0.0
    %1784 = vmatpush1.msra.mxu0 %v207
    %1785 = vmatprep.subr.mxu0 0.0
    %1786 = vmatpush1.msra.mxu0 %v208
    %1787 = vmatprep.subr.mxu0 0.0
    %1788 = vmatpush1.msra.mxu0 %v209
    %1789 = vmatprep.mubr.f32.mxu0 %v55
    %1790 = vmatmul.mubr.f32.gmra.mrb[0].mxu0 %v54
    %v1791 = vpop.f32.mrb[0].mxu0
    %v1792 = vadd.f32 %v1722, %v1791
    %v1793 = vpop.f32.mrb[0].mxu0
    %1794 = vdwg.mxu0
    %1795 = vmatprep.subr.mxu0 0.0
    %1796 = vmatpush1.msra.mxu0 %v210
    %1797 = vmatprep.subr.mxu0 0.0
    %1798 = vmatpush1.msra.mxu0 %v211
    %1799 = vmatprep.subr.mxu0 0.0
    %1800 = vmatpush1.msra.mxu0 %v212
    %1801 = vmatprep.subr.mxu0 0.0
    %1802 = vmatpush1.msra.mxu0 %v213
    %1803 = vmatprep.subr.mxu0 0.0
    %1804 = vmatpush1.msra.mxu0 %v214
    %1805 = vmatprep.subr.mxu0 0.0
    %1806 = vmatpush1.msra.mxu0 %v215
    %1807 = vmatprep.subr.mxu0 0.0
    %1808 = vmatpush1.msra.mxu0 %v216
    %1809 = vmatprep.subr.mxu0 0.0
    %1810 = vmatpush1.msra.mxu0 %v217
    %1811 = vmatprep.subr.mxu0 0.0
    %1812 = vmatpush1.msra.mxu0 %v218
    %1813 = vmatprep.subr.mxu0 0.0
    %1814 = vmatpush1.msra.mxu0 %v219
    %1815 = vmatprep.subr.mxu0 0.0
    %1816 = vmatpush1.msra.mxu0 %v220
    %1817 = vmatprep.subr.mxu0 0.0
    %1818 = vmatpush1.msra.mxu0 %v221
    %1819 = vmatprep.subr.mxu0 0.0
    %1820 = vmatpush1.msra.mxu0 %v222
    %1821 = vmatprep.subr.mxu0 0.0
    %1822 = vmatpush1.msra.mxu0 %v223
    %1823 = vmatprep.subr.mxu0 0.0
    %1824 = vmatpush1.msra.mxu0 %v224
    %1825 = vmatprep.subr.mxu0 0.0
    %1826 = vmatpush1.msra.mxu0 %v225
    %1827 = vmatprep.subr.mxu0 0.0
    %1828 = vmatpush1.msra.mxu0 %v226
    %1829 = vmatprep.subr.mxu0 0.0
    %1830 = vmatpush1.msra.mxu0 %v227
    %1831 = vmatprep.subr.mxu0 0.0
    %1832 = vmatpush1.msra.mxu0 %v228
    %1833 = vmatprep.subr.mxu0 0.0
    %1834 = vmatpush1.msra.mxu0 %v229
    %1835 = vmatprep.subr.mxu0 0.0
    %1836 = vmatpush1.msra.mxu0 %v230
    %1837 = vmatprep.subr.mxu0 0.0
    %1838 = vmatpush1.msra.mxu0 %v231
    %1839 = vmatprep.subr.mxu0 0.0
    %1840 = vmatpush1.msra.mxu0 %v232
    %1841 = vmatprep.subr.mxu0 0.0
    %1842 = vmatpush1.msra.mxu0 %v233
    %1843 = vmatprep.subr.mxu0 0.0
    %1844 = vmatpush1.msra.mxu0 %v234
    %1845 = vmatprep.subr.mxu0 0.0
    %1846 = vmatpush1.msra.mxu0 %v235
    %1847 = vmatprep.subr.mxu0 0.0
    %1848 = vmatpush1.msra.mxu0 %v236
    %1849 = vmatprep.subr.mxu0 0.0
    %1850 = vmatpush1.msra.mxu0 %v237
    %1851 = vmatprep.subr.mxu0 0.0
    %1852 = vmatpush1.msra.mxu0 %v238
    %1853 = vmatprep.subr.mxu0 0.0
    %1854 = vmatpush1.msra.mxu0 %v239
    %1855 = vmatprep.subr.mxu0 0.0
    %1856 = vmatpush1.msra.mxu0 %v240
    %1857 = vmatprep.subr.mxu0 0.0
    %1858 = vmatpush1.msra.mxu0 %v241
    %1859 = vmatprep.mubr.f32.mxu0 %v57
    %1860 = vmatmul.mubr.f32.gmra.mrb[0].mxu0 %v56
    %v1861 = vpop.f32.mrb[0].mxu0
    %v1862 = vadd.f32 %v1792, %v1861
    %v1863 = vpop.f32.mrb[0].mxu0
    %1864 = vdwg.mxu0
    %1865 = vmatprep.subr.mxu0 0.0
    %1866 = vmatpush1.msra.mxu0 %v242
    %1867 = vmatprep.subr.mxu0 0.0
    %1868 = vmatpush1.msra.mxu0 %v243
    %1869 = vmatprep.subr.mxu0 0.0
    %1870 = vmatpush1.msra.mxu0 %v244
    %1871 = vmatprep.subr.mxu0 0.0
    %1872 = vmatpush1.msra.mxu0 %v245
    %1873 = vmatprep.subr.mxu0 0.0
    %1874 = vmatpush1.msra.mxu0 %v246
    %1875 = vmatprep.subr.mxu0 0.0
    %1876 = vmatpush1.msra.mxu0 %v247
    %1877 = vmatprep.subr.mxu0 0.0
    %1878 = vmatpush1.msra.mxu0 %v248
    %1879 = vmatprep.subr.mxu0 0.0
    %1880 = vmatpush1.msra.mxu0 %v249
    %1881 = vmatprep.subr.mxu0 0.0
    %1882 = vmatpush1.msra.mxu0 %v250
    %1883 = vmatprep.subr.mxu0 0.0
    %1884 = vmatpush1.msra.mxu0 %v251
    %1885 = vmatprep.subr.mxu0 0.0
    %1886 = vmatpush1.msra.mxu0 %v252
    %1887 = vmatprep.subr.mxu0 0.0
    %1888 = vmatpush1.msra.mxu0 %v253
    %1889 = vmatprep.subr.mxu0 0.0
    %1890 = vmatpush1.msra.mxu0 %v254
    %1891 = vmatprep.subr.mxu0 0.0
    %1892 = vmatpush1.msra.mxu0 %v255
    %1893 = vmatprep.subr.mxu0 0.0
    %1894 = vmatpush1.msra.mxu0 %v256
    %1895 = vmatprep.subr.mxu0 0.0
    %1896 = vmatpush1.msra.mxu0 %v257
    %1897 = vmatprep.subr.mxu0 0.0
    %1898 = vmatpush1.msra.mxu0 %v258
    %1899 = vmatprep.subr.mxu0 0.0
    %1900 = vmatpush1.msra.mxu0 %v259
    %1901 = vmatprep.subr.mxu0 0.0
    %1902 = vmatpush1.msra.mxu0 %v260
    %1903 = vmatprep.subr.mxu0 0.0
    %1904 = vmatpush1.msra.mxu0 %v261
    %1905 = vmatprep.subr.mxu0 0.0
    %1906 = vmatpush1.msra.mxu0 %v262
    %1907 = vmatprep.subr.mxu0 0.0
    %1908 = vmatpush1.msra.mxu0 %v263
    %1909 = vmatprep.subr.mxu0 0.0
    %1910 = vmatpush1.msra.mxu0 %v264
    %1911 = vmatprep.subr.mxu0 0.0
    %1912 = vmatpush1.msra.mxu0 %v265
    %1913 = vmatprep.subr.mxu0 0.0
    %1914 = vmatpush1.msra.mxu0 %v266
    %1915 = vmatprep.subr.mxu0 0.0
    %1916 = vmatpush1.msra.mxu0 %v267
    %1917 = vmatprep.subr.mxu0 0.0
    %1918 = vmatpush1.msra.mxu0 %v268
    %1919 = vmatprep.subr.mxu0 0.0
    %1920 = vmatpush1.msra.mxu0 %v269
    %1921 = vmatprep.subr.mxu0 0.0
    %1922 = vmatpush1.msra.mxu0 %v270
    %1923 = vmatprep.subr.mxu0 0.0
    %1924 = vmatpush1.msra.mxu0 %v271
    %1925 = vmatprep.subr.mxu0 0.0
    %1926 = vmatpush1.msra.mxu0 %v272
    %1927 = vmatprep.subr.mxu0 0.0
    %1928 = vmatpush1.msra.mxu0 %v273
    %1929 = vmatprep.mubr.f32.mxu0 %v59
    %1930 = vmatmul.mubr.f32.gmra.mrb[0].mxu0 %v58
    %v1931 = vpop.f32.mrb[0].mxu0
    %v1932 = vadd.f32 %v1862, %v1931
    %v1933 = vpop.f32.mrb[0].mxu0
    %1934 = vdwg.mxu0
    %1935 = vmatprep.subr.mxu0 0.0
    %1936 = vmatpush1.msra.mxu0 %v274
    %1937 = vmatprep.subr.mxu0 0.0
    %1938 = vmatpush1.msra.mxu0 %v275
    %1939 = vmatprep.subr.mxu0 0.0
    %1940 = vmatpush1.msra.mxu0 %v276
    %1941 = vmatprep.subr.mxu0 0.0
    %1942 = vmatpush1.msra.mxu0 %v277
    %1943 = vmatprep.subr.mxu0 0.0
    %1944 = vmatpush1.msra.mxu0 %v278
    %1945 = vmatprep.subr.mxu0 0.0
    %1946 = vmatpush1.msra.mxu0 %v279
    %1947 = vmatprep.subr.mxu0 0.0
    %1948 = vmatpush1.msra.mxu0 %v280
    %1949 = vmatprep.subr.mxu0 0.0
    %1950 = vmatpush1.msra.mxu0 %v281
    %1951 = vmatprep.subr.mxu0 0.0
    %1952 = vmatpush1.msra.mxu0 %v282
    %1953 = vmatprep.subr.mxu0 0.0
    %1954 = vmatpush1.msra.mxu0 %v283
    %1955 = vmatprep.subr.mxu0 0.0
    %1956 = vmatpush1.msra.mxu0 %v284
    %1957 = vmatprep.subr.mxu0 0.0
    %1958 = vmatpush1.msra.mxu0 %v285
    %1959 = vmatprep.subr.mxu0 0.0
    %1960 = vmatpush1.msra.mxu0 %v286
    %1961 = vmatprep.subr.mxu0 0.0
    %1962 = vmatpush1.msra.mxu0 %v287
    %1963 = vmatprep.subr.mxu0 0.0
    %1964 = vmatpush1.msra.mxu0 %v288
    %1965 = vmatprep.subr.mxu0 0.0
    %1966 = vmatpush1.msra.mxu0 %v289
    %1967 = vmatprep.subr.mxu0 0.0
    %1968 = vmatpush1.msra.mxu0 %v290
    %1969 = vmatprep.subr.mxu0 0.0
    %1970 = vmatpush1.msra.mxu0 %v291
    %1971 = vmatprep.subr.mxu0 0.0
    %1972 = vmatpush1.msra.mxu0 %v292
    %1973 = vmatprep.subr.mxu0 0.0
    %1974 = vmatpush1.msra.mxu0 %v293
    %1975 = vmatprep.subr.mxu0 0.0
    %1976 = vmatpush1.msra.mxu0 %v294
    %1977 = vmatprep.subr.mxu0 0.0
    %1978 = vmatpush1.msra.mxu0 %v295
    %1979 = vmatprep.subr.mxu0 0.0
    %1980 = vmatpush1.msra.mxu0 %v296
    %1981 = vmatprep.subr.mxu0 0.0
    %1982 = vmatpush1.msra.mxu0 %v297
    %1983 = vmatprep.subr.mxu0 0.0
    %1984 = vmatpush1.msra.mxu0 %v298
    %1985 = vmatprep.subr.mxu0 0.0
    %1986 = vmatpush1.msra.mxu0 %v299
    %1987 = vmatprep.subr.mxu0 0.0
    %1988 = vmatpush1.msra.mxu0 %v300
    %1989 = vmatprep.subr.mxu0 0.0
    %1990 = vmatpush1.msra.mxu0 %v301
    %1991 = vmatprep.subr.mxu0 0.0
    %1992 = vmatpush1.msra.mxu0 %v302
    %1993 = vmatprep.subr.mxu0 0.0
    %1994 = vmatpush1.msra.mxu0 %v303
    %1995 = vmatprep.subr.mxu0 0.0
    %1996 = vmatpush1.msra.mxu0 %v304
    %1997 = vmatprep.subr.mxu0 0.0
    %1998 = vmatpush1.msra.mxu0 %v305
    %1999 = vmatprep.mubr.f32.mxu0 %v61
    %2000 = vmatmul.mubr.f32.gmra.mrb[0].mxu0 %v60
    %v2001 = vpop.f32.mrb[0].mxu0
    %v2002 = vadd.f32 %v1932, %v2001
    %v2003 = vpop.f32.mrb[0].mxu0
    %2004 = vdwg.mxu0
    %2005 = vmatprep.subr.mxu0 0.0
    %2006 = vmatpush1.msra.mxu0 %v306
    %2007 = vmatprep.subr.mxu0 0.0
    %2008 = vmatpush1.msra.mxu0 %v307
    %2009 = vmatprep.subr.mxu0 0.0
    %2010 = vmatpush1.msra.mxu0 %v308
    %2011 = vmatprep.subr.mxu0 0.0
    %2012 = vmatpush1.msra.mxu0 %v309
    %2013 = vmatprep.subr.mxu0 0.0
    %2014 = vmatpush1.msra.mxu0 %v310
    %2015 = vmatprep.subr.mxu0 0.0
    %2016 = vmatpush1.msra.mxu0 %v311
    %2017 = vmatprep.subr.mxu0 0.0
    %2018 = vmatpush1.msra.mxu0 %v312
    %2019 = vmatprep.subr.mxu0 0.0
    %2020 = vmatpush1.msra.mxu0 %v313
    %2021 = vmatprep.subr.mxu0 0.0
    %2022 = vmatpush1.msra.mxu0 %v314
    %2023 = vmatprep.subr.mxu0 0.0
    %2024 = vmatpush1.msra.mxu0 %v315
    %2025 = vmatprep.subr.mxu0 0.0
    %2026 = vmatpush1.msra.mxu0 %v316
    %2027 = vmatprep.subr.mxu0 0.0
    %2028 = vmatpush1.msra.mxu0 %v317
    %2029 = vmatprep.subr.mxu0 0.0
    %2030 = vmatpush1.msra.mxu0 %v318
    %2031 = vmatprep.subr.mxu0 0.0
    %2032 = vmatpush1.msra.mxu0 %v319
    %2033 = vmatprep.subr.mxu0 0.0
    %2034 = vmatpush1.msra.mxu0 %v320
    %2035 = vmatprep.subr.mxu0 0.0
    %2036 = vmatpush1.msra.mxu0 %v321
    %2037 = vmatprep.subr.mxu0 0.0
    %2038 = vmatpush1.msra.mxu0 %v322
    %2039 = vmatprep.subr.mxu0 0.0
    %2040 = vmatpush1.msra.mxu0 %v323
    %2041 = vmatprep.subr.mxu0 0.0
    %2042 = vmatpush1.msra.mxu0 %v324
    %2043 = vmatprep.subr.mxu0 0.0
    %2044 = vmatpush1.msra.mxu0 %v325
    %2045 = vmatprep.subr.mxu0 0.0
    %2046 = vmatpush1.msra.mxu0 %v326
    %2047 = vmatprep.subr.mxu0 0.0
    %2048 = vmatpush1.msra.mxu0 %v327
    %2049 = vmatprep.subr.mxu0 0.0
    %2050 = vmatpush1.msra.mxu0 %v328
    %2051 = vmatprep.subr.mxu0 0.0
    %2052 = vmatpush1.msra.mxu0 %v329
    %2053 = vmatprep.subr.mxu0 0.0
    %2054 = vmatpush1.msra.mxu0 %v330
    %2055 = vmatprep.subr.mxu0 0.0
    %2056 = vmatpush1.msra.mxu0 %v331
    %2057 = vmatprep.subr.mxu0 0.0
    %2058 = vmatpush1.msra.mxu0 %v332
    %2059 = vmatprep.subr.mxu0 0.0
    %2060 = vmatpush1.msra.mxu0 %v333
    %2061 = vmatprep.subr.mxu0 0.0
    %2062 = vmatpush1.msra.mxu0 %v334
    %2063 = vmatprep.subr.mxu0 0.0
    %2064 = vmatpush1.msra.mxu0 %v335
    %2065 = vmatprep.subr.mxu0 0.0
    %2066 = vmatpush1.msra.mxu0 %v336
    %2067 = vmatprep.subr.mxu0 0.0
    %2068 = vmatpush1.msra.mxu0 %v337
    %2069 = vmatprep.mubr.f32.mxu0 %v63
    %2070 = vmatmul.mubr.f32.gmra.mrb[0].mxu0 %v62
    %v2071 = vpop.f32.mrb[0].mxu0
    %v2072 = vadd.f32 %v2002, %v2071
    %v2073 = vpop.f32.mrb[0].mxu0
    %2074 = vdwg.mxu0
    %2075 = vmatprep.subr.mxu0 0.0
    %2076 = vmatpush1.msra.mxu0 %v338
    %2077 = vmatprep.subr.mxu0 0.0
    %2078 = vmatpush1.msra.mxu0 %v339
    %2079 = vmatprep.subr.mxu0 0.0
    %2080 = vmatpush1.msra.mxu0 %v340
    %2081 = vmatprep.subr.mxu0 0.0
    %2082 = vmatpush1.msra.mxu0 %v341
    %2083 = vmatprep.subr.mxu0 0.0
    %2084 = vmatpush1.msra.mxu0 %v342
    %2085 = vmatprep.subr.mxu0 0.0
    %2086 = vmatpush1.msra.mxu0 %v343
    %2087 = vmatprep.subr.mxu0 0.0
    %2088 = vmatpush1.msra.mxu0 %v344
    %2089 = vmatprep.subr.mxu0 0.0
    %2090 = vmatpush1.msra.mxu0 %v345
    %2091 = vmatprep.subr.mxu0 0.0
    %2092 = vmatpush1.msra.mxu0 %v346
    %2093 = vmatprep.subr.mxu0 0.0
    %2094 = vmatpush1.msra.mxu0 %v347
    %2095 = vmatprep.subr.mxu0 0.0
    %2096 = vmatpush1.msra.mxu0 %v348
    %2097 = vmatprep.subr.mxu0 0.0
    %2098 = vmatpush1.msra.mxu0 %v349
    %2099 = vmatprep.subr.mxu0 0.0
    %2100 = vmatpush1.msra.mxu0 %v350
    %2101 = vmatprep.subr.mxu0 0.0
    %2102 = vmatpush1.msra.mxu0 %v351
    %2103 = vmatprep.subr.mxu0 0.0
    %2104 = vmatpush1.msra.mxu0 %v352
    %2105 = vmatprep.subr.mxu0 0.0
    %2106 = vmatpush1.msra.mxu0 %v353
    %2107 = vmatprep.subr.mxu0 0.0
    %2108 = vmatpush1.msra.mxu0 %v354
    %2109 = vmatprep.subr.mxu0 0.0
    %2110 = vmatpush1.msra.mxu0 %v355
    %2111 = vmatprep.subr.mxu0 0.0
    %2112 = vmatpush1.msra.mxu0 %v356
    %2113 = vmatprep.subr.mxu0 0.0
    %2114 = vmatpush1.msra.mxu0 %v357
    %2115 = vmatprep.subr.mxu0 0.0
    %2116 = vmatpush1.msra.mxu0 %v358
    %2117 = vmatprep.subr.mxu0 0.0
    %2118 = vmatpush1.msra.mxu0 %v359
    %2119 = vmatprep.subr.mxu0 0.0
    %2120 = vmatpush1.msra.mxu0 %v360
    %2121 = vmatprep.subr.mxu0 0.0
    %2122 = vmatpush1.msra.mxu0 %v361
    %2123 = vmatprep.subr.mxu0 0.0
    %2124 = vmatpush1.msra.mxu0 %v362
    %2125 = vmatprep.subr.mxu0 0.0
    %2126 = vmatpush1.msra.mxu0 %v363
    %2127 = vmatprep.subr.mxu0 0.0
    %2128 = vmatpush1.msra.mxu0 %v364
    %2129 = vmatprep.subr.mxu0 0.0
    %2130 = vmatpush1.msra.mxu0 %v365
    %2131 = vmatprep.subr.mxu0 0.0
    %2132 = vmatpush1.msra.mxu0 %v366
    %2133 = vmatprep.subr.mxu0 0.0
    %2134 = vmatpush1.msra.mxu0 %v367
    %2135 = vmatprep.subr.mxu0 0.0
    %2136 = vmatpush1.msra.mxu0 %v368
    %2137 = vmatprep.subr.mxu0 0.0
    %2138 = vmatpush1.msra.mxu0 %v369
    %2139 = vmatprep.mubr.f32.mxu0 %v65
    %2140 = vmatmul.mubr.f32.gmra.mrb[0].mxu0 %v64
    %v2141 = vpop.f32.mrb[0].mxu0
    %v2142 = vadd.f32 %v2072, %v2141
    %v2143 = vpop.f32.mrb[0].mxu0
    %2144 = vdwg.mxu0
    %2145 = vmatprep.subr.mxu0 0.0
    %2146 = vmatpush1.msra.mxu0 %v370
    %2147 = vmatprep.subr.mxu0 0.0
    %2148 = vmatpush1.msra.mxu0 %v371
    %2149 = vmatprep.subr.mxu0 0.0
    %2150 = vmatpush1.msra.mxu0 %v372
    %2151 = vmatprep.subr.mxu0 0.0
    %2152 = vmatpush1.msra.mxu0 %v373
    %2153 = vmatprep.subr.mxu0 0.0
    %2154 = vmatpush1.msra.mxu0 %v374
    %2155 = vmatprep.subr.mxu0 0.0
    %2156 = vmatpush1.msra.mxu0 %v375
    %2157 = vmatprep.subr.mxu0 0.0
    %2158 = vmatpush1.msra.mxu0 %v376
    %2159 = vmatprep.subr.mxu0 0.0
    %2160 = vmatpush1.msra.mxu0 %v377
    %2161 = vmatprep.subr.mxu0 0.0
    %2162 = vmatpush1.msra.mxu0 %v378
    %2163 = vmatprep.subr.mxu0 0.0
    %2164 = vmatpush1.msra.mxu0 %v379
    %2165 = vmatprep.subr.mxu0 0.0
    %2166 = vmatpush1.msra.mxu0 %v380
    %2167 = vmatprep.subr.mxu0 0.0
    %2168 = vmatpush1.msra.mxu0 %v381
    %2169 = vmatprep.subr.mxu0 0.0
    %2170 = vmatpush1.msra.mxu0 %v382
    %2171 = vmatprep.subr.mxu0 0.0
    %2172 = vmatpush1.msra.mxu0 %v383
    %2173 = vmatprep.subr.mxu0 0.0
    %2174 = vmatpush1.msra.mxu0 %v384
    %2175 = vmatprep.subr.mxu0 0.0
    %2176 = vmatpush1.msra.mxu0 %v385
    %2177 = vmatprep.subr.mxu0 0.0
    %2178 = vmatpush1.msra.mxu0 %v386
    %2179 = vmatprep.subr.mxu0 0.0
    %2180 = vmatpush1.msra.mxu0 %v387
    %2181 = vmatprep.subr.mxu0 0.0
    %2182 = vmatpush1.msra.mxu0 %v388
    %2183 = vmatprep.subr.mxu0 0.0
    %2184 = vmatpush1.msra.mxu0 %v389
    %2185 = vmatprep.subr.mxu0 0.0
    %2186 = vmatpush1.msra.mxu0 %v390
    %2187 = vmatprep.subr.mxu0 0.0
    %2188 = vmatpush1.msra.mxu0 %v391
    %2189 = vmatprep.subr.mxu0 0.0
    %2190 = vmatpush1.msra.mxu0 %v392
    %2191 = vmatprep.subr.mxu0 0.0
    %2192 = vmatpush1.msra.mxu0 %v393
    %2193 = vmatprep.subr.mxu0 0.0
    %2194 = vmatpush1.msra.mxu0 %v394
    %2195 = vmatprep.subr.mxu0 0.0
    %2196 = vmatpush1.msra.mxu0 %v395
    %2197 = vmatprep.subr.mxu0 0.0
    %2198 = vmatpush1.msra.mxu0 %v396
    %2199 = vmatprep.subr.mxu0 0.0
    %2200 = vmatpush1.msra.mxu0 %v397
    %2201 = vmatprep.subr.mxu0 0.0
    %2202 = vmatpush1.msra.mxu0 %v398
    %2203 = vmatprep.subr.mxu0 0.0
    %2204 = vmatpush1.msra.mxu0 %v399
    %2205 = vmatprep.subr.mxu0 0.0
    %2206 = vmatpush1.msra.mxu0 %v400
    %2207 = vmatprep.subr.mxu0 0.0
    %2208 = vmatpush1.msra.mxu0 %v401
    %2209 = vmatprep.mubr.f32.mxu0 %v67
    %2210 = vmatmul.mubr.f32.gmra.mrb[0].mxu0 %v66
    %v2211 = vpop.f32.mrb[0].mxu0
    %v2212 = vadd.f32 %v2142, %v2211
    %v2213 = vpop.f32.mrb[0].mxu0
    %2214 = vdwg.mxu0
    %2215 = vmatprep.subr.mxu0 0.0
    %2216 = vmatpush1.msra.mxu0 %v402
    %2217 = vmatprep.subr.mxu0 0.0
    %2218 = vmatpush1.msra.mxu0 %v403
    %2219 = vmatprep.subr.mxu0 0.0
    %2220 = vmatpush1.msra.mxu0 %v404
    %2221 = vmatprep.subr.mxu0 0.0
    %2222 = vmatpush1.msra.mxu0 %v405
    %2223 = vmatprep.subr.mxu0 0.0
    %2224 = vmatpush1.msra.mxu0 %v406
    %2225 = vmatprep.subr.mxu0 0.0
    %2226 = vmatpush1.msra.mxu0 %v407
    %2227 = vmatprep.subr.mxu0 0.0
    %2228 = vmatpush1.msra.mxu0 %v408
    %2229 = vmatprep.subr.mxu0 0.0
    %2230 = vmatpush1.msra.mxu0 %v409
    %2231 = vmatprep.subr.mxu0 0.0
    %2232 = vmatpush1.msra.mxu0 %v410
    %2233 = vmatprep.subr.mxu0 0.0
    %2234 = vmatpush1.msra.mxu0 %v411
    %2235 = vmatprep.subr.mxu0 0.0
    %2236 = vmatpush1.msra.mxu0 %v412
    %2237 = vmatprep.subr.mxu0 0.0
    %2238 = vmatpush1.msra.mxu0 %v413
    %2239 = vmatprep.subr.mxu0 0.0
    %2240 = vmatpush1.msra.mxu0 %v414
    %2241 = vmatprep.subr.mxu0 0.0
    %2242 = vmatpush1.msra.mxu0 %v415
    %2243 = vmatprep.subr.mxu0 0.0
    %2244 = vmatpush1.msra.mxu0 %v416
    %2245 = vmatprep.subr.mxu0 0.0
    %2246 = vmatpush1.msra.mxu0 %v417
    %2247 = vmatprep.subr.mxu0 0.0
    %2248 = vmatpush1.msra.mxu0 %v418
    %2249 = vmatprep.subr.mxu0 0.0
    %2250 = vmatpush1.msra.mxu0 %v419
    %2251 = vmatprep.subr.mxu0 0.0
    %2252 = vmatpush1.msra.mxu0 %v420
    %2253 = vmatprep.subr.mxu0 0.0
    %2254 = vmatpush1.msra.mxu0 %v421
    %2255 = vmatprep.subr.mxu0 0.0
    %2256 = vmatpush1.msra.mxu0 %v422
    %2257 = vmatprep.subr.mxu0 0.0
    %2258 = vmatpush1.msra.mxu0 %v423
    %2259 = vmatprep.subr.mxu0 0.0
    %2260 = vmatpush1.msra.mxu0 %v424
    %2261 = vmatprep.subr.mxu0 0.0
    %2262 = vmatpush1.msra.mxu0 %v425
    %2263 = vmatprep.subr.mxu0 0.0
    %2264 = vmatpush1.msra.mxu0 %v426
    %2265 = vmatprep.subr.mxu0 0.0
    %2266 = vmatpush1.msra.mxu0 %v427
    %2267 = vmatprep.subr.mxu0 0.0
    %2268 = vmatpush1.msra.mxu0 %v428
    %2269 = vmatprep.subr.mxu0 0.0
    %2270 = vmatpush1.msra.mxu0 %v429
    %2271 = vmatprep.subr.mxu0 0.0
    %2272 = vmatpush1.msra.mxu0 %v430
    %2273 = vmatprep.subr.mxu0 0.0
    %2274 = vmatpush1.msra.mxu0 %v431
    %2275 = vmatprep.subr.mxu0 0.0
    %2276 = vmatpush1.msra.mxu0 %v432
    %2277 = vmatprep.subr.mxu0 0.0
    %2278 = vmatpush1.msra.mxu0 %v433
    %2279 = vmatprep.mubr.f32.mxu0 %v69
    %2280 = vmatmul.mubr.f32.gmra.mrb[0].mxu0 %v68
    %v2281 = vpop.f32.mrb[0].mxu0
    %v2282 = vadd.f32 %v2212, %v2281
    %v2283 = vpop.f32.mrb[0].mxu0
    %2284 = vdwg.mxu0
    %2285 = vmatprep.subr.mxu0 0.0
    %2286 = vmatpush1.msra.mxu0 %v434
    %2287 = vmatprep.subr.mxu0 0.0
    %2288 = vmatpush1.msra.mxu0 %v435
    %2289 = vmatprep.subr.mxu0 0.0
    %2290 = vmatpush1.msra.mxu0 %v436
    %2291 = vmatprep.subr.mxu0 0.0
    %2292 = vmatpush1.msra.mxu0 %v437
    %2293 = vmatprep.subr.mxu0 0.0
    %2294 = vmatpush1.msra.mxu0 %v438
    %2295 = vmatprep.subr.mxu0 0.0
    %2296 = vmatpush1.msra.mxu0 %v439
    %2297 = vmatprep.subr.mxu0 0.0
    %2298 = vmatpush1.msra.mxu0 %v440
    %2299 = vmatprep.subr.mxu0 0.0
    %2300 = vmatpush1.msra.mxu0 %v441
    %2301 = vmatprep.subr.mxu0 0.0
    %2302 = vmatpush1.msra.mxu0 %v442
    %2303 = vmatprep.subr.mxu0 0.0
    %2304 = vmatpush1.msra.mxu0 %v443
    %2305 = vmatprep.subr.mxu0 0.0
    %2306 = vmatpush1.msra.mxu0 %v444
    %2307 = vmatprep.subr.mxu0 0.0
    %2308 = vmatpush1.msra.mxu0 %v445
    %2309 = vmatprep.subr.mxu0 0.0
    %2310 = vmatpush1.msra.mxu0 %v446
    %2311 = vmatprep.subr.mxu0 0.0
    %2312 = vmatpush1.msra.mxu0 %v447
    %2313 = vmatprep.subr.mxu0 0.0
    %2314 = vmatpush1.msra.mxu0 %v448
    %2315 = vmatprep.subr.mxu0 0.0
    %2316 = vmatpush1.msra.mxu0 %v449
    %2317 = vmatprep.subr.mxu0 0.0
    %2318 = vmatpush1.msra.mxu0 %v450
    %2319 = vmatprep.subr.mxu0 0.0
    %2320 = vmatpush1.msra.mxu0 %v451
    %2321 = vmatprep.subr.mxu0 0.0
    %2322 = vmatpush1.msra.mxu0 %v452
    %2323 = vmatprep.subr.mxu0 0.0
    %2324 = vmatpush1.msra.mxu0 %v453
    %2325 = vmatprep.subr.mxu0 0.0
    %2326 = vmatpush1.msra.mxu0 %v454
    %2327 = vmatprep.subr.mxu0 0.0
    %2328 = vmatpush1.msra.mxu0 %v455
    %2329 = vmatprep.subr.mxu0 0.0
    %2330 = vmatpush1.msra.mxu0 %v456
    %2331 = vmatprep.subr.mxu0 0.0
    %2332 = vmatpush1.msra.mxu0 %v457
    %2333 = vmatprep.subr.mxu0 0.0
    %2334 = vmatpush1.msra.mxu0 %v458
    %2335 = vmatprep.subr.mxu0 0.0
    %2336 = vmatpush1.msra.mxu0 %v459
    %2337 = vmatprep.subr.mxu0 0.0
    %2338 = vmatpush1.msra.mxu0 %v460
    %2339 = vmatprep.subr.mxu0 0.0
    %2340 = vmatpush1.msra.mxu0 %v461
    %2341 = vmatprep.subr.mxu0 0.0
    %2342 = vmatpush1.msra.mxu0 %v462
    %2343 = vmatprep.subr.mxu0 0.0
    %2344 = vmatpush1.msra.mxu0 %v463
    %2345 = vmatprep.subr.mxu0 0.0
    %2346 = vmatpush1.msra.mxu0 %v464
    %2347 = vmatprep.subr.mxu0 0.0
    %2348 = vmatpush1.msra.mxu0 %v465
    %2349 = vmatprep.mubr.f32.mxu0 %v71
    %2350 = vmatmul.mubr.f32.gmra.mrb[0].mxu0 %v70
    %v2351 = vpop.f32.mrb[0].mxu0
    %v2352 = vadd.f32 %v2282, %v2351
    %v2353 = vpop.f32.mrb[0].mxu0
    %2354 = vdwg.mxu0
    %2355 = vmatprep.subr.mxu0 0.0
    %2356 = vmatpush1.msra.mxu0 %v466
    %2357 = vmatprep.subr.mxu0 0.0
    %2358 = vmatpush1.msra.mxu0 %v467
    %2359 = vmatprep.subr.mxu0 0.0
    %2360 = vmatpush1.msra.mxu0 %v468
    %2361 = vmatprep.subr.mxu0 0.0
    %2362 = vmatpush1.msra.mxu0 %v469
    %2363 = vmatprep.subr.mxu0 0.0
    %2364 = vmatpush1.msra.mxu0 %v470
    %2365 = vmatprep.subr.mxu0 0.0
    %2366 = vmatpush1.msra.mxu0 %v471
    %2367 = vmatprep.subr.mxu0 0.0
    %2368 = vmatpush1.msra.mxu0 %v472
    %2369 = vmatprep.subr.mxu0 0.0
    %2370 = vmatpush1.msra.mxu0 %v473
    %2371 = vmatprep.subr.mxu0 0.0
    %2372 = vmatpush1.msra.mxu0 %v474
    %2373 = vmatprep.subr.mxu0 0.0
    %2374 = vmatpush1.msra.mxu0 %v475
    %2375 = vmatprep.subr.mxu0 0.0
    %2376 = vmatpush1.msra.mxu0 %v476
    %2377 = vmatprep.subr.mxu0 0.0
    %2378 = vmatpush1.msra.mxu0 %v477
    %2379 = vmatprep.subr.mxu0 0.0
    %2380 = vmatpush1.msra.mxu0 %v478
    %2381 = vmatprep.subr.mxu0 0.0
    %2382 = vmatpush1.msra.mxu0 %v479
    %2383 = vmatprep.subr.mxu0 0.0
    %2384 = vmatpush1.msra.mxu0 %v480
    %2385 = vmatprep.subr.mxu0 0.0
    %2386 = vmatpush1.msra.mxu0 %v481
    %2387 = vmatprep.subr.mxu0 0.0
    %2388 = vmatpush1.msra.mxu0 %v482
    %2389 = vmatprep.subr.mxu0 0.0
    %2390 = vmatpush1.msra.mxu0 %v483
    %2391 = vmatprep.subr.mxu0 0.0
    %2392 = vmatpush1.msra.mxu0 %v484
    %2393 = vmatprep.subr.mxu0 0.0
    %2394 = vmatpush1.msra.mxu0 %v485
    %2395 = vmatprep.subr.mxu0 0.0
    %2396 = vmatpush1.msra.mxu0 %v486
    %2397 = vmatprep.subr.mxu0 0.0
    %2398 = vmatpush1.msra.mxu0 %v487
    %2399 = vmatprep.subr.mxu0 0.0
    %2400 = vmatpush1.msra.mxu0 %v488
    %2401 = vmatprep.subr.mxu0 0.0
    %2402 = vmatpush1.msra.mxu0 %v489
    %2403 = vmatprep.subr.mxu0 0.0
    %2404 = vmatpush1.msra.mxu0 %v490
    %2405 = vmatprep.subr.mxu0 0.0
    %2406 = vmatpush1.msra.mxu0 %v491
    %2407 = vmatprep.subr.mxu0 0.0
    %2408 = vmatpush1.msra.mxu0 %v492
    %2409 = vmatprep.subr.mxu0 0.0
    %2410 = vmatpush1.msra.mxu0 %v493
    %2411 = vmatprep.subr.mxu0 0.0
    %2412 = vmatpush1.msra.mxu0 %v494
    %2413 = vmatprep.subr.mxu0 0.0
    %2414 = vmatpush1.msra.mxu0 %v495
    %2415 = vmatprep.subr.mxu0 0.0
    %2416 = vmatpush1.msra.mxu0 %v496
    %2417 = vmatprep.subr.mxu0 0.0
    %2418 = vmatpush1.msra.mxu0 %v497
    %2419 = vmatprep.mubr.f32.mxu0 %v73
    %2420 = vmatmul.mubr.f32.gmra.mrb[0].mxu0 %v72
    %v2421 = vpop.f32.mrb[0].mxu0
    %v2422 = vadd.f32 %v2352, %v2421
    %v2423 = vpop.f32.mrb[0].mxu0
    %2424 = vdwg.mxu0
    %2425 = vmatprep.subr.mxu0 0.0
    %2426 = vmatpush1.msra.mxu0 %v498
    %2427 = vmatprep.subr.mxu0 0.0
    %2428 = vmatpush1.msra.mxu0 %v499
    %2429 = vmatprep.subr.mxu0 0.0
    %2430 = vmatpush1.msra.mxu0 %v500
    %2431 = vmatprep.subr.mxu0 0.0
    %2432 = vmatpush1.msra.mxu0 %v501
    %2433 = vmatprep.subr.mxu0 0.0
    %2434 = vmatpush1.msra.mxu0 %v502
    %2435 = vmatprep.subr.mxu0 0.0
    %2436 = vmatpush1.msra.mxu0 %v503
    %2437 = vmatprep.subr.mxu0 0.0
    %2438 = vmatpush1.msra.mxu0 %v504
    %2439 = vmatprep.subr.mxu0 0.0
    %2440 = vmatpush1.msra.mxu0 %v505
    %2441 = vmatprep.subr.mxu0 0.0
    %2442 = vmatpush1.msra.mxu0 %v506
    %2443 = vmatprep.subr.mxu0 0.0
    %2444 = vmatpush1.msra.mxu0 %v507
    %2445 = vmatprep.subr.mxu0 0.0
    %2446 = vmatpush1.msra.mxu0 %v508
    %2447 = vmatprep.subr.mxu0 0.0
    %2448 = vmatpush1.msra.mxu0 %v509
    %2449 = vmatprep.subr.mxu0 0.0
    %2450 = vmatpush1.msra.mxu0 %v510
    %2451 = vmatprep.subr.mxu0 0.0
    %2452 = vmatpush1.msra.mxu0 %v511
    %2453 = vmatprep.subr.mxu0 0.0
    %2454 = vmatpush1.msra.mxu0 %v512
    %2455 = vmatprep.subr.mxu0 0.0
    %2456 = vmatpush1.msra.mxu0 %v513
    %2457 = vmatprep.subr.mxu0 0.0
    %2458 = vmatpush1.msra.mxu0 %v514
    %2459 = vmatprep.subr.mxu0 0.0
    %2460 = vmatpush1.msra.mxu0 %v515
    %2461 = vmatprep.subr.mxu0 0.0
    %2462 = vmatpush1.msra.mxu0 %v516
    %2463 = vmatprep.subr.mxu0 0.0
    %2464 = vmatpush1.msra.mxu0 %v517
    %2465 = vmatprep.subr.mxu0 0.0
    %2466 = vmatpush1.msra.mxu0 %v518
    %2467 = vmatprep.subr.mxu0 0.0
    %2468 = vmatpush1.msra.mxu0 %v519
    %2469 = vmatprep.subr.mxu0 0.0
    %2470 = vmatpush1.msra.mxu0 %v520
    %2471 = vmatprep.subr.mxu0 0.0
    %2472 = vmatpush1.msra.mxu0 %v521
    %2473 = vmatprep.subr.mxu0 0.0
    %2474 = vmatpush1.msra.mxu0 %v522
    %2475 = vmatprep.subr.mxu0 0.0
    %2476 = vmatpush1.msra.mxu0 %v523
    %2477 = vmatprep.subr.mxu0 0.0
    %2478 = vmatpush1.msra.mxu0 %v524
    %2479 = vmatprep.subr.mxu0 0.0
    %2480 = vmatpush1.msra.mxu0 %v525
    %2481 = vmatprep.subr.mxu0 0.0
    %2482 = vmatpush1.msra.mxu0 %v526
    %2483 = vmatprep.subr.mxu0 0.0
    %2484 = vmatpush1.msra.mxu0 %v527
    %2485 = vmatprep.subr.mxu0 0.0
    %2486 = vmatpush1.msra.mxu0 %v528
    %2487 = vmatprep.subr.mxu0 0.0
    %2488 = vmatpush1.msra.mxu0 %v529
    %2489 = vmatprep.mubr.f32.mxu0 %v75
    %2490 = vmatmul.mubr.f32.gmra.mrb[0].mxu0 %v74
    %v2491 = vpop.f32.mrb[0].mxu0
    %v2492 = vadd.f32 %v2422, %v2491
    %v2493 = vpop.f32.mrb[0].mxu0
    %2494 = vdwg.mxu0
    %2495 = vmatprep.subr.mxu0 0.0
    %2496 = vmatpush1.msra.mxu0 %v530
    %2497 = vmatprep.subr.mxu0 0.0
    %2498 = vmatpush1.msra.mxu0 %v531
    %2499 = vmatprep.subr.mxu0 0.0
    %2500 = vmatpush1.msra.mxu0 %v532
    %2501 = vmatprep.subr.mxu0 0.0
    %2502 = vmatpush1.msra.mxu0 %v533
    %2503 = vmatprep.subr.mxu0 0.0
    %2504 = vmatpush1.msra.mxu0 %v534
    %2505 = vmatprep.subr.mxu0 0.0
    %2506 = vmatpush1.msra.mxu0 %v535
    %2507 = vmatprep.subr.mxu0 0.0
    %2508 = vmatpush1.msra.mxu0 %v536
    %2509 = vmatprep.subr.mxu0 0.0
    %2510 = vmatpush1.msra.mxu0 %v537
    %2511 = vmatprep.subr.mxu0 0.0
    %2512 = vmatpush1.msra.mxu0 %v538
    %2513 = vmatprep.subr.mxu0 0.0
    %2514 = vmatpush1.msra.mxu0 %v539
    %2515 = vmatprep.subr.mxu0 0.0
    %2516 = vmatpush1.msra.mxu0 %v540
    %2517 = vmatprep.subr.mxu0 0.0
    %2518 = vmatpush1.msra.mxu0 %v541
    %2519 = vmatprep.subr.mxu0 0.0
    %2520 = vmatpush1.msra.mxu0 %v542
    %2521 = vmatprep.subr.mxu0 0.0
    %2522 = vmatpush1.msra.mxu0 %v543
    %2523 = vmatprep.subr.mxu0 0.0
    %2524 = vmatpush1.msra.mxu0 %v544
    %2525 = vmatprep.subr.mxu0 0.0
    %2526 = vmatpush1.msra.mxu0 %v545
    %2527 = vmatprep.subr.mxu0 0.0
    %2528 = vmatpush1.msra.mxu0 %v546
    %2529 = vmatprep.subr.mxu0 0.0
    %2530 = vmatpush1.msra.mxu0 %v547
    %2531 = vmatprep.subr.mxu0 0.0
    %2532 = vmatpush1.msra.mxu0 %v548
    %2533 = vmatprep.subr.mxu0 0.0
    %2534 = vmatpush1.msra.mxu0 %v549
    %2535 = vmatprep.subr.mxu0 0.0
    %2536 = vmatpush1.msra.mxu0 %v550
    %2537 = vmatprep.subr.mxu0 0.0
    %2538 = vmatpush1.msra.mxu0 %v551
    %2539 = vmatprep.subr.mxu0 0.0
    %2540 = vmatpush1.msra.mxu0 %v552
    %2541 = vmatprep.subr.mxu0 0.0
    %2542 = vmatpush1.msra.mxu0 %v553
    %2543 = vmatprep.subr.mxu0 0.0
    %2544 = vmatpush1.msra.mxu0 %v554
    %2545 = vmatprep.subr.mxu0 0.0
    %2546 = vmatpush1.msra.mxu0 %v555
    %2547 = vmatprep.subr.mxu0 0.0
    %2548 = vmatpush1.msra.mxu0 %v556
    %2549 = vmatprep.subr.mxu0 0.0
    %2550 = vmatpush1.msra.mxu0 %v557
    %2551 = vmatprep.subr.mxu0 0.0
    %2552 = vmatpush1.msra.mxu0 %v558
    %2553 = vmatprep.subr.mxu0 0.0
    %2554 = vmatpush1.msra.mxu0 %v559
    %2555 = vmatprep.subr.mxu0 0.0
    %2556 = vmatpush1.msra.mxu0 %v560
    %2557 = vmatprep.subr.mxu0 0.0
    %2558 = vmatpush1.msra.mxu0 %v561
    %2559 = vmatprep.mubr.f32.mxu0 %v77
    %2560 = vmatmul.mubr.f32.gmra.mrb[0].mxu0 %v76
    %v2561 = vpop.f32.mrb[0].mxu0
    %v2562 = vadd.f32 %v2492, %v2561
    %v2563 = vpop.f32.mrb[0].mxu0
    %2564 = vdwg.mxu0
    %2565 = vmatprep.subr.mxu0 0.0
    %2566 = vmatpush1.msra.mxu0 %v562
    %2567 = vmatprep.subr.mxu0 0.0
    %2568 = vmatpush1.msra.mxu0 %v563
    %2569 = vmatprep.subr.mxu0 0.0
    %2570 = vmatpush1.msra.mxu0 %v564
    %2571 = vmatprep.subr.mxu0 0.0
    %2572 = vmatpush1.msra.mxu0 %v565
    %2573 = vmatprep.subr.mxu0 0.0
    %2574 = vmatpush1.msra.mxu0 %v566
    %2575 = vmatprep.subr.mxu0 0.0
    %2576 = vmatpush1.msra.mxu0 %v567
    %2577 = vmatprep.subr.mxu0 0.0
    %2578 = vmatpush1.msra.mxu0 %v568
    %2579 = vmatprep.subr.mxu0 0.0
    %2580 = vmatpush1.msra.mxu0 %v569
    %2581 = vmatprep.subr.mxu0 0.0
    %2582 = vmatpush1.msra.mxu0 %v570
    %2583 = vmatprep.subr.mxu0 0.0
    %2584 = vmatpush1.msra.mxu0 %v571
    %2585 = vmatprep.subr.mxu0 0.0
    %2586 = vmatpush1.msra.mxu0 %v572
    %2587 = vmatprep.subr.mxu0 0.0
    %2588 = vmatpush1.msra.mxu0 %v573
    %2589 = vmatprep.subr.mxu0 0.0
    %2590 = vmatpush1.msra.mxu0 %v574
    %2591 = vmatprep.subr.mxu0 0.0
    %2592 = vmatpush1.msra.mxu0 %v575
    %2593 = vmatprep.subr.mxu0 0.0
    %2594 = vmatpush1.msra.mxu0 %v576
    %2595 = vmatprep.subr.mxu0 0.0
    %2596 = vmatpush1.msra.mxu0 %v577
    %2597 = vmatprep.subr.mxu0 0.0
    %2598 = vmatpush1.msra.mxu0 %v578
    %2599 = vmatprep.subr.mxu0 0.0
    %2600 = vmatpush1.msra.mxu0 %v579
    %2601 = vmatprep.subr.mxu0 0.0
    %2602 = vmatpush1.msra.mxu0 %v580
    %2603 = vmatprep.subr.mxu0 0.0
    %2604 = vmatpush1.msra.mxu0 %v581
    %2605 = vmatprep.subr.mxu0 0.0
    %2606 = vmatpush1.msra.mxu0 %v582
    %2607 = vmatprep.subr.mxu0 0.0
    %2608 = vmatpush1.msra.mxu0 %v583
    %2609 = vmatprep.subr.mxu0 0.0
    %2610 = vmatpush1.msra.mxu0 %v584
    %2611 = vmatprep.subr.mxu0 0.0
    %2612 = vmatpush1.msra.mxu0 %v585
    %2613 = vmatprep.subr.mxu0 0.0
    %2614 = vmatpush1.msra.mxu0 %v586
    %2615 = vmatprep.subr.mxu0 0.0
    %2616 = vmatpush1.msra.mxu0 %v587
    %2617 = vmatprep.subr.mxu0 0.0
    %2618 = vmatpush1.msra.mxu0 %v588
    %2619 = vmatprep.subr.mxu0 0.0
    %2620 = vmatpush1.msra.mxu0 %v589
    %2621 = vmatprep.subr.mxu0 0.0
    %2622 = vmatpush1.msra.mxu0 %v590
    %2623 = vmatprep.subr.mxu0 0.0
    %2624 = vmatpush1.msra.mxu0 %v591
    %2625 = vmatprep.subr.mxu0 0.0
    %2626 = vmatpush1.msra.mxu0 %v592
    %2627 = vmatprep.subr.mxu0 0.0
    %2628 = vmatpush1.msra.mxu0 %v593
    %2629 = vmatprep.mubr.f32.mxu0 %v79
    %2630 = vmatmul.mubr.f32.gmra.mrb[0].mxu0 %v78
    %v2631 = vpop.f32.mrb[0].mxu0
    %v2632 = vadd.f32 %v2562, %v2631
    %v2633 = vpop.f32.mrb[0].mxu0
    %2634 = vdwg.mxu0
    %2635 = vmatprep.subr.mxu0 0.0
    %2636 = vmatpush1.msra.mxu0 %v594
    %2637 = vmatprep.subr.mxu0 0.0
    %2638 = vmatpush1.msra.mxu0 %v595
    %2639 = vmatprep.subr.mxu0 0.0
    %2640 = vmatpush1.msra.mxu0 %v596
    %2641 = vmatprep.subr.mxu0 0.0
    %2642 = vmatpush1.msra.mxu0 %v597
    %2643 = vmatprep.subr.mxu0 0.0
    %2644 = vmatpush1.msra.mxu0 %v598
    %2645 = vmatprep.subr.mxu0 0.0
    %2646 = vmatpush1.msra.mxu0 %v599
    %2647 = vmatprep.subr.mxu0 0.0
    %2648 = vmatpush1.msra.mxu0 %v600
    %2649 = vmatprep.subr.mxu0 0.0
    %2650 = vmatpush1.msra.mxu0 %v601
    %2651 = vmatprep.subr.mxu0 0.0
    %2652 = vmatpush1.msra.mxu0 %v602
    %2653 = vmatprep.subr.mxu0 0.0
    %2654 = vmatpush1.msra.mxu0 %v603
    %2655 = vmatprep.subr.mxu0 0.0
    %2656 = vmatpush1.msra.mxu0 %v604
    %2657 = vmatprep.subr.mxu0 0.0
    %2658 = vmatpush1.msra.mxu0 %v605
    %2659 = vmatprep.subr.mxu0 0.0
    %2660 = vmatpush1.msra.mxu0 %v606
    %2661 = vmatprep.subr.mxu0 0.0
    %2662 = vmatpush1.msra.mxu0 %v607
    %2663 = vmatprep.subr.mxu0 0.0
    %2664 = vmatpush1.msra.mxu0 %v608
    %2665 = vmatprep.subr.mxu0 0.0
    %2666 = vmatpush1.msra.mxu0 %v609
    %2667 = vmatprep.subr.mxu0 0.0
    %2668 = vmatpush1.msra.mxu0 %v610
    %2669 = vmatprep.subr.mxu0 0.0
    %2670 = vmatpush1.msra.mxu0 %v611
    %2671 = vmatprep.subr.mxu0 0.0
    %2672 = vmatpush1.msra.mxu0 %v612
    %2673 = vmatprep.subr.mxu0 0.0
    %2674 = vmatpush1.msra.mxu0 %v613
    %2675 = vmatprep.subr.mxu0 0.0
    %2676 = vmatpush1.msra.mxu0 %v614
    %2677 = vmatprep.subr.mxu0 0.0
    %2678 = vmatpush1.msra.mxu0 %v615
    %2679 = vmatprep.subr.mxu0 0.0
    %2680 = vmatpush1.msra.mxu0 %v616
    %2681 = vmatprep.subr.mxu0 0.0
    %2682 = vmatpush1.msra.mxu0 %v617
    %2683 = vmatprep.subr.mxu0 0.0
    %2684 = vmatpush1.msra.mxu0 %v618
    %2685 = vmatprep.subr.mxu0 0.0
    %2686 = vmatpush1.msra.mxu0 %v619
    %2687 = vmatprep.subr.mxu0 0.0
    %2688 = vmatpush1.msra.mxu0 %v620
    %2689 = vmatprep.subr.mxu0 0.0
    %2690 = vmatpush1.msra.mxu0 %v621
    %2691 = vmatprep.subr.mxu0 0.0
    %2692 = vmatpush1.msra.mxu0 %v622
    %2693 = vmatprep.subr.mxu0 0.0
    %2694 = vmatpush1.msra.mxu0 %v623
    %2695 = vmatprep.subr.mxu0 0.0
    %2696 = vmatpush1.msra.mxu0 %v624
    %2697 = vmatprep.subr.mxu0 0.0
    %2698 = vmatpush1.msra.mxu0 %v625
    %2699 = vmatprep.mubr.f32.mxu0 %v81
    %2700 = vmatmul.mubr.f32.gmra.mrb[0].mxu0 %v80
    %v2701 = vpop.f32.mrb[0].mxu0
    %v2702 = vadd.f32 %v2632, %v2701
    %v2703 = vpop.f32.mrb[0].mxu0
    %2704 = vdwg.mxu0
    %2705 = vmatprep.subr.mxu0 0.0
    %2706 = vmatpush1.msra.mxu0 %v626
    %2707 = vmatprep.subr.mxu0 0.0
    %2708 = vmatpush1.msra.mxu0 %v627
    %2709 = vmatprep.subr.mxu0 0.0
    %2710 = vmatpush1.msra.mxu0 %v628
    %2711 = vmatprep.subr.mxu0 0.0
    %2712 = vmatpush1.msra.mxu0 %v629
    %2713 = vmatprep.subr.mxu0 0.0
    %2714 = vmatpush1.msra.mxu0 %v630
    %2715 = vmatprep.subr.mxu0 0.0
    %2716 = vmatpush1.msra.mxu0 %v631
    %2717 = vmatprep.subr.mxu0 0.0
    %2718 = vmatpush1.msra.mxu0 %v632
    %2719 = vmatprep.subr.mxu0 0.0
    %2720 = vmatpush1.msra.mxu0 %v633
    %2721 = vmatprep.subr.mxu0 0.0
    %2722 = vmatpush1.msra.mxu0 %v634
    %2723 = vmatprep.subr.mxu0 0.0
    %2724 = vmatpush1.msra.mxu0 %v635
    %2725 = vmatprep.subr.mxu0 0.0
    %2726 = vmatpush1.msra.mxu0 %v636
    %2727 = vmatprep.subr.mxu0 0.0
    %2728 = vmatpush1.msra.mxu0 %v637
    %2729 = vmatprep.subr.mxu0 0.0
    %2730 = vmatpush1.msra.mxu0 %v638
    %2731 = vmatprep.subr.mxu0 0.0
    %2732 = vmatpush1.msra.mxu0 %v639
    %2733 = vmatprep.subr.mxu0 0.0
    %2734 = vmatpush1.msra.mxu0 %v640
    %2735 = vmatprep.subr.mxu0 0.0
    %2736 = vmatpush1.msra.mxu0 %v641
    %2737 = vmatprep.subr.mxu0 0.0
    %2738 = vmatpush1.msra.mxu0 %v642
    %2739 = vmatprep.subr.mxu0 0.0
    %2740 = vmatpush1.msra.mxu0 %v643
    %2741 = vmatprep.subr.mxu0 0.0
    %2742 = vmatpush1.msra.mxu0 %v644
    %2743 = vmatprep.subr.mxu0 0.0
    %2744 = vmatpush1.msra.mxu0 %v645
    %2745 = vmatprep.subr.mxu0 0.0
    %2746 = vmatpush1.msra.mxu0 %v646
    %2747 = vmatprep.subr.mxu0 0.0
    %2748 = vmatpush1.msra.mxu0 %v647
    %2749 = vmatprep.subr.mxu0 0.0
    %2750 = vmatpush1.msra.mxu0 %v648
    %2751 = vmatprep.subr.mxu0 0.0
    %2752 = vmatpush1.msra.mxu0 %v649
    %2753 = vmatprep.subr.mxu0 0.0
    %2754 = vmatpush1.msra.mxu0 %v650
    %2755 = vmatprep.subr.mxu0 0.0
    %2756 = vmatpush1.msra.mxu0 %v651
    %2757 = vmatprep.subr.mxu0 0.0
    %2758 = vmatpush1.msra.mxu0 %v652
    %2759 = vmatprep.subr.mxu0 0.0
    %2760 = vmatpush1.msra.mxu0 %v653
    %2761 = vmatprep.subr.mxu0 0.0
    %2762 = vmatpush1.msra.mxu0 %v654
    %2763 = vmatprep.subr.mxu0 0.0
    %2764 = vmatpush1.msra.mxu0 %v655
    %2765 = vmatprep.subr.mxu0 0.0
    %2766 = vmatpush1.msra.mxu0 %v656
    %2767 = vmatprep.subr.mxu0 0.0
    %2768 = vmatpush1.msra.mxu0 %v657
    %2769 = vmatprep.mubr.f32.mxu0 %v83
    %2770 = vmatmul.mubr.f32.gmra.mrb[0].mxu0 %v82
    %v2771 = vpop.f32.mrb[0].mxu0
    %v2772 = vadd.f32 %v2702, %v2771
    %v2773 = vpop.f32.mrb[0].mxu0
    %2774 = vdwg.mxu0
    %2775 = vmatprep.subr.mxu0 0.0
    %2776 = vmatpush1.msra.mxu0 %v658
    %2777 = vmatprep.subr.mxu0 0.0
    %2778 = vmatpush1.msra.mxu0 %v659
    %2779 = vmatprep.subr.mxu0 0.0
    %2780 = vmatpush1.msra.mxu0 %v660
    %2781 = vmatprep.subr.mxu0 0.0
    %2782 = vmatpush1.msra.mxu0 %v661
    %2783 = vmatprep.subr.mxu0 0.0
    %2784 = vmatpush1.msra.mxu0 %v662
    %2785 = vmatprep.subr.mxu0 0.0
    %2786 = vmatpush1.msra.mxu0 %v663
    %2787 = vmatprep.subr.mxu0 0.0
    %2788 = vmatpush1.msra.mxu0 %v664
    %2789 = vmatprep.subr.mxu0 0.0
    %2790 = vmatpush1.msra.mxu0 %v665
    %2791 = vmatprep.subr.mxu0 0.0
    %2792 = vmatpush1.msra.mxu0 %v666
    %2793 = vmatprep.subr.mxu0 0.0
    %2794 = vmatpush1.msra.mxu0 %v667
    %2795 = vmatprep.subr.mxu0 0.0
    %2796 = vmatpush1.msra.mxu0 %v668
    %2797 = vmatprep.subr.mxu0 0.0
    %2798 = vmatpush1.msra.mxu0 %v669
    %2799 = vmatprep.subr.mxu0 0.0
    %2800 = vmatpush1.msra.mxu0 %v670
    %2801 = vmatprep.subr.mxu0 0.0
    %2802 = vmatpush1.msra.mxu0 %v671
    %2803 = vmatprep.subr.mxu0 0.0
    %2804 = vmatpush1.msra.mxu0 %v672
    %2805 = vmatprep.subr.mxu0 0.0
    %2806 = vmatpush1.msra.mxu0 %v673
    %2807 = vmatprep.subr.mxu0 0.0
    %2808 = vmatpush1.msra.mxu0 %v674
    %2809 = vmatprep.subr.mxu0 0.0
    %2810 = vmatpush1.msra.mxu0 %v675
    %2811 = vmatprep.subr.mxu0 0.0
    %2812 = vmatpush1.msra.mxu0 %v676
    %2813 = vmatprep.subr.mxu0 0.0
    %2814 = vmatpush1.msra.mxu0 %v677
    %2815 = vmatprep.subr.mxu0 0.0
    %2816 = vmatpush1.msra.mxu0 %v678
    %2817 = vmatprep.subr.mxu0 0.0
    %2818 = vmatpush1.msra.mxu0 %v679
    %2819 = vmatprep.subr.mxu0 0.0
    %2820 = vmatpush1.msra.mxu0 %v680
    %2821 = vmatprep.subr.mxu0 0.0
    %2822 = vmatpush1.msra.mxu0 %v681
    %2823 = vmatprep.subr.mxu0 0.0
    %2824 = vmatpush1.msra.mxu0 %v682
    %2825 = vmatprep.subr.mxu0 0.0
    %2826 = vmatpush1.msra.mxu0 %v683
    %2827 = vmatprep.subr.mxu0 0.0
    %2828 = vmatpush1.msra.mxu0 %v684
    %2829 = vmatprep.subr.mxu0 0.0
    %2830 = vmatpush1.msra.mxu0 %v685
    %2831 = vmatprep.subr.mxu0 0.0
    %2832 = vmatpush1.msra.mxu0 %v686
    %2833 = vmatprep.subr.mxu0 0.0
    %2834 = vmatpush1.msra.mxu0 %v687
    %2835 = vmatprep.subr.mxu0 0.0
    %2836 = vmatpush1.msra.mxu0 %v688
    %2837 = vmatprep.subr.mxu0 0.0
    %2838 = vmatpush1.msra.mxu0 %v689
    %2839 = vmatprep.mubr.f32.mxu0 %v85
    %2840 = vmatmul.mubr.f32.gmra.mrb[0].mxu0 %v84
    %v2841 = vpop.f32.mrb[0].mxu0
    %v2842 = vadd.f32 %v2772, %v2841
    %v2843 = vpop.f32.mrb[0].mxu0
    %2844 = vdwg.mxu0
    %2845 = vmatprep.subr.mxu0 0.0
    %2846 = vmatpush1.msra.mxu0 %v690
    %2847 = vmatprep.subr.mxu0 0.0
    %2848 = vmatpush1.msra.mxu0 %v691
    %2849 = vmatprep.subr.mxu0 0.0
    %2850 = vmatpush1.msra.mxu0 %v692
    %2851 = vmatprep.subr.mxu0 0.0
    %2852 = vmatpush1.msra.mxu0 %v693
    %2853 = vmatprep.subr.mxu0 0.0
    %2854 = vmatpush1.msra.mxu0 %v694
    %2855 = vmatprep.subr.mxu0 0.0
    %2856 = vmatpush1.msra.mxu0 %v695
    %2857 = vmatprep.subr.mxu0 0.0
    %2858 = vmatpush1.msra.mxu0 %v696
    %2859 = vmatprep.subr.mxu0 0.0
    %2860 = vmatpush1.msra.mxu0 %v697
    %2861 = vmatprep.subr.mxu0 0.0
    %2862 = vmatpush1.msra.mxu0 %v698
    %2863 = vmatprep.subr.mxu0 0.0
    %2864 = vmatpush1.msra.mxu0 %v699
    %2865 = vmatprep.subr.mxu0 0.0
    %2866 = vmatpush1.msra.mxu0 %v700
    %2867 = vmatprep.subr.mxu0 0.0
    %2868 = vmatpush1.msra.mxu0 %v701
    %2869 = vmatprep.subr.mxu0 0.0
    %2870 = vmatpush1.msra.mxu0 %v702
    %2871 = vmatprep.subr.mxu0 0.0
    %2872 = vmatpush1.msra.mxu0 %v703
    %2873 = vmatprep.subr.mxu0 0.0
    %2874 = vmatpush1.msra.mxu0 %v704
    %2875 = vmatprep.subr.mxu0 0.0
    %2876 = vmatpush1.msra.mxu0 %v705
    %2877 = vmatprep.subr.mxu0 0.0
    %2878 = vmatpush1.msra.mxu0 %v706
    %2879 = vmatprep.subr.mxu0 0.0
    %2880 = vmatpush1.msra.mxu0 %v707
    %2881 = vmatprep.subr.mxu0 0.0
    %2882 = vmatpush1.msra.mxu0 %v708
    %2883 = vmatprep.subr.mxu0 0.0
    %2884 = vmatpush1.msra.mxu0 %v709
    %2885 = vmatprep.subr.mxu0 0.0
    %2886 = vmatpush1.msra.mxu0 %v710
    %2887 = vmatprep.subr.mxu0 0.0
    %2888 = vmatpush1.msra.mxu0 %v711
    %2889 = vmatprep.subr.mxu0 0.0
    %2890 = vmatpush1.msra.mxu0 %v712
    %2891 = vmatprep.subr.mxu0 0.0
    %2892 = vmatpush1.msra.mxu0 %v713
    %2893 = vmatprep.subr.mxu0 0.0
    %2894 = vmatpush1.msra.mxu0 %v714
    %2895 = vmatprep.subr.mxu0 0.0
    %2896 = vmatpush1.msra.mxu0 %v715
    %2897 = vmatprep.subr.mxu0 0.0
    %2898 = vmatpush1.msra.mxu0 %v716
    %2899 = vmatprep.subr.mxu0 0.0
    %2900 = vmatpush1.msra.mxu0 %v717
    %2901 = vmatprep.subr.mxu0 0.0
    %2902 = vmatpush1.msra.mxu0 %v718
    %2903 = vmatprep.subr.mxu0 0.0
    %2904 = vmatpush1.msra.mxu0 %v719
    %2905 = vmatprep.subr.mxu0 0.0
    %2906 = vmatpush1.msra.mxu0 %v720
    %2907 = vmatprep.subr.mxu0 0.0
    %2908 = vmatpush1.msra.mxu0 %v721
    %2909 = vmatprep.mubr.f32.mxu0 %v87
    %2910 = vmatmul.mubr.f32.gmra.mrb[0].mxu0 %v86
    %v2911 = vpop.f32.mrb[0].mxu0
    %v2912 = vadd.f32 %v2842, %v2911
    %v2913 = vpop.f32.mrb[0].mxu0
    %2914 = vdwg.mxu0
    %2915 = vmatprep.subr.mxu0 0.0
    %2916 = vmatpush1.msra.mxu0 %v722
    %2917 = vmatprep.subr.mxu0 0.0
    %2918 = vmatpush1.msra.mxu0 %v723
    %2919 = vmatprep.subr.mxu0 0.0
    %2920 = vmatpush1.msra.mxu0 %v724
    %2921 = vmatprep.subr.mxu0 0.0
    %2922 = vmatpush1.msra.mxu0 %v725
    %2923 = vmatprep.subr.mxu0 0.0
    %2924 = vmatpush1.msra.mxu0 %v726
    %2925 = vmatprep.subr.mxu0 0.0
    %2926 = vmatpush1.msra.mxu0 %v727
    %2927 = vmatprep.subr.mxu0 0.0
    %2928 = vmatpush1.msra.mxu0 %v728
    %2929 = vmatprep.subr.mxu0 0.0
    %2930 = vmatpush1.msra.mxu0 %v729
    %2931 = vmatprep.subr.mxu0 0.0
    %2932 = vmatpush1.msra.mxu0 %v730
    %2933 = vmatprep.subr.mxu0 0.0
    %2934 = vmatpush1.msra.mxu0 %v731
    %2935 = vmatprep.subr.mxu0 0.0
    %2936 = vmatpush1.msra.mxu0 %v732
    %2937 = vmatprep.subr.mxu0 0.0
    %2938 = vmatpush1.msra.mxu0 %v733
    %2939 = vmatprep.subr.mxu0 0.0
    %2940 = vmatpush1.msra.mxu0 %v734
    %2941 = vmatprep.subr.mxu0 0.0
    %2942 = vmatpush1.msra.mxu0 %v735
    %2943 = vmatprep.subr.mxu0 0.0
    %2944 = vmatpush1.msra.mxu0 %v736
    %2945 = vmatprep.subr.mxu0 0.0
    %2946 = vmatpush1.msra.mxu0 %v737
    %2947 = vmatprep.subr.mxu0 0.0
    %2948 = vmatpush1.msra.mxu0 %v738
    %2949 = vmatprep.subr.mxu0 0.0
    %2950 = vmatpush1.msra.mxu0 %v739
    %2951 = vmatprep.subr.mxu0 0.0
    %2952 = vmatpush1.msra.mxu0 %v740
    %2953 = vmatprep.subr.mxu0 0.0
    %2954 = vmatpush1.msra.mxu0 %v741
    %2955 = vmatprep.subr.mxu0 0.0
    %2956 = vmatpush1.msra.mxu0 %v742
    %2957 = vmatprep.subr.mxu0 0.0
    %2958 = vmatpush1.msra.mxu0 %v743
    %2959 = vmatprep.subr.mxu0 0.0
    %2960 = vmatpush1.msra.mxu0 %v744
    %2961 = vmatprep.subr.mxu0 0.0
    %2962 = vmatpush1.msra.mxu0 %v745
    %2963 = vmatprep.subr.mxu0 0.0
    %2964 = vmatpush1.msra.mxu0 %v746
    %2965 = vmatprep.subr.mxu0 0.0
    %2966 = vmatpush1.msra.mxu0 %v747
    %2967 = vmatprep.subr.mxu0 0.0
    %2968 = vmatpush1.msra.mxu0 %v748
    %2969 = vmatprep.subr.mxu0 0.0
    %2970 = vmatpush1.msra.mxu0 %v749
    %2971 = vmatprep.subr.mxu0 0.0
    %2972 = vmatpush1.msra.mxu0 %v750
    %2973 = vmatprep.subr.mxu0 0.0
    %2974 = vmatpush1.msra.mxu0 %v751
    %2975 = vmatprep.subr.mxu0 0.0
    %2976 = vmatpush1.msra.mxu0 %v752
    %2977 = vmatprep.subr.mxu0 0.0
    %2978 = vmatpush1.msra.mxu0 %v753
    %2979 = vmatprep.mubr.f32.mxu0 %v89
    %2980 = vmatmul.mubr.f32.gmra.mrb[0].mxu0 %v88
    %v2981 = vpop.f32.mrb[0].mxu0
    %v2982 = vadd.f32 %v2912, %v2981
    %v2983 = vpop.f32.mrb[0].mxu0
    %2984 = vdwg.mxu0
    %2985 = vmatprep.subr.mxu0 0.0
    %2986 = vmatpush1.msra.mxu0 %v754
    %2987 = vmatprep.subr.mxu0 0.0
    %2988 = vmatpush1.msra.mxu0 %v755
    %2989 = vmatprep.subr.mxu0 0.0
    %2990 = vmatpush1.msra.mxu0 %v756
    %2991 = vmatprep.subr.mxu0 0.0
    %2992 = vmatpush1.msra.mxu0 %v757
    %2993 = vmatprep.subr.mxu0 0.0
    %2994 = vmatpush1.msra.mxu0 %v758
    %2995 = vmatprep.subr.mxu0 0.0
    %2996 = vmatpush1.msra.mxu0 %v759
    %2997 = vmatprep.subr.mxu0 0.0
    %2998 = vmatpush1.msra.mxu0 %v760
    %2999 = vmatprep.subr.mxu0 0.0
    %3000 = vmatpush1.msra.mxu0 %v761
    %3001 = vmatprep.subr.mxu0 0.0
    %3002 = vmatpush1.msra.mxu0 %v762
    %3003 = vmatprep.subr.mxu0 0.0
    %3004 = vmatpush1.msra.mxu0 %v763
    %3005 = vmatprep.subr.mxu0 0.0
    %3006 = vmatpush1.msra.mxu0 %v764
    %3007 = vmatprep.subr.mxu0 0.0
    %3008 = vmatpush1.msra.mxu0 %v765
    %3009 = vmatprep.subr.mxu0 0.0
    %3010 = vmatpush1.msra.mxu0 %v766
    %3011 = vmatprep.subr.mxu0 0.0
    %3012 = vmatpush1.msra.mxu0 %v767
    %3013 = vmatprep.subr.mxu0 0.0
    %3014 = vmatpush1.msra.mxu0 %v768
    %3015 = vmatprep.subr.mxu0 0.0
    %3016 = vmatpush1.msra.mxu0 %v769
    %3017 = vmatprep.subr.mxu0 0.0
    %3018 = vmatpush1.msra.mxu0 %v770
    %3019 = vmatprep.subr.mxu0 0.0
    %3020 = vmatpush1.msra.mxu0 %v771
    %3021 = vmatprep.subr.mxu0 0.0
    %3022 = vmatpush1.msra.mxu0 %v772
    %3023 = vmatprep.subr.mxu0 0.0
    %3024 = vmatpush1.msra.mxu0 %v773
    %3025 = vmatprep.subr.mxu0 0.0
    %3026 = vmatpush1.msra.mxu0 %v774
    %3027 = vmatprep.subr.mxu0 0.0
    %3028 = vmatpush1.msra.mxu0 %v775
    %3029 = vmatprep.subr.mxu0 0.0
    %3030 = vmatpush1.msra.mxu0 %v776
    %3031 = vmatprep.subr.mxu0 0.0
    %3032 = vmatpush1.msra.mxu0 %v777
    %3033 = vmatprep.subr.mxu0 0.0
    %3034 = vmatpush1.msra.mxu0 %v778
    %3035 = vmatprep.subr.mxu0 0.0
    %3036 = vmatpush1.msra.mxu0 %v779
    %3037 = vmatprep.subr.mxu0 0.0
    %3038 = vmatpush1.msra.mxu0 %v780
    %3039 = vmatprep.subr.mxu0 0.0
    %3040 = vmatpush1.msra.mxu0 %v781
    %3041 = vmatprep.subr.mxu0 0.0
    %3042 = vmatpush1.msra.mxu0 %v782
    %3043 = vmatprep.subr.mxu0 0.0
    %3044 = vmatpush1.msra.mxu0 %v783
    %3045 = vmatprep.subr.mxu0 0.0
    %3046 = vmatpush1.msra.mxu0 %v784
    %3047 = vmatprep.subr.mxu0 0.0
    %3048 = vmatpush1.msra.mxu0 %v785
    %3049 = vmatprep.mubr.f32.mxu0 %v91
    %3050 = vmatmul.mubr.f32.gmra.mrb[0].mxu0 %v90
    %v3051 = vpop.f32.mrb[0].mxu0
    %v3052 = vadd.f32 %v2982, %v3051
    %v3053 = vpop.f32.mrb[0].mxu0
    %3054 = vdwg.mxu0
    %3055 = vmatprep.subr.mxu0 0.0
    %3056 = vmatpush1.msra.mxu0 %v786
    %3057 = vmatprep.subr.mxu0 0.0
    %3058 = vmatpush1.msra.mxu0 %v787
    %3059 = vmatprep.subr.mxu0 0.0
    %3060 = vmatpush1.msra.mxu0 %v788
    %3061 = vmatprep.subr.mxu0 0.0
    %3062 = vmatpush1.msra.mxu0 %v789
    %3063 = vmatprep.subr.mxu0 0.0
    %3064 = vmatpush1.msra.mxu0 %v790
    %3065 = vmatprep.subr.mxu0 0.0
    %3066 = vmatpush1.msra.mxu0 %v791
    %3067 = vmatprep.subr.mxu0 0.0
    %3068 = vmatpush1.msra.mxu0 %v792
    %3069 = vmatprep.subr.mxu0 0.0
    %3070 = vmatpush1.msra.mxu0 %v793
    %3071 = vmatprep.subr.mxu0 0.0
    %3072 = vmatpush1.msra.mxu0 %v794
    %3073 = vmatprep.subr.mxu0 0.0
    %3074 = vmatpush1.msra.mxu0 %v795
    %3075 = vmatprep.subr.mxu0 0.0
    %3076 = vmatpush1.msra.mxu0 %v796
    %3077 = vmatprep.subr.mxu0 0.0
    %3078 = vmatpush1.msra.mxu0 %v797
    %3079 = vmatprep.subr.mxu0 0.0
    %3080 = vmatpush1.msra.mxu0 %v798
    %3081 = vmatprep.subr.mxu0 0.0
    %3082 = vmatpush1.msra.mxu0 %v799
    %3083 = vmatprep.subr.mxu0 0.0
    %3084 = vmatpush1.msra.mxu0 %v800
    %3085 = vmatprep.subr.mxu0 0.0
    %3086 = vmatpush1.msra.mxu0 %v801
    %3087 = vmatprep.subr.mxu0 0.0
    %3088 = vmatpush1.msra.mxu0 %v802
    %3089 = vmatprep.subr.mxu0 0.0
    %3090 = vmatpush1.msra.mxu0 %v803
    %3091 = vmatprep.subr.mxu0 0.0
    %3092 = vmatpush1.msra.mxu0 %v804
    %3093 = vmatprep.subr.mxu0 0.0
    %3094 = vmatpush1.msra.mxu0 %v805
    %3095 = vmatprep.subr.mxu0 0.0
    %3096 = vmatpush1.msra.mxu0 %v806
    %3097 = vmatprep.subr.mxu0 0.0
    %3098 = vmatpush1.msra.mxu0 %v807
    %3099 = vmatprep.subr.mxu0 0.0
    %3100 = vmatpush1.msra.mxu0 %v808
    %3101 = vmatprep.subr.mxu0 0.0
    %3102 = vmatpush1.msra.mxu0 %v809
    %3103 = vmatprep.subr.mxu0 0.0
    %3104 = vmatpush1.msra.mxu0 %v810
    %3105 = vmatprep.subr.mxu0 0.0
    %3106 = vmatpush1.msra.mxu0 %v811
    %3107 = vmatprep.subr.mxu0 0.0
    %3108 = vmatpush1.msra.mxu0 %v812
    %3109 = vmatprep.subr.mxu0 0.0
    %3110 = vmatpush1.msra.mxu0 %v813
    %3111 = vmatprep.subr.mxu0 0.0
    %3112 = vmatpush1.msra.mxu0 %v814
    %3113 = vmatprep.subr.mxu0 0.0
    %3114 = vmatpush1.msra.mxu0 %v815
    %3115 = vmatprep.subr.mxu0 0.0
    %3116 = vmatpush1.msra.mxu0 %v816
    %3117 = vmatprep.subr.mxu0 0.0
    %3118 = vmatpush1.msra.mxu0 %v817
    %3119 = vmatprep.mubr.f32.mxu0 %v93
    %3120 = vmatmul.mubr.f32.gmra.mrb[0].mxu0 %v92
    %v3121 = vpop.f32.mrb[0].mxu0
    %v3122 = vadd.f32 %v3052, %v3121
    %v3123 = vpop.f32.mrb[0].mxu0
    %3124 = vdwg.mxu0
    %3125 = vmatprep.subr.mxu0 0.0
    %3126 = vmatpush1.msra.mxu0 %v818
    %3127 = vmatprep.subr.mxu0 0.0
    %3128 = vmatpush1.msra.mxu0 %v819
    %3129 = vmatprep.subr.mxu0 0.0
    %3130 = vmatpush1.msra.mxu0 %v820
    %3131 = vmatprep.subr.mxu0 0.0
    %3132 = vmatpush1.msra.mxu0 %v821
    %3133 = vmatprep.subr.mxu0 0.0
    %3134 = vmatpush1.msra.mxu0 %v822
    %3135 = vmatprep.subr.mxu0 0.0
    %3136 = vmatpush1.msra.mxu0 %v823
    %3137 = vmatprep.subr.mxu0 0.0
    %3138 = vmatpush1.msra.mxu0 %v824
    %3139 = vmatprep.subr.mxu0 0.0
    %3140 = vmatpush1.msra.mxu0 %v825
    %3141 = vmatprep.subr.mxu0 0.0
    %3142 = vmatpush1.msra.mxu0 %v826
    %3143 = vmatprep.subr.mxu0 0.0
    %3144 = vmatpush1.msra.mxu0 %v827
    %3145 = vmatprep.subr.mxu0 0.0
    %3146 = vmatpush1.msra.mxu0 %v828
    %3147 = vmatprep.subr.mxu0 0.0
    %3148 = vmatpush1.msra.mxu0 %v829
    %3149 = vmatprep.subr.mxu0 0.0
    %3150 = vmatpush1.msra.mxu0 %v830
    %3151 = vmatprep.subr.mxu0 0.0
    %3152 = vmatpush1.msra.mxu0 %v831
    %3153 = vmatprep.subr.mxu0 0.0
    %3154 = vmatpush1.msra.mxu0 %v832
    %3155 = vmatprep.subr.mxu0 0.0
    %3156 = vmatpush1.msra.mxu0 %v833
    %3157 = vmatprep.subr.mxu0 0.0
    %3158 = vmatpush1.msra.mxu0 %v834
    %3159 = vmatprep.subr.mxu0 0.0
    %3160 = vmatpush1.msra.mxu0 %v835
    %3161 = vmatprep.subr.mxu0 0.0
    %3162 = vmatpush1.msra.mxu0 %v836
    %3163 = vmatprep.subr.mxu0 0.0
    %3164 = vmatpush1.msra.mxu0 %v837
    %3165 = vmatprep.subr.mxu0 0.0
    %3166 = vmatpush1.msra.mxu0 %v838
    %3167 = vmatprep.subr.mxu0 0.0
    %3168 = vmatpush1.msra.mxu0 %v839
    %3169 = vmatprep.subr.mxu0 0.0
    %3170 = vmatpush1.msra.mxu0 %v840
    %3171 = vmatprep.subr.mxu0 0.0
    %3172 = vmatpush1.msra.mxu0 %v841
    %3173 = vmatprep.subr.mxu0 0.0
    %3174 = vmatpush1.msra.mxu0 %v842
    %3175 = vmatprep.subr.mxu0 0.0
    %3176 = vmatpush1.msra.mxu0 %v843
    %3177 = vmatprep.subr.mxu0 0.0
    %3178 = vmatpush1.msra.mxu0 %v844
    %3179 = vmatprep.subr.mxu0 0.0
    %3180 = vmatpush1.msra.mxu0 %v845
    %3181 = vmatprep.subr.mxu0 0.0
    %3182 = vmatpush1.msra.mxu0 %v846
    %3183 = vmatprep.subr.mxu0 0.0
    %3184 = vmatpush1.msra.mxu0 %v847
    %3185 = vmatprep.subr.mxu0 0.0
    %3186 = vmatpush1.msra.mxu0 %v848
    %3187 = vmatprep.subr.mxu0 0.0
    %3188 = vmatpush1.msra.mxu0 %v849
    %3189 = vmatprep.mubr.f32.mxu0 %v95
    %3190 = vmatmul.mubr.f32.gmra.mrb[0].mxu0 %v94
    %v3191 = vpop.f32.mrb[0].mxu0
    %v3192 = vadd.f32 %v3122, %v3191
    %v3193 = vpop.f32.mrb[0].mxu0
    %3194 = vdwg.mxu0
    %3195 = vmatprep.subr.mxu0 0.0
    %3196 = vmatpush1.msra.mxu0 %v850
    %3197 = vmatprep.subr.mxu0 0.0
    %3198 = vmatpush1.msra.mxu0 %v851
    %3199 = vmatprep.subr.mxu0 0.0
    %3200 = vmatpush1.msra.mxu0 %v852
    %3201 = vmatprep.subr.mxu0 0.0
    %3202 = vmatpush1.msra.mxu0 %v853
    %3203 = vmatprep.subr.mxu0 0.0
    %3204 = vmatpush1.msra.mxu0 %v854
    %3205 = vmatprep.subr.mxu0 0.0
    %3206 = vmatpush1.msra.mxu0 %v855
    %3207 = vmatprep.subr.mxu0 0.0
    %3208 = vmatpush1.msra.mxu0 %v856
    %3209 = vmatprep.subr.mxu0 0.0
    %3210 = vmatpush1.msra.mxu0 %v857
    %3211 = vmatprep.subr.mxu0 0.0
    %3212 = vmatpush1.msra.mxu0 %v858
    %3213 = vmatprep.subr.mxu0 0.0
    %3214 = vmatpush1.msra.mxu0 %v859
    %3215 = vmatprep.subr.mxu0 0.0
    %3216 = vmatpush1.msra.mxu0 %v860
    %3217 = vmatprep.subr.mxu0 0.0
    %3218 = vmatpush1.msra.mxu0 %v861
    %3219 = vmatprep.subr.mxu0 0.0
    %3220 = vmatpush1.msra.mxu0 %v862
    %3221 = vmatprep.subr.mxu0 0.0
    %3222 = vmatpush1.msra.mxu0 %v863
    %3223 = vmatprep.subr.mxu0 0.0
    %3224 = vmatpush1.msra.mxu0 %v864
    %3225 = vmatprep.subr.mxu0 0.0
    %3226 = vmatpush1.msra.mxu0 %v865
    %3227 = vmatprep.subr.mxu0 0.0
    %3228 = vmatpush1.msra.mxu0 %v866
    %3229 = vmatprep.subr.mxu0 0.0
    %3230 = vmatpush1.msra.mxu0 %v867
    %3231 = vmatprep.subr.mxu0 0.0
    %3232 = vmatpush1.msra.mxu0 %v868
    %3233 = vmatprep.subr.mxu0 0.0
    %3234 = vmatpush1.msra.mxu0 %v869
    %3235 = vmatprep.subr.mxu0 0.0
    %3236 = vmatpush1.msra.mxu0 %v870
    %3237 = vmatprep.subr.mxu0 0.0
    %3238 = vmatpush1.msra.mxu0 %v871
    %3239 = vmatprep.subr.mxu0 0.0
    %3240 = vmatpush1.msra.mxu0 %v872
    %3241 = vmatprep.subr.mxu0 0.0
    %3242 = vmatpush1.msra.mxu0 %v873
    %3243 = vmatprep.subr.mxu0 0.0
    %3244 = vmatpush1.msra.mxu0 %v874
    %3245 = vmatprep.subr.mxu0 0.0
    %3246 = vmatpush1.msra.mxu0 %v875
    %3247 = vmatprep.subr.mxu0 0.0
    %3248 = vmatpush1.msra.mxu0 %v876
    %3249 = vmatprep.subr.mxu0 0.0
    %3250 = vmatpush1.msra.mxu0 %v877
    %3251 = vmatprep.subr.mxu0 0.0
    %3252 = vmatpush1.msra.mxu0 %v878
    %3253 = vmatprep.subr.mxu0 0.0
    %3254 = vmatpush1.msra.mxu0 %v879
    %3255 = vmatprep.subr.mxu0 0.0
    %3256 = vmatpush1.msra.mxu0 %v880
    %3257 = vmatprep.subr.mxu0 0.0
    %3258 = vmatpush1.msra.mxu0 %v881
    %3259 = vmatprep.mubr.f32.mxu0 %v97
    %3260 = vmatmul.mubr.f32.gmra.mrb[0].mxu0 %v96
    %v3261 = vpop.f32.mrb[0].mxu0
    %v3262 = vadd.f32 %v3192, %v3261
    %v3263 = vpop.f32.mrb[0].mxu0
    %3264 = vdwg.mxu0
    %3265 = vmatprep.subr.mxu0 0.0
    %3266 = vmatpush1.msra.mxu0 %v882
    %3267 = vmatprep.subr.mxu0 0.0
    %3268 = vmatpush1.msra.mxu0 %v883
    %3269 = vmatprep.subr.mxu0 0.0
    %3270 = vmatpush1.msra.mxu0 %v884
    %3271 = vmatprep.subr.mxu0 0.0
    %3272 = vmatpush1.msra.mxu0 %v885
    %3273 = vmatprep.subr.mxu0 0.0
    %3274 = vmatpush1.msra.mxu0 %v886
    %3275 = vmatprep.subr.mxu0 0.0
    %3276 = vmatpush1.msra.mxu0 %v887
    %3277 = vmatprep.subr.mxu0 0.0
    %3278 = vmatpush1.msra.mxu0 %v888
    %3279 = vmatprep.subr.mxu0 0.0
    %3280 = vmatpush1.msra.mxu0 %v889
    %3281 = vmatprep.subr.mxu0 0.0
    %3282 = vmatpush1.msra.mxu0 %v890
    %3283 = vmatprep.subr.mxu0 0.0
    %3284 = vmatpush1.msra.mxu0 %v891
    %3285 = vmatprep.subr.mxu0 0.0
    %3286 = vmatpush1.msra.mxu0 %v892
    %3287 = vmatprep.subr.mxu0 0.0
    %3288 = vmatpush1.msra.mxu0 %v893
    %3289 = vmatprep.subr.mxu0 0.0
    %3290 = vmatpush1.msra.mxu0 %v894
    %3291 = vmatprep.subr.mxu0 0.0
    %3292 = vmatpush1.msra.mxu0 %v895
    %3293 = vmatprep.subr.mxu0 0.0
    %3294 = vmatpush1.msra.mxu0 %v896
    %3295 = vmatprep.subr.mxu0 0.0
    %3296 = vmatpush1.msra.mxu0 %v897
    %3297 = vmatprep.subr.mxu0 0.0
    %3298 = vmatpush1.msra.mxu0 %v898
    %3299 = vmatprep.subr.mxu0 0.0
    %3300 = vmatpush1.msra.mxu0 %v899
    %3301 = vmatprep.subr.mxu0 0.0
    %3302 = vmatpush1.msra.mxu0 %v900
    %3303 = vmatprep.subr.mxu0 0.0
    %3304 = vmatpush1.msra.mxu0 %v901
    %3305 = vmatprep.subr.mxu0 0.0
    %3306 = vmatpush1.msra.mxu0 %v902
    %3307 = vmatprep.subr.mxu0 0.0
    %3308 = vmatpush1.msra.mxu0 %v903
    %3309 = vmatprep.subr.mxu0 0.0
    %3310 = vmatpush1.msra.mxu0 %v904
    %3311 = vmatprep.subr.mxu0 0.0
    %3312 = vmatpush1.msra.mxu0 %v905
    %3313 = vmatprep.subr.mxu0 0.0
    %3314 = vmatpush1.msra.mxu0 %v906
    %3315 = vmatprep.subr.mxu0 0.0
    %3316 = vmatpush1.msra.mxu0 %v907
    %3317 = vmatprep.subr.mxu0 0.0
    %3318 = vmatpush1.msra.mxu0 %v908
    %3319 = vmatprep.subr.mxu0 0.0
    %3320 = vmatpush1.msra.mxu0 %v909
    %3321 = vmatprep.subr.mxu0 0.0
    %3322 = vmatpush1.msra.mxu0 %v910
    %3323 = vmatprep.subr.mxu0 0.0
    %3324 = vmatpush1.msra.mxu0 %v911
    %3325 = vmatprep.subr.mxu0 0.0
    %3326 = vmatpush1.msra.mxu0 %v912
    %3327 = vmatprep.subr.mxu0 0.0
    %3328 = vmatpush1.msra.mxu0 %v913
    %3329 = vmatprep.mubr.f32.mxu0 %v99
    %3330 = vmatmul.mubr.f32.gmra.mrb[0].mxu0 %v98
    %v3331 = vpop.f32.mrb[0].mxu0
    %v3332 = vadd.f32 %v3262, %v3331
    %v3333 = vpop.f32.mrb[0].mxu0
    %3334 = vdwg.mxu0
    %3335 = vmatprep.subr.mxu0 0.0
    %3336 = vmatpush1.msra.mxu0 %v914
    %3337 = vmatprep.subr.mxu0 0.0
    %3338 = vmatpush1.msra.mxu0 %v915
    %3339 = vmatprep.subr.mxu0 0.0
    %3340 = vmatpush1.msra.mxu0 %v916
    %3341 = vmatprep.subr.mxu0 0.0
    %3342 = vmatpush1.msra.mxu0 %v917
    %3343 = vmatprep.subr.mxu0 0.0
    %3344 = vmatpush1.msra.mxu0 %v918
    %3345 = vmatprep.subr.mxu0 0.0
    %3346 = vmatpush1.msra.mxu0 %v919
    %3347 = vmatprep.subr.mxu0 0.0
    %3348 = vmatpush1.msra.mxu0 %v920
    %3349 = vmatprep.subr.mxu0 0.0
    %3350 = vmatpush1.msra.mxu0 %v921
    %3351 = vmatprep.subr.mxu0 0.0
    %3352 = vmatpush1.msra.mxu0 %v922
    %3353 = vmatprep.subr.mxu0 0.0
    %3354 = vmatpush1.msra.mxu0 %v923
    %3355 = vmatprep.subr.mxu0 0.0
    %3356 = vmatpush1.msra.mxu0 %v924
    %3357 = vmatprep.subr.mxu0 0.0
    %3358 = vmatpush1.msra.mxu0 %v925
    %3359 = vmatprep.subr.mxu0 0.0
    %3360 = vmatpush1.msra.mxu0 %v926
    %3361 = vmatprep.subr.mxu0 0.0
    %3362 = vmatpush1.msra.mxu0 %v927
    %3363 = vmatprep.subr.mxu0 0.0
    %3364 = vmatpush1.msra.mxu0 %v928
    %3365 = vmatprep.subr.mxu0 0.0
    %3366 = vmatpush1.msra.mxu0 %v929
    %3367 = vmatprep.subr.mxu0 0.0
    %3368 = vmatpush1.msra.mxu0 %v930
    %3369 = vmatprep.subr.mxu0 0.0
    %3370 = vmatpush1.msra.mxu0 %v931
    %3371 = vmatprep.subr.mxu0 0.0
    %3372 = vmatpush1.msra.mxu0 %v932
    %3373 = vmatprep.subr.mxu0 0.0
    %3374 = vmatpush1.msra.mxu0 %v933
    %3375 = vmatprep.subr.mxu0 0.0
    %3376 = vmatpush1.msra.mxu0 %v934
    %3377 = vmatprep.subr.mxu0 0.0
    %3378 = vmatpush1.msra.mxu0 %v935
    %3379 = vmatprep.subr.mxu0 0.0
    %3380 = vmatpush1.msra.mxu0 %v936
    %3381 = vmatprep.subr.mxu0 0.0
    %3382 = vmatpush1.msra.mxu0 %v937
    %3383 = vmatprep.subr.mxu0 0.0
    %3384 = vmatpush1.msra.mxu0 %v938
    %3385 = vmatprep.subr.mxu0 0.0
    %3386 = vmatpush1.msra.mxu0 %v939
    %3387 = vmatprep.subr.mxu0 0.0
    %3388 = vmatpush1.msra.mxu0 %v940
    %3389 = vmatprep.subr.mxu0 0.0
    %3390 = vmatpush1.msra.mxu0 %v941
    %3391 = vmatprep.subr.mxu0 0.0
    %3392 = vmatpush1.msra.mxu0 %v942
    %3393 = vmatprep.subr.mxu0 0.0
    %3394 = vmatpush1.msra.mxu0 %v943
    %3395 = vmatprep.subr.mxu0 0.0
    %3396 = vmatpush1.msra.mxu0 %v944
    %3397 = vmatprep.subr.mxu0 0.0
    %3398 = vmatpush1.msra.mxu0 %v945
    %3399 = vmatprep.mubr.f32.mxu0 %v101
    %3400 = vmatmul.mubr.f32.gmra.mrb[0].mxu0 %v100
    %v3401 = vpop.f32.mrb[0].mxu0
    %v3402 = vadd.f32 %v3332, %v3401
    %v3403 = vpop.f32.mrb[0].mxu0
    %3404 = vdwg.mxu0
    %3405 = vmatprep.subr.mxu0 0.0
    %3406 = vmatpush1.msra.mxu0 %v946
    %3407 = vmatprep.subr.mxu0 0.0
    %3408 = vmatpush1.msra.mxu0 %v947
    %3409 = vmatprep.subr.mxu0 0.0
    %3410 = vmatpush1.msra.mxu0 %v948
    %3411 = vmatprep.subr.mxu0 0.0
    %3412 = vmatpush1.msra.mxu0 %v949
    %3413 = vmatprep.subr.mxu0 0.0
    %3414 = vmatpush1.msra.mxu0 %v950
    %3415 = vmatprep.subr.mxu0 0.0
    %3416 = vmatpush1.msra.mxu0 %v951
    %3417 = vmatprep.subr.mxu0 0.0
    %3418 = vmatpush1.msra.mxu0 %v952
    %3419 = vmatprep.subr.mxu0 0.0
    %3420 = vmatpush1.msra.mxu0 %v953
    %3421 = vmatprep.subr.mxu0 0.0
    %3422 = vmatpush1.msra.mxu0 %v954
    %3423 = vmatprep.subr.mxu0 0.0
    %3424 = vmatpush1.msra.mxu0 %v955
    %3425 = vmatprep.subr.mxu0 0.0
    %3426 = vmatpush1.msra.mxu0 %v956
    %3427 = vmatprep.subr.mxu0 0.0
    %3428 = vmatpush1.msra.mxu0 %v957
    %3429 = vmatprep.subr.mxu0 0.0
    %3430 = vmatpush1.msra.mxu0 %v958
    %3431 = vmatprep.subr.mxu0 0.0
    %3432 = vmatpush1.msra.mxu0 %v959
    %3433 = vmatprep.subr.mxu0 0.0
    %3434 = vmatpush1.msra.mxu0 %v960
    %3435 = vmatprep.subr.mxu0 0.0
    %3436 = vmatpush1.msra.mxu0 %v961
    %3437 = vmatprep.subr.mxu0 0.0
    %3438 = vmatpush1.msra.mxu0 %v962
    %3439 = vmatprep.subr.mxu0 0.0
    %3440 = vmatpush1.msra.mxu0 %v963
    %3441 = vmatprep.subr.mxu0 0.0
    %3442 = vmatpush1.msra.mxu0 %v964
    %3443 = vmatprep.subr.mxu0 0.0
    %3444 = vmatpush1.msra.mxu0 %v965
    %3445 = vmatprep.subr.mxu0 0.0
    %3446 = vmatpush1.msra.mxu0 %v966
    %3447 = vmatprep.subr.mxu0 0.0
    %3448 = vmatpush1.msra.mxu0 %v967
    %3449 = vmatprep.subr.mxu0 0.0
    %3450 = vmatpush1.msra.mxu0 %v968
    %3451 = vmatprep.subr.mxu0 0.0
    %3452 = vmatpush1.msra.mxu0 %v969
    %3453 = vmatprep.subr.mxu0 0.0
    %3454 = vmatpush1.msra.mxu0 %v970
    %3455 = vmatprep.subr.mxu0 0.0
    %3456 = vmatpush1.msra.mxu0 %v971
    %3457 = vmatprep.subr.mxu0 0.0
    %3458 = vmatpush1.msra.mxu0 %v972
    %3459 = vmatprep.subr.mxu0 0.0
    %3460 = vmatpush1.msra.mxu0 %v973
    %3461 = vmatprep.subr.mxu0 0.0
    %3462 = vmatpush1.msra.mxu0 %v974
    %3463 = vmatprep.subr.mxu0 0.0
    %3464 = vmatpush1.msra.mxu0 %v975
    %3465 = vmatprep.subr.mxu0 0.0
    %3466 = vmatpush1.msra.mxu0 %v976
    %3467 = vmatprep.subr.mxu0 0.0
    %3468 = vmatpush1.msra.mxu0 %v977
    %3469 = vmatprep.mubr.f32.mxu0 %v103
    %3470 = vmatmul.mubr.f32.gmra.mrb[0].mxu0 %v102
    %v3471 = vpop.f32.mrb[0].mxu0
    %v3472 = vadd.f32 %v3402, %v3471
    %v3473 = vpop.f32.mrb[0].mxu0
    %3474 = vdwg.mxu0
    %3475 = vmatprep.subr.mxu0 0.0
    %3476 = vmatpush1.msra.mxu0 %v978
    %3477 = vmatprep.subr.mxu0 0.0
    %3478 = vmatpush1.msra.mxu0 %v979
    %3479 = vmatprep.subr.mxu0 0.0
    %3480 = vmatpush1.msra.mxu0 %v980
    %3481 = vmatprep.subr.mxu0 0.0
    %3482 = vmatpush1.msra.mxu0 %v981
    %3483 = vmatprep.subr.mxu0 0.0
    %3484 = vmatpush1.msra.mxu0 %v982
    %3485 = vmatprep.subr.mxu0 0.0
    %3486 = vmatpush1.msra.mxu0 %v983
    %3487 = vmatprep.subr.mxu0 0.0
    %3488 = vmatpush1.msra.mxu0 %v984
    %3489 = vmatprep.subr.mxu0 0.0
    %3490 = vmatpush1.msra.mxu0 %v985
    %3491 = vmatprep.subr.mxu0 0.0
    %3492 = vmatpush1.msra.mxu0 %v986
    %3493 = vmatprep.subr.mxu0 0.0
    %3494 = vmatpush1.msra.mxu0 %v987
    %3495 = vmatprep.subr.mxu0 0.0
    %3496 = vmatpush1.msra.mxu0 %v988
    %3497 = vmatprep.subr.mxu0 0.0
    %3498 = vmatpush1.msra.mxu0 %v989
    %3499 = vmatprep.subr.mxu0 0.0
    %3500 = vmatpush1.msra.mxu0 %v990
    %3501 = vmatprep.subr.mxu0 0.0
    %3502 = vmatpush1.msra.mxu0 %v991
    %3503 = vmatprep.subr.mxu0 0.0
    %3504 = vmatpush1.msra.mxu0 %v992
    %3505 = vmatprep.subr.mxu0 0.0
    %3506 = vmatpush1.msra.mxu0 %v993
    %3507 = vmatprep.subr.mxu0 0.0
    %3508 = vmatpush1.msra.mxu0 %v994
    %3509 = vmatprep.subr.mxu0 0.0
    %3510 = vmatpush1.msra.mxu0 %v995
    %3511 = vmatprep.subr.mxu0 0.0
    %3512 = vmatpush1.msra.mxu0 %v996
    %3513 = vmatprep.subr.mxu0 0.0
    %3514 = vmatpush1.msra.mxu0 %v997
    %3515 = vmatprep.subr.mxu0 0.0
    %3516 = vmatpush1.msra.mxu0 %v998
    %3517 = vmatprep.subr.mxu0 0.0
    %3518 = vmatpush1.msra.mxu0 %v999
    %3519 = vmatprep.subr.mxu0 0.0
    %3520 = vmatpush1.msra.mxu0 %v1000
    %3521 = vmatprep.subr.mxu0 0.0
    %3522 = vmatpush1.msra.mxu0 %v1001
    %3523 = vmatprep.subr.mxu0 0.0
    %3524 = vmatpush1.msra.mxu0 %v1002
    %3525 = vmatprep.subr.mxu0 0.0
    %3526 = vmatpush1.msra.mxu0 %v1003
    %3527 = vmatprep.subr.mxu0 0.0
    %3528 = vmatpush1.msra.mxu0 %v1004
    %3529 = vmatprep.subr.mxu0 0.0
    %3530 = vmatpush1.msra.mxu0 %v1005
    %3531 = vmatprep.subr.mxu0 0.0
    %3532 = vmatpush1.msra.mxu0 %v1006
    %3533 = vmatprep.subr.mxu0 0.0
    %3534 = vmatpush1.msra.mxu0 %v1007
    %3535 = vmatprep.subr.mxu0 0.0
    %3536 = vmatpush1.msra.mxu0 %v1008
    %3537 = vmatprep.subr.mxu0 0.0
    %3538 = vmatpush1.msra.mxu0 %v1009
    %3539 = vmatprep.mubr.f32.mxu0 %v105
    %3540 = vmatmul.mubr.f32.gmra.mrb[0].mxu0 %v104
    %v3541 = vpop.f32.mrb[0].mxu0
    %v3542 = vadd.f32 %v3472, %v3541
    %v3543 = vpop.f32.mrb[0].mxu0
    %3544 = vdwg.mxu0
    %3545 = vmatprep.subr.mxu0 0.0
    %3546 = vmatpush1.msra.mxu0 %v1010
    %3547 = vmatprep.subr.mxu0 0.0
    %3548 = vmatpush1.msra.mxu0 %v1011
    %3549 = vmatprep.subr.mxu0 0.0
    %3550 = vmatpush1.msra.mxu0 %v1012
    %3551 = vmatprep.subr.mxu0 0.0
    %3552 = vmatpush1.msra.mxu0 %v1013
    %3553 = vmatprep.subr.mxu0 0.0
    %3554 = vmatpush1.msra.mxu0 %v1014
    %3555 = vmatprep.subr.mxu0 0.0
    %3556 = vmatpush1.msra.mxu0 %v1015
    %3557 = vmatprep.subr.mxu0 0.0
    %3558 = vmatpush1.msra.mxu0 %v1016
    %3559 = vmatprep.subr.mxu0 0.0
    %3560 = vmatpush1.msra.mxu0 %v1017
    %3561 = vmatprep.subr.mxu0 0.0
    %3562 = vmatpush1.msra.mxu0 %v1018
    %3563 = vmatprep.subr.mxu0 0.0
    %3564 = vmatpush1.msra.mxu0 %v1019
    %3565 = vmatprep.subr.mxu0 0.0
    %3566 = vmatpush1.msra.mxu0 %v1020
    %3567 = vmatprep.subr.mxu0 0.0
    %3568 = vmatpush1.msra.mxu0 %v1021
    %3569 = vmatprep.subr.mxu0 0.0
    %3570 = vmatpush1.msra.mxu0 %v1022
    %3571 = vmatprep.subr.mxu0 0.0
    %3572 = vmatpush1.msra.mxu0 %v1023
    %3573 = vmatprep.subr.mxu0 0.0
    %3574 = vmatpush1.msra.mxu0 %v1024
    %3575 = vmatprep.subr.mxu0 0.0
    %3576 = vmatpush1.msra.mxu0 %v1025
    %3577 = vmatprep.subr.mxu0 0.0
    %3578 = vmatpush1.msra.mxu0 %v1026
    %3579 = vmatprep.subr.mxu0 0.0
    %3580 = vmatpush1.msra.mxu0 %v1027
    %3581 = vmatprep.subr.mxu0 0.0
    %3582 = vmatpush1.msra.mxu0 %v1028
    %3583 = vmatprep.subr.mxu0 0.0
    %3584 = vmatpush1.msra.mxu0 %v1029
    %3585 = vmatprep.subr.mxu0 0.0
    %3586 = vmatpush1.msra.mxu0 %v1030
    %3587 = vmatprep.subr.mxu0 0.0
    %3588 = vmatpush1.msra.mxu0 %v1031
    %3589 = vmatprep.subr.mxu0 0.0
    %3590 = vmatpush1.msra.mxu0 %v1032
    %3591 = vmatprep.subr.mxu0 0.0
    %3592 = vmatpush1.msra.mxu0 %v1033
    %3593 = vmatprep.subr.mxu0 0.0
    %3594 = vmatpush1.msra.mxu0 %v1034
    %3595 = vmatprep.subr.mxu0 0.0
    %3596 = vmatpush1.msra.mxu0 %v1035
    %3597 = vmatprep.subr.mxu0 0.0
    %3598 = vmatpush1.msra.mxu0 %v1036
    %3599 = vmatprep.subr.mxu0 0.0
    %3600 = vmatpush1.msra.mxu0 %v1037
    %3601 = vmatprep.subr.mxu0 0.0
    %3602 = vmatpush1.msra.mxu0 %v1038
    %3603 = vmatprep.subr.mxu0 0.0
    %3604 = vmatpush1.msra.mxu0 %v1039
    %3605 = vmatprep.subr.mxu0 0.0
    %3606 = vmatpush1.msra.mxu0 %v1040
    %3607 = vmatprep.subr.mxu0 0.0
    %3608 = vmatpush1.msra.mxu0 %v1041
    %3609 = vmatprep.mubr.f32.mxu0 %v107
    %3610 = vmatmul.mubr.f32.gmra.mrb[0].mxu0 %v106
    %v3611 = vpop.f32.mrb[0].mxu0
    %v3612 = vadd.f32 %v3542, %v3611
    %v3613 = vpop.f32.mrb[0].mxu0
    %3614 = vdwg.mxu0
    %3615 = vmatprep.subr.mxu0 0.0
    %3616 = vmatpush1.msra.mxu0 %v1042
    %3617 = vmatprep.subr.mxu0 0.0
    %3618 = vmatpush1.msra.mxu0 %v1043
    %3619 = vmatprep.subr.mxu0 0.0
    %3620 = vmatpush1.msra.mxu0 %v1044
    %3621 = vmatprep.subr.mxu0 0.0
    %3622 = vmatpush1.msra.mxu0 %v1045
    %3623 = vmatprep.subr.mxu0 0.0
    %3624 = vmatpush1.msra.mxu0 %v1046
    %3625 = vmatprep.subr.mxu0 0.0
    %3626 = vmatpush1.msra.mxu0 %v1047
    %3627 = vmatprep.subr.mxu0 0.0
    %3628 = vmatpush1.msra.mxu0 %v1048
    %3629 = vmatprep.subr.mxu0 0.0
    %3630 = vmatpush1.msra.mxu0 %v1049
    %3631 = vmatprep.subr.mxu0 0.0
    %3632 = vmatpush1.msra.mxu0 %v1050
    %3633 = vmatprep.subr.mxu0 0.0
    %3634 = vmatpush1.msra.mxu0 %v1051
    %3635 = vmatprep.subr.mxu0 0.0
    %3636 = vmatpush1.msra.mxu0 %v1052
    %3637 = vmatprep.subr.mxu0 0.0
    %3638 = vmatpush1.msra.mxu0 %v1053
    %3639 = vmatprep.subr.mxu0 0.0
    %3640 = vmatpush1.msra.mxu0 %v1054
    %3641 = vmatprep.subr.mxu0 0.0
    %3642 = vmatpush1.msra.mxu0 %v1055
    %3643 = vmatprep.subr.mxu0 0.0
    %3644 = vmatpush1.msra.mxu0 %v1056
    %3645 = vmatprep.subr.mxu0 0.0
    %3646 = vmatpush1.msra.mxu0 %v1057
    %3647 = vmatprep.subr.mxu0 0.0
    %3648 = vmatpush1.msra.mxu0 %v1058
    %3649 = vmatprep.subr.mxu0 0.0
    %3650 = vmatpush1.msra.mxu0 %v1059
    %3651 = vmatprep.subr.mxu0 0.0
    %3652 = vmatpush1.msra.mxu0 %v1060
    %3653 = vmatprep.subr.mxu0 0.0
    %3654 = vmatpush1.msra.mxu0 %v1061
    %3655 = vmatprep.subr.mxu0 0.0
    %3656 = vmatpush1.msra.mxu0 %v1062
    %3657 = vmatprep.subr.mxu0 0.0
    %3658 = vmatpush1.msra.mxu0 %v1063
    %3659 = vmatprep.subr.mxu0 0.0
    %3660 = vmatpush1.msra.mxu0 %v1064
    %3661 = vmatprep.subr.mxu0 0.0
    %3662 = vmatpush1.msra.mxu0 %v1065
    %3663 = vmatprep.subr.mxu0 0.0
    %3664 = vmatpush1.msra.mxu0 %v1066
    %3665 = vmatprep.subr.mxu0 0.0
    %3666 = vmatpush1.msra.mxu0 %v1067
    %3667 = vmatprep.subr.mxu0 0.0
    %3668 = vmatpush1.msra.mxu0 %v1068
    %3669 = vmatprep.subr.mxu0 0.0
    %3670 = vmatpush1.msra.mxu0 %v1069
    %3671 = vmatprep.subr.mxu0 0.0
    %3672 = vmatpush1.msra.mxu0 %v1070
    %3673 = vmatprep.subr.mxu0 0.0
    %3674 = vmatpush1.msra.mxu0 %v1071
    %3675 = vmatprep.subr.mxu0 0.0
    %3676 = vmatpush1.msra.mxu0 %v1072
    %3677 = vmatprep.subr.mxu0 0.0
    %3678 = vmatpush1.msra.mxu0 %v1073
    %3679 = vmatprep.mubr.f32.mxu0 %v109
    %3680 = vmatmul.mubr.f32.gmra.mrb[0].mxu0 %v108
    %v3681 = vpop.f32.mrb[0].mxu0
    %v3682 = vadd.f32 %v3612, %v3681
    %v3683 = vpop.f32.mrb[0].mxu0
    %3684 = vdwg.mxu0
    %3685 = vmatprep.subr.mxu0 0.0
    %3686 = vmatpush1.msra.mxu0 %v1074
    %3687 = vmatprep.subr.mxu0 0.0
    %3688 = vmatpush1.msra.mxu0 %v1075
    %3689 = vmatprep.subr.mxu0 0.0
    %3690 = vmatpush1.msra.mxu0 %v1076
    %3691 = vmatprep.subr.mxu0 0.0
    %3692 = vmatpush1.msra.mxu0 %v1077
    %3693 = vmatprep.subr.mxu0 0.0
    %3694 = vmatpush1.msra.mxu0 %v1078
    %3695 = vmatprep.subr.mxu0 0.0
    %3696 = vmatpush1.msra.mxu0 %v1079
    %3697 = vmatprep.subr.mxu0 0.0
    %3698 = vmatpush1.msra.mxu0 %v1080
    %3699 = vmatprep.subr.mxu0 0.0
    %3700 = vmatpush1.msra.mxu0 %v1081
    %3701 = vmatprep.subr.mxu0 0.0
    %3702 = vmatpush1.msra.mxu0 %v1082
    %3703 = vmatprep.subr.mxu0 0.0
    %3704 = vmatpush1.msra.mxu0 %v1083
    %3705 = vmatprep.subr.mxu0 0.0
    %3706 = vmatpush1.msra.mxu0 %v1084
    %3707 = vmatprep.subr.mxu0 0.0
    %3708 = vmatpush1.msra.mxu0 %v1085
    %3709 = vmatprep.subr.mxu0 0.0
    %3710 = vmatpush1.msra.mxu0 %v1086
    %3711 = vmatprep.subr.mxu0 0.0
    %3712 = vmatpush1.msra.mxu0 %v1087
    %3713 = vmatprep.subr.mxu0 0.0
    %3714 = vmatpush1.msra.mxu0 %v1088
    %3715 = vmatprep.subr.mxu0 0.0
    %3716 = vmatpush1.msra.mxu0 %v1089
    %3717 = vmatprep.subr.mxu0 0.0
    %3718 = vmatpush1.msra.mxu0 %v1090
    %3719 = vmatprep.subr.mxu0 0.0
    %3720 = vmatpush1.msra.mxu0 %v1091
    %3721 = vmatprep.subr.mxu0 0.0
    %3722 = vmatpush1.msra.mxu0 %v1092
    %3723 = vmatprep.subr.mxu0 0.0
    %3724 = vmatpush1.msra.mxu0 %v1093
    %3725 = vmatprep.subr.mxu0 0.0
    %3726 = vmatpush1.msra.mxu0 %v1094
    %3727 = vmatprep.subr.mxu0 0.0
    %3728 = vmatpush1.msra.mxu0 %v1095
    %3729 = vmatprep.subr.mxu0 0.0
    %3730 = vmatpush1.msra.mxu0 %v1096
    %3731 = vmatprep.subr.mxu0 0.0
    %3732 = vmatpush1.msra.mxu0 %v1097
    %3733 = vmatprep.subr.mxu0 0.0
    %3734 = vmatpush1.msra.mxu0 %v1098
    %3735 = vmatprep.subr.mxu0 0.0
    %3736 = vmatpush1.msra.mxu0 %v1099
    %3737 = vmatprep.subr.mxu0 0.0
    %3738 = vmatpush1.msra.mxu0 %v1100
    %3739 = vmatprep.subr.mxu0 0.0
    %3740 = vmatpush1.msra.mxu0 %v1101
    %3741 = vmatprep.subr.mxu0 0.0
    %3742 = vmatpush1.msra.mxu0 %v1102
    %3743 = vmatprep.subr.mxu0 0.0
    %3744 = vmatpush1.msra.mxu0 %v1103
    %3745 = vmatprep.subr.mxu0 0.0
    %3746 = vmatpush1.msra.mxu0 %v1104
    %3747 = vmatprep.subr.mxu0 0.0
    %3748 = vmatpush1.msra.mxu0 %v1105
    %3749 = vmatprep.mubr.f32.mxu0 %v111
    %3750 = vmatmul.mubr.f32.gmra.mrb[0].mxu0 %v110
    %v3751 = vpop.f32.mrb[0].mxu0
    %v3752 = vadd.f32 %v3682, %v3751
    %v3753 = vpop.f32.mrb[0].mxu0
    %3754 = vdwg.mxu0
    %3755 = vmatprep.subr.mxu0 0.0
    %3756 = vmatpush1.msra.mxu0 %v1106
    %3757 = vmatprep.subr.mxu0 0.0
    %3758 = vmatpush1.msra.mxu0 %v1107
    %3759 = vmatprep.subr.mxu0 0.0
    %3760 = vmatpush1.msra.mxu0 %v1108
    %3761 = vmatprep.subr.mxu0 0.0
    %3762 = vmatpush1.msra.mxu0 %v1109
    %3763 = vmatprep.subr.mxu0 0.0
    %3764 = vmatpush1.msra.mxu0 %v1110
    %3765 = vmatprep.subr.mxu0 0.0
    %3766 = vmatpush1.msra.mxu0 %v1111
    %3767 = vmatprep.subr.mxu0 0.0
    %3768 = vmatpush1.msra.mxu0 %v1112
    %3769 = vmatprep.subr.mxu0 0.0
    %3770 = vmatpush1.msra.mxu0 %v1113
    %3771 = vmatprep.subr.mxu0 0.0
    %3772 = vmatpush1.msra.mxu0 %v1114
    %3773 = vmatprep.subr.mxu0 0.0
    %3774 = vmatpush1.msra.mxu0 %v1115
    %3775 = vmatprep.subr.mxu0 0.0
    %3776 = vmatpush1.msra.mxu0 %v1116
    %3777 = vmatprep.subr.mxu0 0.0
    %3778 = vmatpush1.msra.mxu0 %v1117
    %3779 = vmatprep.subr.mxu0 0.0
    %3780 = vmatpush1.msra.mxu0 %v1118
    %3781 = vmatprep.subr.mxu0 0.0
    %3782 = vmatpush1.msra.mxu0 %v1119
    %3783 = vmatprep.subr.mxu0 0.0
    %3784 = vmatpush1.msra.mxu0 %v1120
    %3785 = vmatprep.subr.mxu0 0.0
    %3786 = vmatpush1.msra.mxu0 %v1121
    %3787 = vmatprep.subr.mxu0 0.0
    %3788 = vmatpush1.msra.mxu0 %v1122
    %3789 = vmatprep.subr.mxu0 0.0
    %3790 = vmatpush1.msra.mxu0 %v1123
    %3791 = vmatprep.subr.mxu0 0.0
    %3792 = vmatpush1.msra.mxu0 %v1124
    %3793 = vmatprep.subr.mxu0 0.0
    %3794 = vmatpush1.msra.mxu0 %v1125
    %3795 = vmatprep.subr.mxu0 0.0
    %3796 = vmatpush1.msra.mxu0 %v1126
    %3797 = vmatprep.subr.mxu0 0.0
    %3798 = vmatpush1.msra.mxu0 %v1127
    %3799 = vmatprep.subr.mxu0 0.0
    %3800 = vmatpush1.msra.mxu0 %v1128
    %3801 = vmatprep.subr.mxu0 0.0
    %3802 = vmatpush1.msra.mxu0 %v1129
    %3803 = vmatprep.subr.mxu0 0.0
    %3804 = vmatpush1.msra.mxu0 %v1130
    %3805 = vmatprep.subr.mxu0 0.0
    %3806 = vmatpush1.msra.mxu0 %v1131
    %3807 = vmatprep.subr.mxu0 0.0
    %3808 = vmatpush1.msra.mxu0 %v1132
    %3809 = vmatprep.subr.mxu0 0.0
    %3810 = vmatpush1.msra.mxu0 %v1133
    %3811 = vmatprep.subr.mxu0 0.0
    %3812 = vmatpush1.msra.mxu0 %v1134
    %3813 = vmatprep.subr.mxu0 0.0
    %3814 = vmatpush1.msra.mxu0 %v1135
    %3815 = vmatprep.subr.mxu0 0.0
    %3816 = vmatpush1.msra.mxu0 %v1136
    %3817 = vmatprep.subr.mxu0 0.0
    %3818 = vmatpush1.msra.mxu0 %v1137
    %3819 = vmatprep.mubr.f32.mxu0 %v113
    %3820 = vmatmul.mubr.f32.gmra.mrb[0].mxu0 %v112
    %v3821 = vpop.f32.mrb[0].mxu0
    %v3822 = vadd.f32 %v3752, %v3821
    %v3823 = vpop.f32.mrb[0].mxu0
    %3824 = vdwg.mxu0
    %3825 = vmatprep.subr.mxu0 0.0
    %3826 = vmatpush1.msra.mxu0 %v1138
    %3827 = vmatprep.subr.mxu0 0.0
    %3828 = vmatpush1.msra.mxu0 %v1139
    %3829 = vmatprep.subr.mxu0 0.0
    %3830 = vmatpush1.msra.mxu0 %v1140
    %3831 = vmatprep.subr.mxu0 0.0
    %3832 = vmatpush1.msra.mxu0 %v1141
    %3833 = vmatprep.subr.mxu0 0.0
    %3834 = vmatpush1.msra.mxu0 %v1142
    %3835 = vmatprep.subr.mxu0 0.0
    %3836 = vmatpush1.msra.mxu0 %v1143
    %3837 = vmatprep.subr.mxu0 0.0
    %3838 = vmatpush1.msra.mxu0 %v1144
    %3839 = vmatprep.subr.mxu0 0.0
    %3840 = vmatpush1.msra.mxu0 %v1145
    %3841 = vmatprep.subr.mxu0 0.0
    %3842 = vmatpush1.msra.mxu0 %v1146
    %3843 = vmatprep.subr.mxu0 0.0
    %3844 = vmatpush1.msra.mxu0 %v1147
    %3845 = vmatprep.subr.mxu0 0.0
    %3846 = vmatpush1.msra.mxu0 %v1148
    %3847 = vmatprep.subr.mxu0 0.0
    %3848 = vmatpush1.msra.mxu0 %v1149
    %3849 = vmatprep.subr.mxu0 0.0
    %3850 = vmatpush1.msra.mxu0 %v1150
    %3851 = vmatprep.subr.mxu0 0.0
    %3852 = vmatpush1.msra.mxu0 %v1151
    %3853 = vmatprep.subr.mxu0 0.0
    %3854 = vmatpush1.msra.mxu0 %v1152
    %3855 = vmatprep.subr.mxu0 0.0
    %3856 = vmatpush1.msra.mxu0 %v1153
    %3857 = vmatprep.subr.mxu0 0.0
    %3858 = vmatpush1.msra.mxu0 %v1154
    %3859 = vmatprep.subr.mxu0 0.0
    %3860 = vmatpush1.msra.mxu0 %v1155
    %3861 = vmatprep.subr.mxu0 0.0
    %3862 = vmatpush1.msra.mxu0 %v1156
    %3863 = vmatprep.subr.mxu0 0.0
    %3864 = vmatpush1.msra.mxu0 %v1157
    %3865 = vmatprep.subr.mxu0 0.0
    %3866 = vmatpush1.msra.mxu0 %v1158
    %3867 = vmatprep.subr.mxu0 0.0
    %3868 = vmatpush1.msra.mxu0 %v1159
    %3869 = vmatprep.subr.mxu0 0.0
    %3870 = vmatpush1.msra.mxu0 %v1160
    %3871 = vmatprep.subr.mxu0 0.0
    %3872 = vmatpush1.msra.mxu0 %v1161
    %3873 = vmatprep.subr.mxu0 0.0
    %3874 = vmatpush1.msra.mxu0 %v1162
    %3875 = vmatprep.subr.mxu0 0.0
    %3876 = vmatpush1.msra.mxu0 %v1163
    %3877 = vmatprep.subr.mxu0 0.0
    %3878 = vmatpush1.msra.mxu0 %v1164
    %3879 = vmatprep.subr.mxu0 0.0
    %3880 = vmatpush1.msra.mxu0 %v1165
    %3881 = vmatprep.subr.mxu0 0.0
    %3882 = vmatpush1.msra.mxu0 %v1166
    %3883 = vmatprep.subr.mxu0 0.0
    %3884 = vmatpush1.msra.mxu0 %v1167
    %3885 = vmatprep.subr.mxu0 0.0
    %3886 = vmatpush1.msra.mxu0 %v1168
    %3887 = vmatprep.subr.mxu0 0.0
    %3888 = vmatpush1.msra.mxu0 %v1169
    %3889 = vmatprep.mubr.f32.mxu0 %v115
    %3890 = vmatmul.mubr.f32.gmra.mrb[0].mxu0 %v114
    %v3891 = vpop.f32.mrb[0].mxu0
    %v3892 = vadd.f32 %v3822, %v3891
    %v3893 = vpop.f32.mrb[0].mxu0
    %3894 = vdwg.mxu0
    %3895 = vmatprep.subr.mxu0 0.0
    %3896 = vmatpush1.msra.mxu0 %v1170
    %3897 = vmatprep.subr.mxu0 0.0
    %3898 = vmatpush1.msra.mxu0 %v1171
    %3899 = vmatprep.subr.mxu0 0.0
    %3900 = vmatpush1.msra.mxu0 %v1172
    %3901 = vmatprep.subr.mxu0 0.0
    %3902 = vmatpush1.msra.mxu0 %v1173
    %3903 = vmatprep.subr.mxu0 0.0
    %3904 = vmatpush1.msra.mxu0 %v1174
    %3905 = vmatprep.subr.mxu0 0.0
    %3906 = vmatpush1.msra.mxu0 %v1175
    %3907 = vmatprep.subr.mxu0 0.0
    %3908 = vmatpush1.msra.mxu0 %v1176
    %3909 = vmatprep.subr.mxu0 0.0
    %3910 = vmatpush1.msra.mxu0 %v1177
    %3911 = vmatprep.subr.mxu0 0.0
    %3912 = vmatpush1.msra.mxu0 %v1178
    %3913 = vmatprep.subr.mxu0 0.0
    %3914 = vmatpush1.msra.mxu0 %v1179
    %3915 = vmatprep.subr.mxu0 0.0
    %3916 = vmatpush1.msra.mxu0 %v1180
    %3917 = vmatprep.subr.mxu0 0.0
    %3918 = vmatpush1.msra.mxu0 %v1181
    %3919 = vmatprep.subr.mxu0 0.0
    %3920 = vmatpush1.msra.mxu0 %v1182
    %3921 = vmatprep.subr.mxu0 0.0
    %3922 = vmatpush1.msra.mxu0 %v1183
    %3923 = vmatprep.subr.mxu0 0.0
    %3924 = vmatpush1.msra.mxu0 %v1184
    %3925 = vmatprep.subr.mxu0 0.0
    %3926 = vmatpush1.msra.mxu0 %v1185
    %3927 = vmatprep.subr.mxu0 0.0
    %3928 = vmatpush1.msra.mxu0 %v1186
    %3929 = vmatprep.subr.mxu0 0.0
    %3930 = vmatpush1.msra.mxu0 %v1187
    %3931 = vmatprep.subr.mxu0 0.0
    %3932 = vmatpush1.msra.mxu0 %v1188
    %3933 = vmatprep.subr.mxu0 0.0
    %3934 = vmatpush1.msra.mxu0 %v1189
    %3935 = vmatprep.subr.mxu0 0.0
    %3936 = vmatpush1.msra.mxu0 %v1190
    %3937 = vmatprep.subr.mxu0 0.0
    %3938 = vmatpush1.msra.mxu0 %v1191
    %3939 = vmatprep.subr.mxu0 0.0
    %3940 = vmatpush1.msra.mxu0 %v1192
    %3941 = vmatprep.subr.mxu0 0.0
    %3942 = vmatpush1.msra.mxu0 %v1193
    %3943 = vmatprep.subr.mxu0 0.0
    %3944 = vmatpush1.msra.mxu0 %v1194
    %3945 = vmatprep.subr.mxu0 0.0
    %3946 = vmatpush1.msra.mxu0 %v1195
    %3947 = vmatprep.subr.mxu0 0.0
    %3948 = vmatpush1.msra.mxu0 %v1196
    %3949 = vmatprep.subr.mxu0 0.0
    %3950 = vmatpush1.msra.mxu0 %v1197
    %3951 = vmatprep.subr.mxu0 0.0
    %3952 = vmatpush1.msra.mxu0 %v1198
    %3953 = vmatprep.subr.mxu0 0.0
    %3954 = vmatpush1.msra.mxu0 %v1199
    %3955 = vmatprep.subr.mxu0 0.0
    %3956 = vmatpush1.msra.mxu0 %v1200
    %3957 = vmatprep.subr.mxu0 0.0
    %3958 = vmatpush1.msra.mxu0 %v1201
    %3959 = vmatprep.mubr.f32.mxu0 %v117
    %3960 = vmatmul.mubr.f32.gmra.mrb[0].mxu0 %v116
    %v3961 = vpop.f32.mrb[0].mxu0
    %v3962 = vadd.f32 %v3892, %v3961
    %v3963 = vpop.f32.mrb[0].mxu0
    %3964 = vdwg.mxu0
    %3965 = vmatprep.subr.mxu0 0.0
    %3966 = vmatpush1.msra.mxu0 %v1202
    %3967 = vmatprep.subr.mxu0 0.0
    %3968 = vmatpush1.msra.mxu0 %v1203
    %3969 = vmatprep.subr.mxu0 0.0
    %3970 = vmatpush1.msra.mxu0 %v1204
    %3971 = vmatprep.subr.mxu0 0.0
    %3972 = vmatpush1.msra.mxu0 %v1205
    %3973 = vmatprep.subr.mxu0 0.0
    %3974 = vmatpush1.msra.mxu0 %v1206
    %3975 = vmatprep.subr.mxu0 0.0
    %3976 = vmatpush1.msra.mxu0 %v1207
    %3977 = vmatprep.subr.mxu0 0.0
    %3978 = vmatpush1.msra.mxu0 %v1208
    %3979 = vmatprep.subr.mxu0 0.0
    %3980 = vmatpush1.msra.mxu0 %v1209
    %3981 = vmatprep.subr.mxu0 0.0
    %3982 = vmatpush1.msra.mxu0 %v1210
    %3983 = vmatprep.subr.mxu0 0.0
    %3984 = vmatpush1.msra.mxu0 %v1211
    %3985 = vmatprep.subr.mxu0 0.0
    %3986 = vmatpush1.msra.mxu0 %v1212
    %3987 = vmatprep.subr.mxu0 0.0
    %3988 = vmatpush1.msra.mxu0 %v1213
    %3989 = vmatprep.subr.mxu0 0.0
    %3990 = vmatpush1.msra.mxu0 %v1214
    %3991 = vmatprep.subr.mxu0 0.0
    %3992 = vmatpush1.msra.mxu0 %v1215
    %3993 = vmatprep.subr.mxu0 0.0
    %3994 = vmatpush1.msra.mxu0 %v1216
    %3995 = vmatprep.subr.mxu0 0.0
    %3996 = vmatpush1.msra.mxu0 %v1217
    %3997 = vmatprep.subr.mxu0 0.0
    %3998 = vmatpush1.msra.mxu0 %v1218
    %3999 = vmatprep.subr.mxu0 0.0
    %4000 = vmatpush1.msra.mxu0 %v1219
    %4001 = vmatprep.subr.mxu0 0.0
    %4002 = vmatpush1.msra.mxu0 %v1220
    %4003 = vmatprep.subr.mxu0 0.0
    %4004 = vmatpush1.msra.mxu0 %v1221
    %4005 = vmatprep.subr.mxu0 0.0
    %4006 = vmatpush1.msra.mxu0 %v1222
    %4007 = vmatprep.subr.mxu0 0.0
    %4008 = vmatpush1.msra.mxu0 %v1223
    %4009 = vmatprep.subr.mxu0 0.0
    %4010 = vmatpush1.msra.mxu0 %v1224
    %4011 = vmatprep.subr.mxu0 0.0
    %4012 = vmatpush1.msra.mxu0 %v1225
    %4013 = vmatprep.subr.mxu0 0.0
    %4014 = vmatpush1.msra.mxu0 %v1226
    %4015 = vmatprep.subr.mxu0 0.0
    %4016 = vmatpush1.msra.mxu0 %v1227
    %4017 = vmatprep.subr.mxu0 0.0
    %4018 = vmatpush1.msra.mxu0 %v1228
    %4019 = vmatprep.subr.mxu0 0.0
    %4020 = vmatpush1.msra.mxu0 %v1229
    %4021 = vmatprep.subr.mxu0 0.0
    %4022 = vmatpush1.msra.mxu0 %v1230
    %4023 = vmatprep.subr.mxu0 0.0
    %4024 = vmatpush1.msra.mxu0 %v1231
    %4025 = vmatprep.subr.mxu0 0.0
    %4026 = vmatpush1.msra.mxu0 %v1232
    %4027 = vmatprep.subr.mxu0 0.0
    %4028 = vmatpush1.msra.mxu0 %v1233
    %4029 = vmatprep.mubr.f32.mxu0 %v119
    %4030 = vmatmul.mubr.f32.gmra.mrb[0].mxu0 %v118
    %v4031 = vpop.f32.mrb[0].mxu0
    %v4032 = vadd.f32 %v3962, %v4031
    %v4033 = vpop.f32.mrb[0].mxu0
    %4034 = vdwg.mxu0
    %4035 = vmatprep.subr.mxu0 0.0
    %4036 = vmatpush1.msra.mxu0 %v1234
    %4037 = vmatprep.subr.mxu0 0.0
    %4038 = vmatpush1.msra.mxu0 %v1235
    %4039 = vmatprep.subr.mxu0 0.0
    %4040 = vmatpush1.msra.mxu0 %v1236
    %4041 = vmatprep.subr.mxu0 0.0
    %4042 = vmatpush1.msra.mxu0 %v1237
    %4043 = vmatprep.subr.mxu0 0.0
    %4044 = vmatpush1.msra.mxu0 %v1238
    %4045 = vmatprep.subr.mxu0 0.0
    %4046 = vmatpush1.msra.mxu0 %v1239
    %4047 = vmatprep.subr.mxu0 0.0
    %4048 = vmatpush1.msra.mxu0 %v1240
    %4049 = vmatprep.subr.mxu0 0.0
    %4050 = vmatpush1.msra.mxu0 %v1241
    %4051 = vmatprep.subr.mxu0 0.0
    %4052 = vmatpush1.msra.mxu0 %v1242
    %4053 = vmatprep.subr.mxu0 0.0
    %4054 = vmatpush1.msra.mxu0 %v1243
    %4055 = vmatprep.subr.mxu0 0.0
    %4056 = vmatpush1.msra.mxu0 %v1244
    %4057 = vmatprep.subr.mxu0 0.0
    %4058 = vmatpush1.msra.mxu0 %v1245
    %4059 = vmatprep.subr.mxu0 0.0
    %4060 = vmatpush1.msra.mxu0 %v1246
    %4061 = vmatprep.subr.mxu0 0.0
    %4062 = vmatpush1.msra.mxu0 %v1247
    %4063 = vmatprep.subr.mxu0 0.0
    %4064 = vmatpush1.msra.mxu0 %v1248
    %4065 = vmatprep.subr.mxu0 0.0
    %4066 = vmatpush1.msra.mxu0 %v1249
    %4067 = vmatprep.subr.mxu0 0.0
    %4068 = vmatpush1.msra.mxu0 %v1250
    %4069 = vmatprep.subr.mxu0 0.0
    %4070 = vmatpush1.msra.mxu0 %v1251
    %4071 = vmatprep.subr.mxu0 0.0
    %4072 = vmatpush1.msra.mxu0 %v1252
    %4073 = vmatprep.subr.mxu0 0.0
    %4074 = vmatpush1.msra.mxu0 %v1253
    %4075 = vmatprep.subr.mxu0 0.0
    %4076 = vmatpush1.msra.mxu0 %v1254
    %4077 = vmatprep.subr.mxu0 0.0
    %4078 = vmatpush1.msra.mxu0 %v1255
    %4079 = vmatprep.subr.mxu0 0.0
    %4080 = vmatpush1.msra.mxu0 %v1256
    %4081 = vmatprep.subr.mxu0 0.0
    %4082 = vmatpush1.msra.mxu0 %v1257
    %4083 = vmatprep.subr.mxu0 0.0
    %4084 = vmatpush1.msra.mxu0 %v1258
    %4085 = vmatprep.subr.mxu0 0.0
    %4086 = vmatpush1.msra.mxu0 %v1259
    %4087 = vmatprep.subr.mxu0 0.0
    %4088 = vmatpush1.msra.mxu0 %v1260
    %4089 = vmatprep.subr.mxu0 0.0
    %4090 = vmatpush1.msra.mxu0 %v1261
    %4091 = vmatprep.subr.mxu0 0.0
    %4092 = vmatpush1.msra.mxu0 %v1262
    %4093 = vmatprep.subr.mxu0 0.0
    %4094 = vmatpush1.msra.mxu0 %v1263
    %4095 = vmatprep.subr.mxu0 0.0
    %4096 = vmatpush1.msra.mxu0 %v1264
    %4097 = vmatprep.subr.mxu0 0.0
    %4098 = vmatpush1.msra.mxu0 %v1265
    %4099 = vmatprep.mubr.f32.mxu0 %v121
    %4100 = vmatmul.mubr.f32.gmra.mrb[0].mxu0 %v120
    %v4101 = vpop.f32.mrb[0].mxu0
    %v4102 = vadd.f32 %v4032, %v4101
    %v4103 = vpop.f32.mrb[0].mxu0
    %4104 = vdwg.mxu0
    %4105 = vmatprep.subr.mxu0 0.0
    %4106 = vmatpush1.msra.mxu0 %v1266
    %4107 = vmatprep.subr.mxu0 0.0
    %4108 = vmatpush1.msra.mxu0 %v1267
    %4109 = vmatprep.subr.mxu0 0.0
    %4110 = vmatpush1.msra.mxu0 %v1268
    %4111 = vmatprep.subr.mxu0 0.0
    %4112 = vmatpush1.msra.mxu0 %v1269
    %4113 = vmatprep.subr.mxu0 0.0
    %4114 = vmatpush1.msra.mxu0 %v1270
    %4115 = vmatprep.subr.mxu0 0.0
    %4116 = vmatpush1.msra.mxu0 %v1271
    %4117 = vmatprep.subr.mxu0 0.0
    %4118 = vmatpush1.msra.mxu0 %v1272
    %4119 = vmatprep.subr.mxu0 0.0
    %4120 = vmatpush1.msra.mxu0 %v1273
    %4121 = vmatprep.subr.mxu0 0.0
    %4122 = vmatpush1.msra.mxu0 %v1274
    %4123 = vmatprep.subr.mxu0 0.0
    %4124 = vmatpush1.msra.mxu0 %v1275
    %4125 = vmatprep.subr.mxu0 0.0
    %4126 = vmatpush1.msra.mxu0 %v1276
    %4127 = vmatprep.subr.mxu0 0.0
    %4128 = vmatpush1.msra.mxu0 %v1277
    %4129 = vmatprep.subr.mxu0 0.0
    %4130 = vmatpush1.msra.mxu0 %v1278
    %4131 = vmatprep.subr.mxu0 0.0
    %4132 = vmatpush1.msra.mxu0 %v1279
    %4133 = vmatprep.subr.mxu0 0.0
    %4134 = vmatpush1.msra.mxu0 %v1280
    %4135 = vmatprep.subr.mxu0 0.0
    %4136 = vmatpush1.msra.mxu0 %v1281
    %4137 = vmatprep.subr.mxu0 0.0
    %4138 = vmatpush1.msra.mxu0 %v1282
    %4139 = vmatprep.subr.mxu0 0.0
    %4140 = vmatpush1.msra.mxu0 %v1283
    %4141 = vmatprep.subr.mxu0 0.0
    %4142 = vmatpush1.msra.mxu0 %v1284
    %4143 = vmatprep.subr.mxu0 0.0
    %4144 = vmatpush1.msra.mxu0 %v1285
    %4145 = vmatprep.subr.mxu0 0.0
    %4146 = vmatpush1.msra.mxu0 %v1286
    %4147 = vmatprep.subr.mxu0 0.0
    %4148 = vmatpush1.msra.mxu0 %v1287
    %4149 = vmatprep.subr.mxu0 0.0
    %4150 = vmatpush1.msra.mxu0 %v1288
    %4151 = vmatprep.subr.mxu0 0.0
    %4152 = vmatpush1.msra.mxu0 %v1289
    %4153 = vmatprep.subr.mxu0 0.0
    %4154 = vmatpush1.msra.mxu0 %v1290
    %4155 = vmatprep.subr.mxu0 0.0
    %4156 = vmatpush1.msra.mxu0 %v1291
    %4157 = vmatprep.subr.mxu0 0.0
    %4158 = vmatpush1.msra.mxu0 %v1292
    %4159 = vmatprep.subr.mxu0 0.0
    %4160 = vmatpush1.msra.mxu0 %v1293
    %4161 = vmatprep.subr.mxu0 0.0
    %4162 = vmatpush1.msra.mxu0 %v1294
    %4163 = vmatprep.subr.mxu0 0.0
    %4164 = vmatpush1.msra.mxu0 %v1295
    %4165 = vmatprep.subr.mxu0 0.0
    %4166 = vmatpush1.msra.mxu0 %v1296
    %4167 = vmatprep.subr.mxu0 0.0
    %4168 = vmatpush1.msra.mxu0 %v1297
    %4169 = vmatprep.mubr.f32.mxu0 %v123
    %4170 = vmatmul.mubr.f32.gmra.mrb[0].mxu0 %v122
    %v4171 = vpop.f32.mrb[0].mxu0
    %v4172 = vadd.f32 %v4102, %v4171
    %v4173 = vpop.f32.mrb[0].mxu0
    %4174 = vdwg.mxu0
    %4175 = vmatprep.subr.mxu0 0.0
    %4176 = vmatpush1.msra.mxu0 %v1298
    %4177 = vmatprep.subr.mxu0 0.0
    %4178 = vmatpush1.msra.mxu0 %v1299
    %4179 = vmatprep.subr.mxu0 0.0
    %4180 = vmatpush1.msra.mxu0 %v1300
    %4181 = vmatprep.subr.mxu0 0.0
    %4182 = vmatpush1.msra.mxu0 %v1301
    %4183 = vmatprep.subr.mxu0 0.0
    %4184 = vmatpush1.msra.mxu0 %v1302
    %4185 = vmatprep.subr.mxu0 0.0
    %4186 = vmatpush1.msra.mxu0 %v1303
    %4187 = vmatprep.subr.mxu0 0.0
    %4188 = vmatpush1.msra.mxu0 %v1304
    %4189 = vmatprep.subr.mxu0 0.0
    %4190 = vmatpush1.msra.mxu0 %v1305
    %4191 = vmatprep.subr.mxu0 0.0
    %4192 = vmatpush1.msra.mxu0 %v1306
    %4193 = vmatprep.subr.mxu0 0.0
    %4194 = vmatpush1.msra.mxu0 %v1307
    %4195 = vmatprep.subr.mxu0 0.0
    %4196 = vmatpush1.msra.mxu0 %v1308
    %4197 = vmatprep.subr.mxu0 0.0
    %4198 = vmatpush1.msra.mxu0 %v1309
    %4199 = vmatprep.subr.mxu0 0.0
    %4200 = vmatpush1.msra.mxu0 %v1310
    %4201 = vmatprep.subr.mxu0 0.0
    %4202 = vmatpush1.msra.mxu0 %v1311
    %4203 = vmatprep.subr.mxu0 0.0
    %4204 = vmatpush1.msra.mxu0 %v1312
    %4205 = vmatprep.subr.mxu0 0.0
    %4206 = vmatpush1.msra.mxu0 %v1313
    %4207 = vmatprep.subr.mxu0 0.0
    %4208 = vmatpush1.msra.mxu0 %v1314
    %4209 = vmatprep.subr.mxu0 0.0
    %4210 = vmatpush1.msra.mxu0 %v1315
    %4211 = vmatprep.subr.mxu0 0.0
    %4212 = vmatpush1.msra.mxu0 %v1316
    %4213 = vmatprep.subr.mxu0 0.0
    %4214 = vmatpush1.msra.mxu0 %v1317
    %4215 = vmatprep.subr.mxu0 0.0
    %4216 = vmatpush1.msra.mxu0 %v1318
    %4217 = vmatprep.subr.mxu0 0.0
    %4218 = vmatpush1.msra.mxu0 %v1319
    %4219 = vmatprep.subr.mxu0 0.0
    %4220 = vmatpush1.msra.mxu0 %v1320
    %4221 = vmatprep.subr.mxu0 0.0
    %4222 = vmatpush1.msra.mxu0 %v1321
    %4223 = vmatprep.subr.mxu0 0.0
    %4224 = vmatpush1.msra.mxu0 %v1322
    %4225 = vmatprep.subr.mxu0 0.0
    %4226 = vmatpush1.msra.mxu0 %v1323
    %4227 = vmatprep.subr.mxu0 0.0
    %4228 = vmatpush1.msra.mxu0 %v1324
    %4229 = vmatprep.subr.mxu0 0.0
    %4230 = vmatpush1.msra.mxu0 %v1325
    %4231 = vmatprep.subr.mxu0 0.0
    %4232 = vmatpush1.msra.mxu0 %v1326
    %4233 = vmatprep.subr.mxu0 0.0
    %4234 = vmatpush1.msra.mxu0 %v1327
    %4235 = vmatprep.subr.mxu0 0.0
    %4236 = vmatpush1.msra.mxu0 %v1328
    %4237 = vmatprep.subr.mxu0 0.0
    %4238 = vmatpush1.msra.mxu0 %v1329
    %4239 = vmatprep.mubr.f32.mxu0 %v125
    %4240 = vmatmul.mubr.f32.gmra.mrb[0].mxu0 %v124
    %v4241 = vpop.f32.mrb[0].mxu0
    %v4242 = vadd.f32 %v4172, %v4241
    %v4243 = vpop.f32.mrb[0].mxu0
    %4244 = vdwg.mxu0
    %4245 = vmatprep.subr.mxu0 0.0
    %4246 = vmatpush1.msra.mxu0 %v1330
    %4247 = vmatprep.subr.mxu0 0.0
    %4248 = vmatpush1.msra.mxu0 %v1331
    %4249 = vmatprep.subr.mxu0 0.0
    %4250 = vmatpush1.msra.mxu0 %v1332
    %4251 = vmatprep.subr.mxu0 0.0
    %4252 = vmatpush1.msra.mxu0 %v1333
    %4253 = vmatprep.subr.mxu0 0.0
    %4254 = vmatpush1.msra.mxu0 %v1334
    %4255 = vmatprep.subr.mxu0 0.0
    %4256 = vmatpush1.msra.mxu0 %v1335
    %4257 = vmatprep.subr.mxu0 0.0
    %4258 = vmatpush1.msra.mxu0 %v1336
    %4259 = vmatprep.subr.mxu0 0.0
    %4260 = vmatpush1.msra.mxu0 %v1337
    %4261 = vmatprep.subr.mxu0 0.0
    %4262 = vmatpush1.msra.mxu0 %v1338
    %4263 = vmatprep.subr.mxu0 0.0
    %4264 = vmatpush1.msra.mxu0 %v1339
    %4265 = vmatprep.subr.mxu0 0.0
    %4266 = vmatpush1.msra.mxu0 %v1340
    %4267 = vmatprep.subr.mxu0 0.0
    %4268 = vmatpush1.msra.mxu0 %v1341
    %4269 = vmatprep.subr.mxu0 0.0
    %4270 = vmatpush1.msra.mxu0 %v1342
    %4271 = vmatprep.subr.mxu0 0.0
    %4272 = vmatpush1.msra.mxu0 %v1343
    %4273 = vmatprep.subr.mxu0 0.0
    %4274 = vmatpush1.msra.mxu0 %v1344
    %4275 = vmatprep.subr.mxu0 0.0
    %4276 = vmatpush1.msra.mxu0 %v1345
    %4277 = vmatprep.subr.mxu0 0.0
    %4278 = vmatpush1.msra.mxu0 %v1346
    %4279 = vmatprep.subr.mxu0 0.0
    %4280 = vmatpush1.msra.mxu0 %v1347
    %4281 = vmatprep.subr.mxu0 0.0
    %4282 = vmatpush1.msra.mxu0 %v1348
    %4283 = vmatprep.subr.mxu0 0.0
    %4284 = vmatpush1.msra.mxu0 %v1349
    %4285 = vmatprep.subr.mxu0 0.0
    %4286 = vmatpush1.msra.mxu0 %v1350
    %4287 = vmatprep.subr.mxu0 0.0
    %4288 = vmatpush1.msra.mxu0 %v1351
    %4289 = vmatprep.subr.mxu0 0.0
    %4290 = vmatpush1.msra.mxu0 %v1352
    %4291 = vmatprep.subr.mxu0 0.0
    %4292 = vmatpush1.msra.mxu0 %v1353
    %4293 = vmatprep.subr.mxu0 0.0
    %4294 = vmatpush1.msra.mxu0 %v1354
    %4295 = vmatprep.subr.mxu0 0.0
    %4296 = vmatpush1.msra.mxu0 %v1355
    %4297 = vmatprep.subr.mxu0 0.0
    %4298 = vmatpush1.msra.mxu0 %v1356
    %4299 = vmatprep.subr.mxu0 0.0
    %4300 = vmatpush1.msra.mxu0 %v1357
    %4301 = vmatprep.subr.mxu0 0.0
    %4302 = vmatpush1.msra.mxu0 %v1358
    %4303 = vmatprep.subr.mxu0 0.0
    %4304 = vmatpush1.msra.mxu0 %v1359
    %4305 = vmatprep.subr.mxu0 0.0
    %4306 = vmatpush1.msra.mxu0 %v1360
    %4307 = vmatprep.subr.mxu0 0.0
    %4308 = vmatpush1.msra.mxu0 %v1361
    %4309 = vmatprep.mubr.f32.mxu0 %v127
    %4310 = vmatmul.mubr.f32.gmra.mrb[0].mxu0 %v126
    %v4311 = vpop.f32.mrb[0].mxu0
    %v4312 = vadd.f32 %v4242, %v4311
    %v4313 = vpop.f32.mrb[0].mxu0
    %4314 = vdwg.mxu0
    %4315 = vmatprep.subr.mxu0 0.0
    %4316 = vmatpush1.msra.mxu0 %v1362
    %4317 = vmatprep.subr.mxu0 0.0
    %4318 = vmatpush1.msra.mxu0 %v1363
    %4319 = vmatprep.subr.mxu0 0.0
    %4320 = vmatpush1.msra.mxu0 %v1364
    %4321 = vmatprep.subr.mxu0 0.0
    %4322 = vmatpush1.msra.mxu0 %v1365
    %4323 = vmatprep.subr.mxu0 0.0
    %4324 = vmatpush1.msra.mxu0 %v1366
    %4325 = vmatprep.subr.mxu0 0.0
    %4326 = vmatpush1.msra.mxu0 %v1367
    %4327 = vmatprep.subr.mxu0 0.0
    %4328 = vmatpush1.msra.mxu0 %v1368
    %4329 = vmatprep.subr.mxu0 0.0
    %4330 = vmatpush1.msra.mxu0 %v1369
    %4331 = vmatprep.subr.mxu0 0.0
    %4332 = vmatpush1.msra.mxu0 %v1370
    %4333 = vmatprep.subr.mxu0 0.0
    %4334 = vmatpush1.msra.mxu0 %v1371
    %4335 = vmatprep.subr.mxu0 0.0
    %4336 = vmatpush1.msra.mxu0 %v1372
    %4337 = vmatprep.subr.mxu0 0.0
    %4338 = vmatpush1.msra.mxu0 %v1373
    %4339 = vmatprep.subr.mxu0 0.0
    %4340 = vmatpush1.msra.mxu0 %v1374
    %4341 = vmatprep.subr.mxu0 0.0
    %4342 = vmatpush1.msra.mxu0 %v1375
    %4343 = vmatprep.subr.mxu0 0.0
    %4344 = vmatpush1.msra.mxu0 %v1376
    %4345 = vmatprep.subr.mxu0 0.0
    %4346 = vmatpush1.msra.mxu0 %v1377
    %4347 = vmatprep.subr.mxu0 0.0
    %4348 = vmatpush1.msra.mxu0 %v1378
    %4349 = vmatprep.subr.mxu0 0.0
    %4350 = vmatpush1.msra.mxu0 %v1379
    %4351 = vmatprep.subr.mxu0 0.0
    %4352 = vmatpush1.msra.mxu0 %v1380
    %4353 = vmatprep.subr.mxu0 0.0
    %4354 = vmatpush1.msra.mxu0 %v1381
    %4355 = vmatprep.subr.mxu0 0.0
    %4356 = vmatpush1.msra.mxu0 %v1382
    %4357 = vmatprep.subr.mxu0 0.0
    %4358 = vmatpush1.msra.mxu0 %v1383
    %4359 = vmatprep.subr.mxu0 0.0
    %4360 = vmatpush1.msra.mxu0 %v1384
    %4361 = vmatprep.subr.mxu0 0.0
    %4362 = vmatpush1.msra.mxu0 %v1385
    %4363 = vmatprep.subr.mxu0 0.0
    %4364 = vmatpush1.msra.mxu0 %v1386
    %4365 = vmatprep.subr.mxu0 0.0
    %4366 = vmatpush1.msra.mxu0 %v1387
    %4367 = vmatprep.subr.mxu0 0.0
    %4368 = vmatpush1.msra.mxu0 %v1388
    %4369 = vmatprep.subr.mxu0 0.0
    %4370 = vmatpush1.msra.mxu0 %v1389
    %4371 = vmatprep.subr.mxu0 0.0
    %4372 = vmatpush1.msra.mxu0 %v1390
    %4373 = vmatprep.subr.mxu0 0.0
    %4374 = vmatpush1.msra.mxu0 %v1391
    %4375 = vmatprep.subr.mxu0 0.0
    %4376 = vmatpush1.msra.mxu0 %v1392
    %4377 = vmatprep.subr.mxu0 0.0
    %4378 = vmatpush1.msra.mxu0 %v1393
    %4379 = vmatprep.mubr.f32.mxu0 %v129
    %4380 = vmatmul.mubr.f32.gmra.mrb[0].mxu0 %v128
    %v4381 = vpop.f32.mrb[0].mxu0
    %v4382 = vadd.f32 %v4312, %v4381
    %v4383 = vpop.f32.mrb[0].mxu0
    %4384 = vdwg.mxu0
    %4385 = vmatprep.subr.mxu0 0.0
    %4386 = vmatpush1.msra.mxu0 %v1394
    %4387 = vmatprep.subr.mxu0 0.0
    %4388 = vmatpush1.msra.mxu0 %v1395
    %4389 = vmatprep.subr.mxu0 0.0
    %4390 = vmatpush1.msra.mxu0 %v1396
    %4391 = vmatprep.subr.mxu0 0.0
    %4392 = vmatpush1.msra.mxu0 %v1397
    %4393 = vmatprep.subr.mxu0 0.0
    %4394 = vmatpush1.msra.mxu0 %v1398
    %4395 = vmatprep.subr.mxu0 0.0
    %4396 = vmatpush1.msra.mxu0 %v1399
    %4397 = vmatprep.subr.mxu0 0.0
    %4398 = vmatpush1.msra.mxu0 %v1400
    %4399 = vmatprep.subr.mxu0 0.0
    %4400 = vmatpush1.msra.mxu0 %v1401
    %4401 = vmatprep.subr.mxu0 0.0
    %4402 = vmatpush1.msra.mxu0 %v1402
    %4403 = vmatprep.subr.mxu0 0.0
    %4404 = vmatpush1.msra.mxu0 %v1403
    %4405 = vmatprep.subr.mxu0 0.0
    %4406 = vmatpush1.msra.mxu0 %v1404
    %4407 = vmatprep.subr.mxu0 0.0
    %4408 = vmatpush1.msra.mxu0 %v1405
    %4409 = vmatprep.subr.mxu0 0.0
    %4410 = vmatpush1.msra.mxu0 %v1406
    %4411 = vmatprep.subr.mxu0 0.0
    %4412 = vmatpush1.msra.mxu0 %v1407
    %4413 = vmatprep.subr.mxu0 0.0
    %4414 = vmatpush1.msra.mxu0 %v1408
    %4415 = vmatprep.subr.mxu0 0.0
    %4416 = vmatpush1.msra.mxu0 %v1409
    %4417 = vmatprep.subr.mxu0 0.0
    %4418 = vmatpush1.msra.mxu0 %v1410
    %4419 = vmatprep.subr.mxu0 0.0
    %4420 = vmatpush1.msra.mxu0 %v1411
    %4421 = vmatprep.subr.mxu0 0.0
    %4422 = vmatpush1.msra.mxu0 %v1412
    %4423 = vmatprep.subr.mxu0 0.0
    %4424 = vmatpush1.msra.mxu0 %v1413
    %4425 = vmatprep.subr.mxu0 0.0
    %4426 = vmatpush1.msra.mxu0 %v1414
    %4427 = vmatprep.subr.mxu0 0.0
    %4428 = vmatpush1.msra.mxu0 %v1415
    %4429 = vmatprep.subr.mxu0 0.0
    %4430 = vmatpush1.msra.mxu0 %v1416
    %4431 = vmatprep.subr.mxu0 0.0
    %4432 = vmatpush1.msra.mxu0 %v1417
    %4433 = vmatprep.subr.mxu0 0.0
    %4434 = vmatpush1.msra.mxu0 %v1418
    %4435 = vmatprep.subr.mxu0 0.0
    %4436 = vmatpush1.msra.mxu0 %v1419
    %4437 = vmatprep.subr.mxu0 0.0
    %4438 = vmatpush1.msra.mxu0 %v1420
    %4439 = vmatprep.subr.mxu0 0.0
    %4440 = vmatpush1.msra.mxu0 %v1421
    %4441 = vmatprep.subr.mxu0 0.0
    %4442 = vmatpush1.msra.mxu0 %v1422
    %4443 = vmatprep.subr.mxu0 0.0
    %4444 = vmatpush1.msra.mxu0 %v1423
    %4445 = vmatprep.subr.mxu0 0.0
    %4446 = vmatpush1.msra.mxu0 %v1424
    %4447 = vmatprep.subr.mxu0 0.0
    %4448 = vmatpush1.msra.mxu0 %v1425
    %4449 = vmatprep.mubr.f32.mxu0 %v131
    %4450 = vmatmul.mubr.f32.gmra.mrb[0].mxu0 %v130
    %v4451 = vpop.f32.mrb[0].mxu0
    %v4452 = vadd.f32 %v4382, %v4451
    %v4453 = vpop.f32.mrb[0].mxu0
    %4454 = vdwg.mxu0
    %4455 = vmatprep.subr.mxu0 0.0
    %4456 = vmatpush1.msra.mxu0 %v1426
    %4457 = vmatprep.subr.mxu0 0.0
    %4458 = vmatpush1.msra.mxu0 %v1427
    %4459 = vmatprep.subr.mxu0 0.0
    %4460 = vmatpush1.msra.mxu0 %v1428
    %4461 = vmatprep.subr.mxu0 0.0
    %4462 = vmatpush1.msra.mxu0 %v1429
    %4463 = vmatprep.subr.mxu0 0.0
    %4464 = vmatpush1.msra.mxu0 %v1430
    %4465 = vmatprep.subr.mxu0 0.0
    %4466 = vmatpush1.msra.mxu0 %v1431
    %4467 = vmatprep.subr.mxu0 0.0
    %4468 = vmatpush1.msra.mxu0 %v1432
    %4469 = vmatprep.subr.mxu0 0.0
    %4470 = vmatpush1.msra.mxu0 %v1433
    %4471 = vmatprep.subr.mxu0 0.0
    %4472 = vmatpush1.msra.mxu0 %v1434
    %4473 = vmatprep.subr.mxu0 0.0
    %4474 = vmatpush1.msra.mxu0 %v1435
    %4475 = vmatprep.subr.mxu0 0.0
    %4476 = vmatpush1.msra.mxu0 %v1436
    %4477 = vmatprep.subr.mxu0 0.0
    %4478 = vmatpush1.msra.mxu0 %v1437
    %4479 = vmatprep.subr.mxu0 0.0
    %4480 = vmatpush1.msra.mxu0 %v1438
    %4481 = vmatprep.subr.mxu0 0.0
    %4482 = vmatpush1.msra.mxu0 %v1439
    %4483 = vmatprep.subr.mxu0 0.0
    %4484 = vmatpush1.msra.mxu0 %v1440
    %4485 = vmatprep.subr.mxu0 0.0
    %4486 = vmatpush1.msra.mxu0 %v1441
    %4487 = vmatprep.subr.mxu0 0.0
    %4488 = vmatpush1.msra.mxu0 %v1442
    %4489 = vmatprep.subr.mxu0 0.0
    %4490 = vmatpush1.msra.mxu0 %v1443
    %4491 = vmatprep.subr.mxu0 0.0
    %4492 = vmatpush1.msra.mxu0 %v1444
    %4493 = vmatprep.subr.mxu0 0.0
    %4494 = vmatpush1.msra.mxu0 %v1445
    %4495 = vmatprep.subr.mxu0 0.0
    %4496 = vmatpush1.msra.mxu0 %v1446
    %4497 = vmatprep.subr.mxu0 0.0
    %4498 = vmatpush1.msra.mxu0 %v1447
    %4499 = vmatprep.subr.mxu0 0.0
    %4500 = vmatpush1.msra.mxu0 %v1448
    %4501 = vmatprep.subr.mxu0 0.0
    %4502 = vmatpush1.msra.mxu0 %v1449
    %4503 = vmatprep.subr.mxu0 0.0
    %4504 = vmatpush1.msra.mxu0 %v1450
    %4505 = vmatprep.subr.mxu0 0.0
    %4506 = vmatpush1.msra.mxu0 %v1451
    %4507 = vmatprep.subr.mxu0 0.0
    %4508 = vmatpush1.msra.mxu0 %v1452
    %4509 = vmatprep.subr.mxu0 0.0
    %4510 = vmatpush1.msra.mxu0 %v1453
    %4511 = vmatprep.subr.mxu0 0.0
    %4512 = vmatpush1.msra.mxu0 %v1454
    %4513 = vmatprep.subr.mxu0 0.0
    %4514 = vmatpush1.msra.mxu0 %v1455
    %4515 = vmatprep.subr.mxu0 0.0
    %4516 = vmatpush1.msra.mxu0 %v1456
    %4517 = vmatprep.subr.mxu0 0.0
    %4518 = vmatpush1.msra.mxu0 %v1457
    %4519 = vmatprep.mubr.f32.mxu0 %v133
    %4520 = vmatmul.mubr.f32.gmra.mrb[0].mxu0 %v132
    %v4521 = vpop.f32.mrb[0].mxu0
    %v4522 = vadd.f32 %v4452, %v4521
    %v4523 = vpop.f32.mrb[0].mxu0
    %4524 = vdwg.mxu0
    %4525 = vmatprep.subr.mxu0 0.0
    %4526 = vmatpush1.msra.mxu0 %v1458
    %4527 = vmatprep.subr.mxu0 0.0
    %4528 = vmatpush1.msra.mxu0 %v1459
    %4529 = vmatprep.subr.mxu0 0.0
    %4530 = vmatpush1.msra.mxu0 %v1460
    %4531 = vmatprep.subr.mxu0 0.0
    %4532 = vmatpush1.msra.mxu0 %v1461
    %4533 = vmatprep.subr.mxu0 0.0
    %4534 = vmatpush1.msra.mxu0 %v1462
    %4535 = vmatprep.subr.mxu0 0.0
    %4536 = vmatpush1.msra.mxu0 %v1463
    %4537 = vmatprep.subr.mxu0 0.0
    %4538 = vmatpush1.msra.mxu0 %v1464
    %4539 = vmatprep.subr.mxu0 0.0
    %4540 = vmatpush1.msra.mxu0 %v1465
    %4541 = vmatprep.subr.mxu0 0.0
    %4542 = vmatpush1.msra.mxu0 %v1466
    %4543 = vmatprep.subr.mxu0 0.0
    %4544 = vmatpush1.msra.mxu0 %v1467
    %4545 = vmatprep.subr.mxu0 0.0
    %4546 = vmatpush1.msra.mxu0 %v1468
    %4547 = vmatprep.subr.mxu0 0.0
    %4548 = vmatpush1.msra.mxu0 %v1469
    %4549 = vmatprep.subr.mxu0 0.0
    %4550 = vmatpush1.msra.mxu0 %v1470
    %4551 = vmatprep.subr.mxu0 0.0
    %4552 = vmatpush1.msra.mxu0 %v1471
    %4553 = vmatprep.subr.mxu0 0.0
    %4554 = vmatpush1.msra.mxu0 %v1472
    %4555 = vmatprep.subr.mxu0 0.0
    %4556 = vmatpush1.msra.mxu0 %v1473
    %4557 = vmatprep.subr.mxu0 0.0
    %4558 = vmatpush1.msra.mxu0 %v1474
    %4559 = vmatprep.subr.mxu0 0.0
    %4560 = vmatpush1.msra.mxu0 %v1475
    %4561 = vmatprep.subr.mxu0 0.0
    %4562 = vmatpush1.msra.mxu0 %v1476
    %4563 = vmatprep.subr.mxu0 0.0
    %4564 = vmatpush1.msra.mxu0 %v1477
    %4565 = vmatprep.subr.mxu0 0.0
    %4566 = vmatpush1.msra.mxu0 %v1478
    %4567 = vmatprep.subr.mxu0 0.0
    %4568 = vmatpush1.msra.mxu0 %v1479
    %4569 = vmatprep.subr.mxu0 0.0
    %4570 = vmatpush1.msra.mxu0 %v1480
    %4571 = vmatprep.subr.mxu0 0.0
    %4572 = vmatpush1.msra.mxu0 %v1481
    %4573 = vmatprep.subr.mxu0 0.0
    %4574 = vmatpush1.msra.mxu0 %v1482
    %4575 = vmatprep.subr.mxu0 0.0
    %4576 = vmatpush1.msra.mxu0 %v1483
    %4577 = vmatprep.subr.mxu0 0.0
    %4578 = vmatpush1.msra.mxu0 %v1484
    %4579 = vmatprep.subr.mxu0 0.0
    %4580 = vmatpush1.msra.mxu0 %v1485
    %4581 = vmatprep.subr.mxu0 0.0
    %4582 = vmatpush1.msra.mxu0 %v1486
    %4583 = vmatprep.subr.mxu0 0.0
    %4584 = vmatpush1.msra.mxu0 %v1487
    %4585 = vmatprep.subr.mxu0 0.0
    %4586 = vmatpush1.msra.mxu0 %v1488
    %4587 = vmatprep.subr.mxu0 0.0
    %4588 = vmatpush1.msra.mxu0 %v1489
    %4589 = vmatprep.mubr.f32.mxu0 %v135
    %4590 = vmatmul.mubr.f32.gmra.mrb[0].mxu0 %v134
    %v4591 = vpop.f32.mrb[0].mxu0
    %v4592 = vadd.f32 %v4522, %v4591
    %v4593 = vpop.f32.mrb[0].mxu0
    %4594 = vdwg.mxu0
    %4595 = vmatprep.subr.mxu0 0.0
    %4596 = vmatpush1.msra.mxu0 %v1490
    %4597 = vmatprep.subr.mxu0 0.0
    %4598 = vmatpush1.msra.mxu0 %v1491
    %4599 = vmatprep.subr.mxu0 0.0
    %4600 = vmatpush1.msra.mxu0 %v1492
    %4601 = vmatprep.subr.mxu0 0.0
    %4602 = vmatpush1.msra.mxu0 %v1493
    %4603 = vmatprep.subr.mxu0 0.0
    %4604 = vmatpush1.msra.mxu0 %v1494
    %4605 = vmatprep.subr.mxu0 0.0
    %4606 = vmatpush1.msra.mxu0 %v1495
    %4607 = vmatprep.subr.mxu0 0.0
    %4608 = vmatpush1.msra.mxu0 %v1496
    %4609 = vmatprep.subr.mxu0 0.0
    %4610 = vmatpush1.msra.mxu0 %v1497
    %4611 = vmatprep.subr.mxu0 0.0
    %4612 = vmatpush1.msra.mxu0 %v1498
    %4613 = vmatprep.subr.mxu0 0.0
    %4614 = vmatpush1.msra.mxu0 %v1499
    %4615 = vmatprep.subr.mxu0 0.0
    %4616 = vmatpush1.msra.mxu0 %v1500
    %4617 = vmatprep.subr.mxu0 0.0
    %4618 = vmatpush1.msra.mxu0 %v1501
    %4619 = vmatprep.subr.mxu0 0.0
    %4620 = vmatpush1.msra.mxu0 %v1502
    %4621 = vmatprep.subr.mxu0 0.0
    %4622 = vmatpush1.msra.mxu0 %v1503
    %4623 = vmatprep.subr.mxu0 0.0
    %4624 = vmatpush1.msra.mxu0 %v1504
    %4625 = vmatprep.subr.mxu0 0.0
    %4626 = vmatpush1.msra.mxu0 %v1505
    %4627 = vmatprep.subr.mxu0 0.0
    %4628 = vmatpush1.msra.mxu0 %v1506
    %4629 = vmatprep.subr.mxu0 0.0
    %4630 = vmatpush1.msra.mxu0 %v1507
    %4631 = vmatprep.subr.mxu0 0.0
    %4632 = vmatpush1.msra.mxu0 %v1508
    %4633 = vmatprep.subr.mxu0 0.0
    %4634 = vmatpush1.msra.mxu0 %v1509
    %4635 = vmatprep.subr.mxu0 0.0
    %4636 = vmatpush1.msra.mxu0 %v1510
    %4637 = vmatprep.subr.mxu0 0.0
    %4638 = vmatpush1.msra.mxu0 %v1511
    %4639 = vmatprep.subr.mxu0 0.0
    %4640 = vmatpush1.msra.mxu0 %v1512
    %4641 = vmatprep.subr.mxu0 0.0
    %4642 = vmatpush1.msra.mxu0 %v1513
    %4643 = vmatprep.subr.mxu0 0.0
    %4644 = vmatpush1.msra.mxu0 %v1514
    %4645 = vmatprep.subr.mxu0 0.0
    %4646 = vmatpush1.msra.mxu0 %v1515
    %4647 = vmatprep.subr.mxu0 0.0
    %4648 = vmatpush1.msra.mxu0 %v1516
    %4649 = vmatprep.subr.mxu0 0.0
    %4650 = vmatpush1.msra.mxu0 %v1517
    %4651 = vmatprep.subr.mxu0 0.0
    %4652 = vmatpush1.msra.mxu0 %v1518
    %4653 = vmatprep.subr.mxu0 0.0
    %4654 = vmatpush1.msra.mxu0 %v1519
    %4655 = vmatprep.subr.mxu0 0.0
    %4656 = vmatpush1.msra.mxu0 %v1520
    %4657 = vmatprep.subr.mxu0 0.0
    %4658 = vmatpush1.msra.mxu0 %v1521
    %4659 = vmatprep.mubr.f32.mxu0 %v137
    %4660 = vmatmul.mubr.f32.gmra.mrb[0].mxu0 %v136
    %v4661 = vpop.f32.mrb[0].mxu0
    %v4662 = vadd.f32 %v4592, %v4661
    %v4663 = vpop.f32.mrb[0].mxu0
    %4664 = vdwg.mxu0
    %4665 = vmatprep.subr.mxu0 0.0
    %4666 = vmatpush1.msra.mxu0 %v1522
    %4667 = vmatprep.subr.mxu0 0.0
    %4668 = vmatpush1.msra.mxu0 %v1523
    %4669 = vmatprep.subr.mxu0 0.0
    %4670 = vmatpush1.msra.mxu0 %v1524
    %4671 = vmatprep.subr.mxu0 0.0
    %4672 = vmatpush1.msra.mxu0 %v1525
    %4673 = vmatprep.subr.mxu0 0.0
    %4674 = vmatpush1.msra.mxu0 %v1526
    %4675 = vmatprep.subr.mxu0 0.0
    %4676 = vmatpush1.msra.mxu0 %v1527
    %4677 = vmatprep.subr.mxu0 0.0
    %4678 = vmatpush1.msra.mxu0 %v1528
    %4679 = vmatprep.subr.mxu0 0.0
    %4680 = vmatpush1.msra.mxu0 %v1529
    %4681 = vmatprep.subr.mxu0 0.0
    %4682 = vmatpush1.msra.mxu0 %v1530
    %4683 = vmatprep.subr.mxu0 0.0
    %4684 = vmatpush1.msra.mxu0 %v1531
    %4685 = vmatprep.subr.mxu0 0.0
    %4686 = vmatpush1.msra.mxu0 %v1532
    %4687 = vmatprep.subr.mxu0 0.0
    %4688 = vmatpush1.msra.mxu0 %v1533
    %4689 = vmatprep.subr.mxu0 0.0
    %4690 = vmatpush1.msra.mxu0 %v1534
    %4691 = vmatprep.subr.mxu0 0.0
    %4692 = vmatpush1.msra.mxu0 %v1535
    %4693 = vmatprep.subr.mxu0 0.0
    %4694 = vmatpush1.msra.mxu0 %v1536
    %4695 = vmatprep.subr.mxu0 0.0
    %4696 = vmatpush1.msra.mxu0 %v1537
    %4697 = vmatprep.subr.mxu0 0.0
    %4698 = vmatpush1.msra.mxu0 %v1538
    %4699 = vmatprep.subr.mxu0 0.0
    %4700 = vmatpush1.msra.mxu0 %v1539
    %4701 = vmatprep.subr.mxu0 0.0
    %4702 = vmatpush1.msra.mxu0 %v1540
    %4703 = vmatprep.subr.mxu0 0.0
    %4704 = vmatpush1.msra.mxu0 %v1541
    %4705 = vmatprep.subr.mxu0 0.0
    %4706 = vmatpush1.msra.mxu0 %v1542
    %4707 = vmatprep.subr.mxu0 0.0
    %4708 = vmatpush1.msra.mxu0 %v1543
    %4709 = vmatprep.subr.mxu0 0.0
    %4710 = vmatpush1.msra.mxu0 %v1544
    %4711 = vmatprep.subr.mxu0 0.0
    %4712 = vmatpush1.msra.mxu0 %v1545
    %4713 = vmatprep.subr.mxu0 0.0
    %4714 = vmatpush1.msra.mxu0 %v1546
    %4715 = vmatprep.subr.mxu0 0.0
    %4716 = vmatpush1.msra.mxu0 %v1547
    %4717 = vmatprep.subr.mxu0 0.0
    %4718 = vmatpush1.msra.mxu0 %v1548
    %4719 = vmatprep.subr.mxu0 0.0
    %4720 = vmatpush1.msra.mxu0 %v1549
    %4721 = vmatprep.subr.mxu0 0.0
    %4722 = vmatpush1.msra.mxu0 %v1550
    %4723 = vmatprep.subr.mxu0 0.0
    %4724 = vmatpush1.msra.mxu0 %v1551
    %4725 = vmatprep.subr.mxu0 0.0
    %4726 = vmatpush1.msra.mxu0 %v1552
    %4727 = vmatprep.subr.mxu0 0.0
    %4728 = vmatpush1.msra.mxu0 %v1553
    %4729 = vmatprep.mubr.f32.mxu0 %v139
    %4730 = vmatmul.mubr.f32.gmra.mrb[0].mxu0 %v138
    %v4731 = vpop.f32.mrb[0].mxu0
    %v4732 = vadd.f32 %v4662, %v4731
    %v4733 = vpop.f32.mrb[0].mxu0
    %4734 = vdwg.mxu0
    %4735 = vmatprep.subr.mxu0 0.0
    %4736 = vmatpush1.msra.mxu0 %v1554
    %4737 = vmatprep.subr.mxu0 0.0
    %4738 = vmatpush1.msra.mxu0 %v1555
    %4739 = vmatprep.subr.mxu0 0.0
    %4740 = vmatpush1.msra.mxu0 %v1556
    %4741 = vmatprep.subr.mxu0 0.0
    %4742 = vmatpush1.msra.mxu0 %v1557
    %4743 = vmatprep.subr.mxu0 0.0
    %4744 = vmatpush1.msra.mxu0 %v1558
    %4745 = vmatprep.subr.mxu0 0.0
    %4746 = vmatpush1.msra.mxu0 %v1559
    %4747 = vmatprep.subr.mxu0 0.0
    %4748 = vmatpush1.msra.mxu0 %v1560
    %4749 = vmatprep.subr.mxu0 0.0
    %4750 = vmatpush1.msra.mxu0 %v1561
    %4751 = vmatprep.subr.mxu0 0.0
    %4752 = vmatpush1.msra.mxu0 %v1562
    %4753 = vmatprep.subr.mxu0 0.0
    %4754 = vmatpush1.msra.mxu0 %v1563
    %4755 = vmatprep.subr.mxu0 0.0
    %4756 = vmatpush1.msra.mxu0 %v1564
    %4757 = vmatprep.subr.mxu0 0.0
    %4758 = vmatpush1.msra.mxu0 %v1565
    %4759 = vmatprep.subr.mxu0 0.0
    %4760 = vmatpush1.msra.mxu0 %v1566
    %4761 = vmatprep.subr.mxu0 0.0
    %4762 = vmatpush1.msra.mxu0 %v1567
    %4763 = vmatprep.subr.mxu0 0.0
    %4764 = vmatpush1.msra.mxu0 %v1568
    %4765 = vmatprep.subr.mxu0 0.0
    %4766 = vmatpush1.msra.mxu0 %v1569
    %4767 = vmatprep.subr.mxu0 0.0
    %4768 = vmatpush1.msra.mxu0 %v1570
    %4769 = vmatprep.subr.mxu0 0.0
    %4770 = vmatpush1.msra.mxu0 %v1571
    %4771 = vmatprep.subr.mxu0 0.0
    %4772 = vmatpush1.msra.mxu0 %v1572
    %4773 = vmatprep.subr.mxu0 0.0
    %4774 = vmatpush1.msra.mxu0 %v1573
    %4775 = vmatprep.subr.mxu0 0.0
    %4776 = vmatpush1.msra.mxu0 %v1574
    %4777 = vmatprep.subr.mxu0 0.0
    %4778 = vmatpush1.msra.mxu0 %v1575
    %4779 = vmatprep.subr.mxu0 0.0
    %4780 = vmatpush1.msra.mxu0 %v1576
    %4781 = vmatprep.subr.mxu0 0.0
    %4782 = vmatpush1.msra.mxu0 %v1577
    %4783 = vmatprep.subr.mxu0 0.0
    %4784 = vmatpush1.msra.mxu0 %v1578
    %4785 = vmatprep.subr.mxu0 0.0
    %4786 = vmatpush1.msra.mxu0 %v1579
    %4787 = vmatprep.subr.mxu0 0.0
    %4788 = vmatpush1.msra.mxu0 %v1580
    %4789 = vmatprep.subr.mxu0 0.0
    %4790 = vmatpush1.msra.mxu0 %v1581
    %4791 = vmatprep.subr.mxu0 0.0
    %4792 = vmatpush1.msra.mxu0 %v1582
    %4793 = vmatprep.subr.mxu0 0.0
    %4794 = vmatpush1.msra.mxu0 %v1583
    %4795 = vmatprep.subr.mxu0 0.0
    %4796 = vmatpush1.msra.mxu0 %v1584
    %4797 = vmatprep.subr.mxu0 0.0
    %4798 = vmatpush1.msra.mxu0 %v1585
    %4799 = vmatprep.mubr.f32.mxu0 %v141
    %4800 = vmatmul.mubr.f32.gmra.mrb[0].mxu0 %v140
    %v4801 = vpop.f32.mrb[0].mxu0
    %v4802 = vadd.f32 %v4732, %v4801
    %v4803 = vpop.f32.mrb[0].mxu0
    %4804 = vdwg.mxu0
    %4805 = vmatprep.subr.mxu0 0.0
    %4806 = vmatpush1.msra.mxu0 %v1586
    %4807 = vmatprep.subr.mxu0 0.0
    %4808 = vmatpush1.msra.mxu0 %v1587
    %4809 = vmatprep.subr.mxu0 0.0
    %4810 = vmatpush1.msra.mxu0 %v1588
    %4811 = vmatprep.subr.mxu0 0.0
    %4812 = vmatpush1.msra.mxu0 %v1589
    %4813 = vmatprep.subr.mxu0 0.0
    %4814 = vmatpush1.msra.mxu0 %v1590
    %4815 = vmatprep.subr.mxu0 0.0
    %4816 = vmatpush1.msra.mxu0 %v1591
    %4817 = vmatprep.subr.mxu0 0.0
    %4818 = vmatpush1.msra.mxu0 %v1592
    %4819 = vmatprep.subr.mxu0 0.0
    %4820 = vmatpush1.msra.mxu0 %v1593
    %4821 = vmatprep.subr.mxu0 0.0
    %4822 = vmatpush1.msra.mxu0 %v1594
    %4823 = vmatprep.subr.mxu0 0.0
    %4824 = vmatpush1.msra.mxu0 %v1595
    %4825 = vmatprep.subr.mxu0 0.0
    %4826 = vmatpush1.msra.mxu0 %v1596
    %4827 = vmatprep.subr.mxu0 0.0
    %4828 = vmatpush1.msra.mxu0 %v1597
    %4829 = vmatprep.subr.mxu0 0.0
    %4830 = vmatpush1.msra.mxu0 %v1598
    %4831 = vmatprep.subr.mxu0 0.0
    %4832 = vmatpush1.msra.mxu0 %v1599
    %4833 = vmatprep.subr.mxu0 0.0
    %4834 = vmatpush1.msra.mxu0 %v1600
    %4835 = vmatprep.subr.mxu0 0.0
    %4836 = vmatpush1.msra.mxu0 %v1601
    %4837 = vmatprep.subr.mxu0 0.0
    %4838 = vmatpush1.msra.mxu0 %v1602
    %4839 = vmatprep.subr.mxu0 0.0
    %4840 = vmatpush1.msra.mxu0 %v1603
    %4841 = vmatprep.subr.mxu0 0.0
    %4842 = vmatpush1.msra.mxu0 %v1604
    %4843 = vmatprep.subr.mxu0 0.0
    %4844 = vmatpush1.msra.mxu0 %v1605
    %4845 = vmatprep.subr.mxu0 0.0
    %4846 = vmatpush1.msra.mxu0 %v1606
    %4847 = vmatprep.subr.mxu0 0.0
    %4848 = vmatpush1.msra.mxu0 %v1607
    %4849 = vmatprep.subr.mxu0 0.0
    %4850 = vmatpush1.msra.mxu0 %v1608
    %4851 = vmatprep.subr.mxu0 0.0
    %4852 = vmatpush1.msra.mxu0 %v1609
    %4853 = vmatprep.subr.mxu0 0.0
    %4854 = vmatpush1.msra.mxu0 %v1610
    %4855 = vmatprep.subr.mxu0 0.0
    %4856 = vmatpush1.msra.mxu0 %v1611
    %4857 = vmatprep.subr.mxu0 0.0
    %4858 = vmatpush1.msra.mxu0 %v1612
    %4859 = vmatprep.subr.mxu0 0.0
    %4860 = vmatpush1.msra.mxu0 %v1613
    %4861 = vmatprep.subr.mxu0 0.0
    %4862 = vmatpush1.msra.mxu0 %v1614
    %4863 = vmatprep.subr.mxu0 0.0
    %4864 = vmatpush1.msra.mxu0 %v1615
    %4865 = vmatprep.subr.mxu0 0.0
    %4866 = vmatpush1.msra.mxu0 %v1616
    %4867 = vmatprep.subr.mxu0 0.0
    %4868 = vmatpush1.msra.mxu0 %v1617
    %4869 = vmatprep.mubr.f32.mxu0 %v143
    %4870 = vmatmul.mubr.f32.gmra.mrb[0].mxu0 %v142
    %v4871 = vpop.f32.mrb[0].mxu0
    %v4872 = vadd.f32 %v4802, %v4871
    %v4873 = vpop.f32.mrb[0].mxu0
    %4874 = vdwg.mxu0
    %4875 = vmatprep.subr.mxu0 0.0
    %4876 = vmatpush1.msra.mxu0 %v1618
    %4877 = vmatprep.subr.mxu0 0.0
    %4878 = vmatpush1.msra.mxu0 %v1619
    %4879 = vmatprep.subr.mxu0 0.0
    %4880 = vmatpush1.msra.mxu0 %v1620
    %4881 = vmatprep.subr.mxu0 0.0
    %4882 = vmatpush1.msra.mxu0 %v1621
    %4883 = vmatprep.subr.mxu0 0.0
    %4884 = vmatpush1.msra.mxu0 %v1622
    %4885 = vmatprep.subr.mxu0 0.0
    %4886 = vmatpush1.msra.mxu0 %v1623
    %4887 = vmatprep.subr.mxu0 0.0
    %4888 = vmatpush1.msra.mxu0 %v1624
    %4889 = vmatprep.subr.mxu0 0.0
    %4890 = vmatpush1.msra.mxu0 %v1625
    %4891 = vmatprep.subr.mxu0 0.0
    %4892 = vmatpush1.msra.mxu0 %v1626
    %4893 = vmatprep.subr.mxu0 0.0
    %4894 = vmatpush1.msra.mxu0 %v1627
    %4895 = vmatprep.subr.mxu0 0.0
    %4896 = vmatpush1.msra.mxu0 %v1628
    %4897 = vmatprep.subr.mxu0 0.0
    %4898 = vmatpush1.msra.mxu0 %v1629
    %4899 = vmatprep.subr.mxu0 0.0
    %4900 = vmatpush1.msra.mxu0 %v1630
    %4901 = vmatprep.subr.mxu0 0.0
    %4902 = vmatpush1.msra.mxu0 %v1631
    %4903 = vmatprep.subr.mxu0 0.0
    %4904 = vmatpush1.msra.mxu0 %v1632
    %4905 = vmatprep.subr.mxu0 0.0
    %4906 = vmatpush1.msra.mxu0 %v1633
    %4907 = vmatprep.subr.mxu0 0.0
    %4908 = vmatpush1.msra.mxu0 %v1634
    %4909 = vmatprep.subr.mxu0 0.0
    %4910 = vmatpush1.msra.mxu0 %v1635
    %4911 = vmatprep.subr.mxu0 0.0
    %4912 = vmatpush1.msra.mxu0 %v1636
    %4913 = vmatprep.subr.mxu0 0.0
    %4914 = vmatpush1.msra.mxu0 %v1637
    %4915 = vmatprep.subr.mxu0 0.0
    %4916 = vmatpush1.msra.mxu0 %v1638
    %4917 = vmatprep.subr.mxu0 0.0
    %4918 = vmatpush1.msra.mxu0 %v1639
    %4919 = vmatprep.subr.mxu0 0.0
    %4920 = vmatpush1.msra.mxu0 %v1640
    %4921 = vmatprep.subr.mxu0 0.0
    %4922 = vmatpush1.msra.mxu0 %v1641
    %4923 = vmatprep.subr.mxu0 0.0
    %4924 = vmatpush1.msra.mxu0 %v1642
    %4925 = vmatprep.subr.mxu0 0.0
    %4926 = vmatpush1.msra.mxu0 %v1643
    %4927 = vmatprep.subr.mxu0 0.0
    %4928 = vmatpush1.msra.mxu0 %v1644
    %4929 = vmatprep.subr.mxu0 0.0
    %4930 = vmatpush1.msra.mxu0 %v1645
    %4931 = vmatprep.subr.mxu0 0.0
    %4932 = vmatpush1.msra.mxu0 %v1653
    %4933 = vmatprep.subr.mxu0 0.0
    %4934 = vmatpush1.msra.mxu0 0.0
    %4935 = vmatprep.subr.mxu0 0.0
    %4936 = vmatpush1.msra.mxu0 0.0
    %4937 = vmatprep.subr.mxu0 0.0
    %4938 = vmatpush1.msra.mxu0 0.0
    %4939 = vmatprep.mubr.f32.mxu0 %v1649
    %4940 = vmatmul.mubr.f32.gmra.mrb[0].mxu0 %v144
    %v4941 = vpop.f32.mrb[0].mxu0
    %v4942 = vadd.f32 %v4872, %v4941
    %v4943 = vpop.f32.mrb[0].mxu0
    %4944 = vdwg.mxu0
    %v4945 = vld [vmem:[%s2] sm:$0x1]
    %v4947 = vlaneseq
    %v4948 = vshrl.u32 %v4947, 7
    %v4949 = vsub.s32 0, %v4948
    %v4950 = vrot.slane %v4945, %v4949
    %v4952 = vadd.f32 %v4942, %v4950
    %vm4953 = vcmp.gt.f32.partialorder %v4952, 0.0
    %v4954 = vmul.f32 %v4952, 0.01
    %v4955 = vsel %vm4953, %v4952, %v4954
    %v4956 = vld [vmem:[%s3] sm:$0x3]
    %v4957 = vlaneseq
    %v4958 = vshrl.u32 %v4957, 7
    %v4959 = vsub.s32 0, %v4958
    %v4960 = vrot.slane %v4956, %v4959
    %v4961 = vmul.f32 %v4955, %v4960
    %vm4962 = vcmask 130048
    %v4963 = vsel %vm4962, %v4961, 0.0
    %4964 = vadd.xlane.f32.xlu0 %v4963
    %v4965 = vpop.xlane.xlu0 %4964
    %v4966 = vlaneseq
    %v4967 = vshrl.u32 %v4966, 7
    %v4968 = vsub.s32 1, %v4967
    %v4969 = vrot.slane %v4956, %v4968
    %v4970 = vmul.f32 %v4955, %v4969
    %v4971 = vsel %vm4962, %v4970, 0.0
    %4972 = vadd.xlane.f32.xlu0 %v4971
    %v4973 = vpop.xlane.xlu0 %4972
    %v4974 = vadd.f32 %v4965, %v4942
    %s4975 = sld [smem:[#allocation3]]
    %v4976 = vstv %s4975
    %v4977 = vadd.f32 %v4974, %v4976
    %vm4978 = vcmp.gt.f32.partialorder %v4977, 0.0
    %v4979 = vmul.f32 %v4977, 0.01
    %v4980 = vsel %vm4978, %v4977, %v4979
    %v4981 = vadd.f32 %v4973, %v4942
    %s4982 = sld [smem:[#allocation3 + $0x1]]
    %v4983 = vstv %s4982
    %v4984 = vadd.f32 %v4981, %v4983
    %vm4985 = vcmp.gt.f32.partialorder %v4984, 0.0
    %v4986 = vmul.f32 %v4984, 0.01
    %v4987 = vsel %vm4985, %v4984, %v4986
    %s4988 = sld [smem:[#allocation5]]
    %v4989 = vstv %s4988
    %v4990 = vmul.f32 %v4980, %v4989
    %s4991 = sld [smem:[#allocation5 + $0x1]]
    %v4992 = vstv %s4991
    %v4993 = vmul.f32 %v4987, %v4992
    %4995 = vrot.lane.b32.xlu0 %v4993, 127
    %v4996 = vpop.permute.xlu0 %4995
    %v4998 = vadd.f32 %v4990, %v4996
    %s4999 = sld [smem:[#allocation2]]
    %v5000 = vstv %s4999
    %v5001 = vadd.f32 %v4998, %v5000
    %5003 = vrot.lane.b32.xlu0 %v5001, 112
    %v5004 = vpop.permute.xlu0 %5003
    %vm5006 = vcmask 7168
    %5007 = vst.msk [vmem:[%s7] sm:$0xff] %vm5006, %v5004
    // Predicated region
    $region38: #{tpu_custom_call.1} parent=1 // pred_check
      _
    $region39: #{tpu_custom_call.1} parent=1 // pred_check_branch
      %5009 = sbr.rel (0) target = $region41
    $region40: #{tpu_custom_call.1} parent=1 // pred_region
      _
    $region41: #{tpu_custom_call.1} parent=1 // pred_fallthru
      _
    // Predicated region
    $region42: #{tpu_custom_call.1} parent=1 // pred_check
      _
    $region43: #{tpu_custom_call.1} parent=1 // pred_check_branch
      %5011 = sbr.rel (0) target = $region45
    $region44: #{tpu_custom_call.1} parent=1 // pred_region
      _
    $region45: #{tpu_custom_call.1} parent=1 // pred_fallthru
      _
    %5012 = vsyncpa [#allocation4], 1
    %5013 = vsyncpa [#allocation6], 1

</llo_original>
